<compile_context>
chip_gen: v7x
topology: tpu7x:2x2x1
jax: 0.10.0
libtpu: 0.0.40
codegen_flags: <defaults>
</compile_context>

<pallas_src>
import functools

import jax
import jax.numpy as jnp
from jax import lax
from jax.experimental import pallas as pl
from jax.experimental.pallas import tpu as pltpu


def _rup(x, m):
    return (x + m - 1) // m * m


def lstm_model_kernel(
    x_ref,            # (T*BT, IP)  bf16   time-major flattened input tile
    w1_ih_ref,        # (IP, 2*GP)  bf16   lstm1 [fwd | bwd] input proj (0.5-folded)
    b1_ref,           # (1, 2*GP)   f32
    w1f_hh_ref,       # (H, GP)     bf16
    w1b_hh_ref,       # (H, GP)     bf16
    w2f_ref,          # (H, GP)     bf16   lstm2 input proj, fwd half
    w2b_ref,          # (H, GP)     bf16   lstm2 input proj, bwd half
    w2hh_ref,         # (H, GP)     bf16
    b2_ref,           # (1, GP)     f32
    gamma_ref,        # (1, H)      f32
    beta_ref,         # (1, H)      f32
    wfc1_ref,         # (H, 128)    f32
    bfc1_ref,         # (1, 128)    f32
    wfc2_ref,         # (128, CP)   f32
    bfc2_ref,         # (1, CP)     f32
    out_ref,          # (BT, CP)    f32
    gx1_ref,          # scratch (T*BT, 2*GP) f32: lstm1 preacts, reused for lstm2
    out1f_ref,        # scratch (T*BT, H) f32: lstm1 fwd outputs
    out1b_ref,        # scratch (T*BT, H) f32: lstm1 bwd outputs
    *, T, BT, H, GP,
):
    f32 = jnp.float32
    bf16 = jnp.bfloat16

    def gate_act(pre, c):
        # i/f/o preactivations arrive pre-scaled by 0.5 (folded into weights
        # and bias), so a SINGLE tanh over the packed (BT, GP) tile yields
        # sigmoid via 0.5*(1+tanh(x/2)) for i/f/o and plain tanh for g.
        t = jnp.tanh(pre)
        i = 0.5 * (1.0 + t[:, 0 * H:1 * H])
        f = 0.5 * (1.0 + t[:, 1 * H:2 * H])
        g = t[:, 2 * H:3 * H]
        o = 0.5 * (1.0 + t[:, 3 * H:4 * H])
        c_new = f * c + i * g
        h_new = o * jnp.tanh(c_new)
        return h_new, c_new

    def rows(t):
        # 8-sublane-aligned (BT, ...) row slab for timestep t.
        return pl.ds(pl.multiple_of(t * BT, BT), BT)

    unroll = T if T <= 16 else 8

    # ---- hoisted LSTM1 input projection: ONE bf16 MXU matmul for both dirs ----
    gx1_ref[...] = (
        jnp.dot(x_ref[...], w1_ih_ref[...], preferred_element_type=f32)
        + b1_ref[...])

    zeros = jnp.zeros((BT, H), f32)
    w1f_hh = w1f_hh_ref[...]
    w1b_hh = w1b_hh_ref[...]

    # ---- fused bidirectional LSTM1 recurrence (both chains per iteration) ----
    def l1_body(t, carry):
        hf, cf, hb, cb = carry
        tb = T - 1 - t
        rf, rb = rows(t), rows(tb)
        pre_f = gx1_ref[rf, :GP] + jnp.dot(
            hf.astype(bf16), w1f_hh, preferred_element_type=f32)
        pre_b = gx1_ref[rb, GP:] + jnp.dot(
            hb.astype(bf16), w1b_hh, preferred_element_type=f32)
        hf, cf = gate_act(pre_f, cf)
        hb, cb = gate_act(pre_b, cb)
        out1f_ref[rf, :] = hf
        out1b_ref[rb, :] = hb
        return hf, cf, hb, cb

    lax.fori_loop(0, T, l1_body, (zeros, zeros, zeros, zeros), unroll=unroll)

    # dropout1 / dropout2 / dropout3: identity (eval mode)

    # ---- hoisted LSTM2 input projection, reusing gx1 (dead after l1 loop) ----
    gx1_ref[:, :GP] = (
        jnp.dot(out1f_ref[...].astype(bf16), w2f_ref[...],
                preferred_element_type=f32)
        + jnp.dot(out1b_ref[...].astype(bf16), w2b_ref[...],
                  preferred_element_type=f32)
        + b2_ref[...])

    w2hh = w2hh_ref[...]

    # ---- LSTM2 recurrence; only the final step's h is needed ----
    def l2_body(t, carry):
        h, c = carry
        pre = gx1_ref[rows(t), :GP] + jnp.dot(
            h.astype(bf16), w2hh, preferred_element_type=f32)
        return gate_act(pre, c)

    h_last, _ = lax.fori_loop(0, T, l2_body, (zeros, zeros), unroll=unroll)

    # ---- LayerNorm over the real hidden dim (eps=1e-5, biased variance) ----
    mu = jnp.mean(h_last, axis=-1, keepdims=True)
    var = jnp.mean(jnp.square(h_last - mu), axis=-1, keepdims=True)
    hn = (h_last - mu) * lax.rsqrt(var + 1e-5) * gamma_ref[...] + beta_ref[...]

    # ---- fc1 -> ReLU -> fc2 (output padded to 128 lanes; sliced in wrapper) ----
    z = jnp.dot(hn, wfc1_ref[...], preferred_element_type=f32) + bfc1_ref[...]
    z = jnp.maximum(z, 0.0)
    logits = jnp.dot(z, wfc2_ref[...], preferred_element_type=f32) + bfc2_ref[...]
    out_ref[...] = logits.astype(out_ref.dtype)


def lstm_model_forward(x, params, hidden_size, num_classes, batch_tile=128):
    """x: (B, T, input_size) float32 -> (B, num_classes) float32."""
    B, T, I = x.shape
    H, C = hidden_size, num_classes
    BT = min(_rup(B, 8), _rup(batch_tile, 8))   # padded batch rows per grid tile
    NB = -(-B // BT)
    BPAD = NB * BT
    GP = _rup(4 * H, 128)                       # packed gate lanes
    IP = _rup(I, 128)
    CP = _rup(C, 128)

    # time-major, zero-padded, per-batch-tile flattened input: (NB*T*BT, IP) bf16
    x_t = jnp.transpose(x, (1, 0, 2)).astype(jnp.bfloat16)         # (T, B, I)
    x_p = jnp.zeros((T, BPAD, IP), jnp.bfloat16).at[:, :B, :I].set(x_t)
    x_p = (x_p.reshape(T, NB, BT, IP).transpose(1, 0, 2, 3)
           .reshape(NB * T * BT, IP))

    weights = [
        params["w1_ih"], params["b1"],
        params["w1f_hh"], params["w1b_hh"],
        params["w2f"], params["w2b"], params["w2hh"], params["b2"],
        params["gamma"], params["beta"],
        params["wfc1"], params["bfc1"], params["wfc2"], params["bfc2"],
    ]

    def const_spec(a):
        # full-array block, same block for every grid step (no re-DMA)
        return pl.BlockSpec(a.shape, lambda i: (0,) * a.ndim)

    kernel = functools.partial(lstm_model_kernel, T=T, BT=BT, H=H, GP=GP)

    out = pl.pallas_call(
        kernel,
        out_shape=jax.ShapeDtypeStruct((NB * BT, CP), jnp.float32),
        grid=(NB,),
        in_specs=[pl.BlockSpec((T * BT, IP), lambda i: (i, 0))]
                 + [const_spec(w) for w in weights],
        out_specs=pl.BlockSpec((BT, CP), lambda i: (i, 0)),
        scratch_shapes=[
            pltpu.VMEM((T * BT, 2 * GP), jnp.float32),  # gx1 (reused as gx2)
            pltpu.VMEM((T * BT, H), jnp.float32),       # out1f
            pltpu.VMEM((T * BT, H), jnp.float32),       # out1b
        ],
        compiler_params=pltpu.CompilerParams(
            dimension_semantics=("parallel",)),
    )(x_p, *weights)
    return out[:B, :C]


# ---------------- parameter packing (PyTorch-style init, packed layout) -----

def _gate_scale(H):
    # 0.5 fold for i/f/o (sigmoid via tanh identity), 1.0 for the g gate.
    return jnp.concatenate([
        jnp.full((H,), 0.5, jnp.float32), jnp.full((H,), 0.5, jnp.float32),
        jnp.ones((H,), jnp.float32), jnp.full((H,), 0.5, jnp.float32)])


def _pack_gates(w, in_p, H, GP):
    """PyTorch (4H, in_dim) gate-stacked weight -> (in_p, GP) bf16, transposed,
    gates contiguous in lanes, i/f/o columns pre-scaled by 0.5."""
    four_h, in_dim = w.shape
    ws = (w * _gate_scale(H)[:, None]).T                        # (in_dim, 4H)
    out = jnp.zeros((in_p, GP), jnp.float32).at[:in_dim, :4 * H].set(ws)
    return out.astype(jnp.bfloat16)


def _pack_gate_bias(b, H, GP):
    bs = b * _gate_scale(H)
    return jnp.zeros((1, GP), jnp.float32).at[0, :4 * H].set(bs)


def init_params(key, input_size, hidden_size, num_classes):
    """Deterministic PyTorch-style uniform init; weights pre-transposed,
    gate-packed, 0.5-folded for i/f/o, zero-padded and cast to bf16."""
    H, I, C = hidden_size, input_size, num_classes
    GP, IP, CP = _rup(4 * H, 128), _rup(I, 128), _rup(C, 128)
    k = 1.0 / jnp.sqrt(jnp.float32(H))
    keys = jax.random.split(key, 16)
    u = lambda kk, shape, bound: jax.random.uniform(
        kk, shape, jnp.float32, minval=-bound, maxval=bound)

    # lstm1 (bidirectional): per-direction W_ih (4H,I), W_hh (4H,H), b_ih+b_hh
    w1f_ih = u(keys[0], (4 * H, I), k); w1f_hh = u(keys[1], (4 * H, H), k)
    b1f = u(keys[2], (4 * H,), k) + u(keys[3], (4 * H,), k)
    w1b_ih = u(keys[4], (4 * H, I), k); w1b_hh = u(keys[5], (4 * H, H), k)
    b1b = u(keys[6], (4 * H,), k) + u(keys[7], (4 * H,), k)

    # lstm2: W_ih (4H, 2H) split into fwd/bwd halves, W_hh (4H, H)
    w2_ih = u(keys[8], (4 * H, 2 * H), k); w2_hh = u(keys[9], (4 * H, H), k)
    b2 = u(keys[10], (4 * H,), k) + u(keys[11], (4 * H,), k)

    # layer norm defaults: weight=1, bias=0
    gamma = jnp.ones((1, H), jnp.float32)
    beta = jnp.zeros((1, H), jnp.float32)

    # fc1: (128, H), fc2: (C, 128) with PyTorch Linear-style bounds (kept f32)
    k1 = 1.0 / jnp.sqrt(jnp.float32(H))
    wfc1 = u(keys[12], (128, H), k1); bfc1 = u(keys[13], (128,), k1)
    k2 = 1.0 / jnp.sqrt(jnp.float32(128))
    wfc2 = u(keys[14], (C, 128), k2); bfc2 = u(keys[15], (C,), k2)

    return {
        "w1_ih": jnp.concatenate(
            [_pack_gates(w1f_ih, IP, H, GP), _pack_gates(w1b_ih, IP, H, GP)],
            axis=1),
        "b1": jnp.concatenate(
            [_pack_gate_bias(b1f, H, GP), _pack_gate_bias(b1b, H, GP)], axis=1),
        "w1f_hh": _pack_gates(w1f_hh, H, H, GP),
        "w1b_hh": _pack_gates(w1b_hh, H, H, GP),
        "w2f": _pack_gates(w2_ih[:, :H], H, H, GP),
        "w2b": _pack_gates(w2_ih[:, H:], H, H, GP),
        "w2hh": _pack_gates(w2_hh, H, H, GP),
        "b2": _pack_gate_bias(b2, H, GP),
        "gamma": gamma, "beta": beta,
        "wfc1": wfc1.T, "bfc1": bfc1.reshape(1, 128),
        "wfc2": jnp.zeros((128, CP), jnp.float32).at[:, :C].set(wfc2.T),
        "bfc2": jnp.zeros((1, CP), jnp.float32).at[0, :C].set(bfc2),
    }


if __name__ == "__main__":
    B, T, INPUT, HIDDEN, CLASSES = 2, 8, 16, 32, 6

    root = jax.random.PRNGKey(0)
    kx, kp = jax.random.split(root)
    x = jax.random.normal(kx, (B, T, INPUT), jnp.float32)
    params = init_params(kp, INPUT, HIDDEN, CLASSES)

    fwd = jax.jit(functools.partial(lstm_model_forward,
                                    hidden_size=HIDDEN, num_classes=CLASSES))
    out = jax.block_until_ready(fwd(x, params))

    assert out.shape == (B, CLASSES)
    assert bool(jnp.all(jnp.isfinite(out)))
    print("KERNEL_OK")
</pallas_src>

<mosaic_0001>
module attributes {stable_mosaic.version = 11 : i64} {
  func.func @lstm_model_kernel(%arg0: i32, %arg1: memref<64x128xbf16, #tpu.memory_space<vmem>>, %arg2: memref<128x256xbf16, #tpu.memory_space<vmem>>, %arg3: memref<1x256xf32, #tpu.memory_space<vmem>>, %arg4: memref<32x128xbf16, #tpu.memory_space<vmem>>, %arg5: memref<32x128xbf16, #tpu.memory_space<vmem>>, %arg6: memref<32x128xbf16, #tpu.memory_space<vmem>>, %arg7: memref<32x128xbf16, #tpu.memory_space<vmem>>, %arg8: memref<32x128xbf16, #tpu.memory_space<vmem>>, %arg9: memref<1x128xf32, #tpu.memory_space<vmem>>, %arg10: memref<1x32xf32, #tpu.memory_space<vmem>>, %arg11: memref<1x32xf32, #tpu.memory_space<vmem>>, %arg12: memref<32x128xf32, #tpu.memory_space<vmem>>, %arg13: memref<1x128xf32, #tpu.memory_space<vmem>>, %arg14: memref<128x128xf32, #tpu.memory_space<vmem>>, %arg15: memref<1x128xf32, #tpu.memory_space<vmem>>, %arg16: memref<8x128xf32, #tpu.memory_space<vmem>>, %arg17: memref<64x256xf32, #tpu.memory_space<vmem>>, %arg18: memref<64x32xf32, #tpu.memory_space<vmem>>, %arg19: memref<64x32xf32, #tpu.memory_space<vmem>>) attributes {dimension_semantics = [#tpu.dimension_semantics<parallel>], iteration_bounds = array<i64: 1>, scalar_prefetch = 0 : i64, scratch_operands = 3 : i64, tpu.core_type = #tpu.core_type<tc>, window_params = [{transform_indices = @transform_0, window_bounds = array<i64: 64, 128>}, {pipeline_mode = #tpu.pipeline_mode<synchronous>, transform_indices = @transform_1, window_bounds = array<i64: 128, 256>}, {pipeline_mode = #tpu.pipeline_mode<synchronous>, transform_indices = @transform_2, window_bounds = array<i64: 1, 256>}, {pipeline_mode = #tpu.pipeline_mode<synchronous>, transform_indices = @transform_3, window_bounds = array<i64: 32, 128>}, {pipeline_mode = #tpu.pipeline_mode<synchronous>, transform_indices = @transform_4, window_bounds = array<i64: 32, 128>}, {pipeline_mode = #tpu.pipeline_mode<synchronous>, transform_indices = @transform_5, window_bounds = array<i64: 32, 128>}, {pipeline_mode = #tpu.pipeline_mode<synchronous>, transform_indices = @transform_6, window_bounds = array<i64: 32, 128>}, {pipeline_mode = #tpu.pipeline_mode<synchronous>, transform_indices = @transform_7, window_bounds = array<i64: 32, 128>}, {pipeline_mode = #tpu.pipeline_mode<synchronous>, transform_indices = @transform_8, window_bounds = array<i64: 1, 128>}, {pipeline_mode = #tpu.pipeline_mode<synchronous>, transform_indices = @transform_9, window_bounds = array<i64: 1, 32>}, {pipeline_mode = #tpu.pipeline_mode<synchronous>, transform_indices = @transform_10, window_bounds = array<i64: 1, 32>}, {pipeline_mode = #tpu.pipeline_mode<synchronous>, transform_indices = @transform_11, window_bounds = array<i64: 32, 128>}, {pipeline_mode = #tpu.pipeline_mode<synchronous>, transform_indices = @transform_12, window_bounds = array<i64: 1, 128>}, {pipeline_mode = #tpu.pipeline_mode<synchronous>, transform_indices = @transform_13, window_bounds = array<i64: 128, 128>}, {pipeline_mode = #tpu.pipeline_mode<synchronous>, transform_indices = @transform_14, window_bounds = array<i64: 1, 128>}, {transform_indices = @transform_15, window_bounds = array<i64: 8, 128>}]} {
    %c0 = arith.constant 0 : index
    %c0_0 = arith.constant 0 : index
    %0 = vector.load %arg1[%c0, %c0_0] : memref<64x128xbf16, #tpu.memory_space<vmem>>, vector<64x128xbf16>
    %c0_1 = arith.constant 0 : index
    %c0_2 = arith.constant 0 : index
    %1 = vector.load %arg2[%c0_1, %c0_2] : memref<128x256xbf16, #tpu.memory_space<vmem>>, vector<128x256xbf16>
    %cst = arith.constant dense<0.000000e+00> : vector<64x256xf32>
    %2 = tpu.matmul %0, %1, %cst {dimension_numbers = #tpu.dot_dimension_numbers<[1], [0], [0], [1], [0, 0, 1, 1], [], []>} : vector<64x128xbf16>, vector<128x256xbf16>, vector<64x256xf32> -> vector<64x256xf32>
    %c0_3 = arith.constant 0 : index
    %c0_4 = arith.constant 0 : index
    %3 = vector.load %arg3[%c0_3, %c0_4] : memref<1x256xf32, #tpu.memory_space<vmem>>, vector<1x256xf32>
    %4 = vector.broadcast %3 : vector<1x256xf32> to vector<64x256xf32>
    %5 = arith.addf %2, %4 : vector<64x256xf32>
    %c0_5 = arith.constant 0 : index
    %c0_6 = arith.constant 0 : index
    %6 = vector.load %arg17[%c0_5, %c0_6] : memref<64x256xf32, #tpu.memory_space<vmem>>, vector<64x256xf32>
    tpu.vector_store %arg17[%c0_5, %c0_6], %5 {strides = array<i32>} : memref<64x256xf32, #tpu.memory_space<vmem>>, vector<64x256xf32>,
    %cst_7 = arith.constant 0.000000e+00 : f32
    %7 = vector.broadcast %cst_7 : f32 to vector<8x32xf32>
    %c0_8 = arith.constant 0 : index
    %c0_9 = arith.constant 0 : index
    %8 = vector.load %arg4[%c0_8, %c0_9] : memref<32x128xbf16, #tpu.memory_space<vmem>>, vector<32x128xbf16>
    %c0_10 = arith.constant 0 : index
    %c0_11 = arith.constant 0 : index
    %9 = vector.load %arg5[%c0_10, %c0_11] : memref<32x128xbf16, #tpu.memory_space<vmem>>, vector<32x128xbf16>
    %c0_i32 = arith.constant 0 : i32
    %c7_i32 = arith.constant 7 : i32
    %10 = arith.subi %c7_i32, %c0_i32 : i32
    %c8_i32 = arith.constant 8 : i32
    %11 = arith.muli %c0_i32, %c8_i32 : i32
    %12 = tpu.assume_multiple %11, 8 : i32
    %c8_i32_12 = arith.constant 8 : i32
    %13 = arith.muli %10, %c8_i32_12 : i32
    %14 = tpu.assume_multiple %13, 8 : i32
    %15 = arith.index_cast %12 : i32 to index
    %c0_13 = arith.constant 0 : index
    %16 = vector.load %arg17[%15, %c0_13] : memref<64x256xf32, #tpu.memory_space<vmem>>, vector<8x128xf32>
    %17 = arith.truncf %7 : vector<8x32xf32> to vector<8x32xbf16>
    %cst_14 = arith.constant dense<0.000000e+00> : vector<8x128xf32>
    %18 = tpu.matmul %17, %8, %cst_14 {dimension_numbers = #tpu.dot_dimension_numbers<[1], [0], [0], [1], [0, 0, 1, 1], [], []>} : vector<8x32xbf16>, vector<32x128xbf16>, vector<8x128xf32> -> vector<8x128xf32>
    %19 = arith.addf %16, %18 : vector<8x128xf32>
    %20 = arith.index_cast %14 : i32 to index
    %c128 = arith.constant 128 : index
    %21 = vector.load %arg17[%20, %c128] : memref<64x256xf32, #tpu.memory_space<vmem>>, vector<8x128xf32>
    %22 = arith.truncf %7 : vector<8x32xf32> to vector<8x32xbf16>
    %cst_15 = arith.constant dense<0.000000e+00> : vector<8x128xf32>
    %23 = tpu.matmul %22, %9, %cst_15 {dimension_numbers = #tpu.dot_dimension_numbers<[1], [0], [0], [1], [0, 0, 1, 1], [], []>} : vector<8x32xbf16>, vector<32x128xbf16>, vector<8x128xf32> -> vector<8x128xf32>
    %24 = arith.addf %21, %23 : vector<8x128xf32>
    %25 = math.tanh %19 : vector<8x128xf32>
    %26 = vector.extract_strided_slice %25 {offsets = [0, 0], sizes = [8, 32], strides = [1, 1]} : vector<8x128xf32> to vector<8x32xf32>
    %cst_16 = arith.constant 1.000000e+00 : f32
    %27 = vector.broadcast %cst_16 : f32 to vector<8x32xf32>
    %28 = arith.addf %27, %26 : vector<8x32xf32>
    %cst_17 = arith.constant 5.000000e-01 : f32
    %29 = vector.broadcast %cst_17 : f32 to vector<8x32xf32>
    %30 = arith.mulf %29, %28 : vector<8x32xf32>
    %31 = vector.extract_strided_slice %25 {offsets = [0, 32], sizes = [8, 32], strides = [1, 1]} : vector<8x128xf32> to vector<8x32xf32>
    %cst_18 = arith.constant 1.000000e+00 : f32
    %32 = vector.broadcast %cst_18 : f32 to vector<8x32xf32>
    %33 = arith.addf %32, %31 : vector<8x32xf32>
    %cst_19 = arith.constant 5.000000e-01 : f32
    %34 = vector.broadcast %cst_19 : f32 to vector<8x32xf32>
    %35 = arith.mulf %34, %33 : vector<8x32xf32>
    %36 = vector.extract_strided_slice %25 {offsets = [0, 64], sizes = [8, 32], strides = [1, 1]} : vector<8x128xf32> to vector<8x32xf32>
    %37 = vector.extract_strided_slice %25 {offsets = [0, 96], sizes = [8, 32], strides = [1, 1]} : vector<8x128xf32> to vector<8x32xf32>
    %cst_20 = arith.constant 1.000000e+00 : f32
    %38 = vector.broadcast %cst_20 : f32 to vector<8x32xf32>
    %39 = arith.addf %38, %37 : vector<8x32xf32>
    %cst_21 = arith.constant 5.000000e-01 : f32
    %40 = vector.broadcast %cst_21 : f32 to vector<8x32xf32>
    %41 = arith.mulf %40, %39 : vector<8x32xf32>
    %42 = arith.mulf %35, %7 : vector<8x32xf32>
    %43 = arith.mulf %30, %36 : vector<8x32xf32>
    %44 = arith.addf %42, %43 : vector<8x32xf32>
    %45 = math.tanh %44 : vector<8x32xf32>
    %46 = arith.mulf %41, %45 : vector<8x32xf32>
    %47 = math.tanh %24 : vector<8x128xf32>
    %48 = vector.extract_strided_slice %47 {offsets = [0, 0], sizes = [8, 32], strides = [1, 1]} : vector<8x128xf32> to vector<8x32xf32>
    %cst_22 = arith.constant 1.000000e+00 : f32
    %49 = vector.broadcast %cst_22 : f32 to vector<8x32xf32>
    %50 = arith.addf %49, %48 : vector<8x32xf32>
    %cst_23 = arith.constant 5.000000e-01 : f32
    %51 = vector.broadcast %cst_23 : f32 to vector<8x32xf32>
    %52 = arith.mulf %51, %50 : vector<8x32xf32>
    %53 = vector.extract_strided_slice %47 {offsets = [0, 32], sizes = [8, 32], strides = [1, 1]} : vector<8x128xf32> to vector<8x32xf32>
    %cst_24 = arith.constant 1.000000e+00 : f32
    %54 = vector.broadcast %cst_24 : f32 to vector<8x32xf32>
    %55 = arith.addf %54, %53 : vector<8x32xf32>
    %cst_25 = arith.constant 5.000000e-01 : f32
    %56 = vector.broadcast %cst_25 : f32 to vector<8x32xf32>
    %57 = arith.mulf %56, %55 : vector<8x32xf32>
    %58 = vector.extract_strided_slice %47 {offsets = [0, 64], sizes = [8, 32], strides = [1, 1]} : vector<8x128xf32> to vector<8x32xf32>
    %59 = vector.extract_strided_slice %47 {offsets = [0, 96], sizes = [8, 32], strides = [1, 1]} : vector<8x128xf32> to vector<8x32xf32>
    %cst_26 = arith.constant 1.000000e+00 : f32
    %60 = vector.broadcast %cst_26 : f32 to vector<8x32xf32>
    %61 = arith.addf %60, %59 : vector<8x32xf32>
    %cst_27 = arith.constant 5.000000e-01 : f32
    %62 = vector.broadcast %cst_27 : f32 to vector<8x32xf32>
    %63 = arith.mulf %62, %61 : vector<8x32xf32>
    %64 = arith.mulf %57, %7 : vector<8x32xf32>
    %65 = arith.mulf %52, %58 : vector<8x32xf32>
    %66 = arith.addf %64, %65 : vector<8x32xf32>
    %67 = math.tanh %66 : vector<8x32xf32>
    %68 = arith.mulf %63, %67 : vector<8x32xf32>
    %69 = arith.index_cast %12 : i32 to index
    %c0_28 = arith.constant 0 : index
    %70 = vector.load %arg18[%69, %c0_28] : memref<64x32xf32, #tpu.memory_space<vmem>>, vector<8x32xf32>
    tpu.vector_store %arg18[%69, %c0_28], %46 {strides = array<i32>} : memref<64x32xf32, #tpu.memory_space<vmem>>, vector<8x32xf32>,
    %71 = arith.index_cast %14 : i32 to index
    %c0_29 = arith.constant 0 : index
    %72 = vector.load %arg19[%71, %c0_29] : memref<64x32xf32, #tpu.memory_space<vmem>>, vector<8x32xf32>
    tpu.vector_store %arg19[%71, %c0_29], %68 {strides = array<i32>} : memref<64x32xf32, #tpu.memory_space<vmem>>, vector<8x32xf32>,
    %c1_i32 = arith.constant 1 : i32
    %c7_i32_30 = arith.constant 7 : i32
    %73 = arith.subi %c7_i32_30, %c1_i32 : i32
    %c8_i32_31 = arith.constant 8 : i32
    %74 = arith.muli %c1_i32, %c8_i32_31 : i32
    %75 = tpu.assume_multiple %74, 8 : i32
    %c8_i32_32 = arith.constant 8 : i32
    %76 = arith.muli %73, %c8_i32_32 : i32
    %77 = tpu.assume_multiple %76, 8 : i32
    %78 = arith.index_cast %75 : i32 to index
    %c0_33 = arith.constant 0 : index
    %79 = vector.load %arg17[%78, %c0_33] : memref<64x256xf32, #tpu.memory_space<vmem>>, vector<8x128xf32>
    %80 = arith.truncf %46 : vector<8x32xf32> to vector<8x32xbf16>
    %cst_34 = arith.constant dense<0.000000e+00> : vector<8x128xf32>
    %81 = tpu.matmul %80, %8, %cst_34 {dimension_numbers = #tpu.dot_dimension_numbers<[1], [0], [0], [1], [0, 0, 1, 1], [], []>} : vector<8x32xbf16>, vector<32x128xbf16>, vector<8x128xf32> -> vector<8x128xf32>
    %82 = arith.addf %79, %81 : vector<8x128xf32>
    %83 = arith.index_cast %77 : i32 to index
    %c128_35 = arith.constant 128 : index
    %84 = vector.load %arg17[%83, %c128_35] : memref<64x256xf32, #tpu.memory_space<vmem>>, vector<8x128xf32>
    %85 = arith.truncf %68 : vector<8x32xf32> to vector<8x32xbf16>
    %cst_36 = arith.constant dense<0.000000e+00> : vector<8x128xf32>
    %86 = tpu.matmul %85, %9, %cst_36 {dimension_numbers = #tpu.dot_dimension_numbers<[1], [0], [0], [1], [0, 0, 1, 1], [], []>} : vector<8x32xbf16>, vector<32x128xbf16>, vector<8x128xf32> -> vector<8x128xf32>
    %87 = arith.addf %84, %86 : vector<8x128xf32>
    %88 = math.tanh %82 : vector<8x128xf32>
    %89 = vector.extract_strided_slice %88 {offsets = [0, 0], sizes = [8, 32], strides = [1, 1]} : vector<8x128xf32> to vector<8x32xf32>
    %cst_37 = arith.constant 1.000000e+00 : f32
    %90 = vector.broadcast %cst_37 : f32 to vector<8x32xf32>
    %91 = arith.addf %90, %89 : vector<8x32xf32>
    %cst_38 = arith.constant 5.000000e-01 : f32
    %92 = vector.broadcast %cst_38 : f32 to vector<8x32xf32>
    %93 = arith.mulf %92, %91 : vector<8x32xf32>
    %94 = vector.extract_strided_slice %88 {offsets = [0, 32], sizes = [8, 32], strides = [1, 1]} : vector<8x128xf32> to vector<8x32xf32>
    %cst_39 = arith.constant 1.000000e+00 : f32
    %95 = vector.broadcast %cst_39 : f32 to vector<8x32xf32>
    %96 = arith.addf %95, %94 : vector<8x32xf32>
    %cst_40 = arith.constant 5.000000e-01 : f32
    %97 = vector.broadcast %cst_40 : f32 to vector<8x32xf32>
    %98 = arith.mulf %97, %96 : vector<8x32xf32>
    %99 = vector.extract_strided_slice %88 {offsets = [0, 64], sizes = [8, 32], strides = [1, 1]} : vector<8x128xf32> to vector<8x32xf32>
    %100 = vector.extract_strided_slice %88 {offsets = [0, 96], sizes = [8, 32], strides = [1, 1]} : vector<8x128xf32> to vector<8x32xf32>
    %cst_41 = arith.constant 1.000000e+00 : f32
    %101 = vector.broadcast %cst_41 : f32 to vector<8x32xf32>
    %102 = arith.addf %101, %100 : vector<8x32xf32>
    %cst_42 = arith.constant 5.000000e-01 : f32
    %103 = vector.broadcast %cst_42 : f32 to vector<8x32xf32>
    %104 = arith.mulf %103, %102 : vector<8x32xf32>
    %105 = arith.mulf %98, %44 : vector<8x32xf32>
    %106 = arith.mulf %93, %99 : vector<8x32xf32>
    %107 = arith.addf %105, %106 : vector<8x32xf32>
    %108 = math.tanh %107 : vector<8x32xf32>
    %109 = arith.mulf %104, %108 : vector<8x32xf32>
    %110 = math.tanh %87 : vector<8x128xf32>
    %111 = vector.extract_strided_slice %110 {offsets = [0, 0], sizes = [8, 32], strides = [1, 1]} : vector<8x128xf32> to vector<8x32xf32>
    %cst_43 = arith.constant 1.000000e+00 : f32
    %112 = vector.broadcast %cst_43 : f32 to vector<8x32xf32>
    %113 = arith.addf %112, %111 : vector<8x32xf32>
    %cst_44 = arith.constant 5.000000e-01 : f32
    %114 = vector.broadcast %cst_44 : f32 to vector<8x32xf32>
    %115 = arith.mulf %114, %113 : vector<8x32xf32>
    %116 = vector.extract_strided_slice %110 {offsets = [0, 32], sizes = [8, 32], strides = [1, 1]} : vector<8x128xf32> to vector<8x32xf32>
    %cst_45 = arith.constant 1.000000e+00 : f32
    %117 = vector.broadcast %cst_45 : f32 to vector<8x32xf32>
    %118 = arith.addf %117, %116 : vector<8x32xf32>
    %cst_46 = arith.constant 5.000000e-01 : f32
    %119 = vector.broadcast %cst_46 : f32 to vector<8x32xf32>
    %120 = arith.mulf %119, %118 : vector<8x32xf32>
    %121 = vector.extract_strided_slice %110 {offsets = [0, 64], sizes = [8, 32], strides = [1, 1]} : vector<8x128xf32> to vector<8x32xf32>
    %122 = vector.extract_strided_slice %110 {offsets = [0, 96], sizes = [8, 32], strides = [1, 1]} : vector<8x128xf32> to vector<8x32xf32>
    %cst_47 = arith.constant 1.000000e+00 : f32
    %123 = vector.broadcast %cst_47 : f32 to vector<8x32xf32>
    %124 = arith.addf %123, %122 : vector<8x32xf32>
    %cst_48 = arith.constant 5.000000e-01 : f32
    %125 = vector.broadcast %cst_48 : f32 to vector<8x32xf32>
    %126 = arith.mulf %125, %124 : vector<8x32xf32>
    %127 = arith.mulf %120, %66 : vector<8x32xf32>
    %128 = arith.mulf %115, %121 : vector<8x32xf32>
    %129 = arith.addf %127, %128 : vector<8x32xf32>
    %130 = math.tanh %129 : vector<8x32xf32>
    %131 = arith.mulf %126, %130 : vector<8x32xf32>
    %132 = arith.index_cast %75 : i32 to index
    %c0_49 = arith.constant 0 : index
    %133 = vector.load %arg18[%132, %c0_49] : memref<64x32xf32, #tpu.memory_space<vmem>>, vector<8x32xf32>
    tpu.vector_store %arg18[%132, %c0_49], %109 {strides = array<i32>} : memref<64x32xf32, #tpu.memory_space<vmem>>, vector<8x32xf32>,
    %134 = arith.index_cast %77 : i32 to index
    %c0_50 = arith.constant 0 : index
    %135 = vector.load %arg19[%134, %c0_50] : memref<64x32xf32, #tpu.memory_space<vmem>>, vector<8x32xf32>
    tpu.vector_store %arg19[%134, %c0_50], %131 {strides = array<i32>} : memref<64x32xf32, #tpu.memory_space<vmem>>, vector<8x32xf32>,
    %c2_i32 = arith.constant 2 : i32
    %c7_i32_51 = arith.constant 7 : i32
    %136 = arith.subi %c7_i32_51, %c2_i32 : i32
    %c8_i32_52 = arith.constant 8 : i32
    %137 = arith.muli %c2_i32, %c8_i32_52 : i32
    %138 = tpu.assume_multiple %137, 8 : i32
    %c8_i32_53 = arith.constant 8 : i32
    %139 = arith.muli %136, %c8_i32_53 : i32
    %140 = tpu.assume_multiple %139, 8 : i32
    %141 = arith.index_cast %138 : i32 to index
    %c0_54 = arith.constant 0 : index
    %142 = vector.load %arg17[%141, %c0_54] : memref<64x256xf32, #tpu.memory_space<vmem>>, vector<8x128xf32>
    %143 = arith.truncf %109 : vector<8x32xf32> to vector<8x32xbf16>
    %cst_55 = arith.constant dense<0.000000e+00> : vector<8x128xf32>
    %144 = tpu.matmul %143, %8, %cst_55 {dimension_numbers = #tpu.dot_dimension_numbers<[1], [0], [0], [1], [0, 0, 1, 1], [], []>} : vector<8x32xbf16>, vector<32x128xbf16>, vector<8x128xf32> -> vector<8x128xf32>
    %145 = arith.addf %142, %144 : vector<8x128xf32>
    %146 = arith.index_cast %140 : i32 to index
    %c128_56 = arith.constant 128 : index
    %147 = vector.load %arg17[%146, %c128_56] : memref<64x256xf32, #tpu.memory_space<vmem>>, vector<8x128xf32>
    %148 = arith.truncf %131 : vector<8x32xf32> to vector<8x32xbf16>
    %cst_57 = arith.constant dense<0.000000e+00> : vector<8x128xf32>
    %149 = tpu.matmul %148, %9, %cst_57 {dimension_numbers = #tpu.dot_dimension_numbers<[1], [0], [0], [1], [0, 0, 1, 1], [], []>} : vector<8x32xbf16>, vector<32x128xbf16>, vector<8x128xf32> -> vector<8x128xf32>
    %150 = arith.addf %147, %149 : vector<8x128xf32>
    %151 = math.tanh %145 : vector<8x128xf32>
    %152 = vector.extract_strided_slice %151 {offsets = [0, 0], sizes = [8, 32], strides = [1, 1]} : vector<8x128xf32> to vector<8x32xf32>
    %cst_58 = arith.constant 1.000000e+00 : f32
    %153 = vector.broadcast %cst_58 : f32 to vector<8x32xf32>
    %154 = arith.addf %153, %152 : vector<8x32xf32>
    %cst_59 = arith.constant 5.000000e-01 : f32
    %155 = vector.broadcast %cst_59 : f32 to vector<8x32xf32>
    %156 = arith.mulf %155, %154 : vector<8x32xf32>
    %157 = vector.extract_strided_slice %151 {offsets = [0, 32], sizes = [8, 32], strides = [1, 1]} : vector<8x128xf32> to vector<8x32xf32>
    %cst_60 = arith.constant 1.000000e+00 : f32
    %158 = vector.broadcast %cst_60 : f32 to vector<8x32xf32>
    %159 = arith.addf %158, %157 : vector<8x32xf32>
    %cst_61 = arith.constant 5.000000e-01 : f32
    %160 = vector.broadcast %cst_61 : f32 to vector<8x32xf32>
    %161 = arith.mulf %160, %159 : vector<8x32xf32>
    %162 = vector.extract_strided_slice %151 {offsets = [0, 64], sizes = [8, 32], strides = [1, 1]} : vector<8x128xf32> to vector<8x32xf32>
    %163 = vector.extract_strided_slice %151 {offsets = [0, 96], sizes = [8, 32], strides = [1, 1]} : vector<8x128xf32> to vector<8x32xf32>
    %cst_62 = arith.constant 1.000000e+00 : f32
    %164 = vector.broadcast %cst_62 : f32 to vector<8x32xf32>
    %165 = arith.addf %164, %163 : vector<8x32xf32>
    %cst_63 = arith.constant 5.000000e-01 : f32
    %166 = vector.broadcast %cst_63 : f32 to vector<8x32xf32>
    %167 = arith.mulf %166, %165 : vector<8x32xf32>
    %168 = arith.mulf %161, %107 : vector<8x32xf32>
    %169 = arith.mulf %156, %162 : vector<8x32xf32>
    %170 = arith.addf %168, %169 : vector<8x32xf32>
    %171 = math.tanh %170 : vector<8x32xf32>
    %172 = arith.mulf %167, %171 : vector<8x32xf32>
    %173 = math.tanh %150 : vector<8x128xf32>
    %174 = vector.extract_strided_slice %173 {offsets = [0, 0], sizes = [8, 32], strides = [1, 1]} : vector<8x128xf32> to vector<8x32xf32>
    %cst_64 = arith.constant 1.000000e+00 : f32
    %175 = vector.broadcast %cst_64 : f32 to vector<8x32xf32>
    %176 = arith.addf %175, %174 : vector<8x32xf32>
    %cst_65 = arith.constant 5.000000e-01 : f32
    %177 = vector.broadcast %cst_65 : f32 to vector<8x32xf32>
    %178 = arith.mulf %177, %176 : vector<8x32xf32>
    %179 = vector.extract_strided_slice %173 {offsets = [0, 32], sizes = [8, 32], strides = [1, 1]} : vector<8x128xf32> to vector<8x32xf32>
    %cst_66 = arith.constant 1.000000e+00 : f32
    %180 = vector.broadcast %cst_66 : f32 to vector<8x32xf32>
    %181 = arith.addf %180, %179 : vector<8x32xf32>
    %cst_67 = arith.constant 5.000000e-01 : f32
    %182 = vector.broadcast %cst_67 : f32 to vector<8x32xf32>
    %183 = arith.mulf %182, %181 : vector<8x32xf32>
    %184 = vector.extract_strided_slice %173 {offsets = [0, 64], sizes = [8, 32], strides = [1, 1]} : vector<8x128xf32> to vector<8x32xf32>
    %185 = vector.extract_strided_slice %173 {offsets = [0, 96], sizes = [8, 32], strides = [1, 1]} : vector<8x128xf32> to vector<8x32xf32>
    %cst_68 = arith.constant 1.000000e+00 : f32
    %186 = vector.broadcast %cst_68 : f32 to vector<8x32xf32>
    %187 = arith.addf %186, %185 : vector<8x32xf32>
    %cst_69 = arith.constant 5.000000e-01 : f32
    %188 = vector.broadcast %cst_69 : f32 to vector<8x32xf32>
    %189 = arith.mulf %188, %187 : vector<8x32xf32>
    %190 = arith.mulf %183, %129 : vector<8x32xf32>
    %191 = arith.mulf %178, %184 : vector<8x32xf32>
    %192 = arith.addf %190, %191 : vector<8x32xf32>
    %193 = math.tanh %192 : vector<8x32xf32>
    %194 = arith.mulf %189, %193 : vector<8x32xf32>
    %195 = arith.index_cast %138 : i32 to index
    %c0_70 = arith.constant 0 : index
    %196 = vector.load %arg18[%195, %c0_70] : memref<64x32xf32, #tpu.memory_space<vmem>>, vector<8x32xf32>
    tpu.vector_store %arg18[%195, %c0_70], %172 {strides = array<i32>} : memref<64x32xf32, #tpu.memory_space<vmem>>, vector<8x32xf32>,
    %197 = arith.index_cast %140 : i32 to index
    %c0_71 = arith.constant 0 : index
    %198 = vector.load %arg19[%197, %c0_71] : memref<64x32xf32, #tpu.memory_space<vmem>>, vector<8x32xf32>
    tpu.vector_store %arg19[%197, %c0_71], %194 {strides = array<i32>} : memref<64x32xf32, #tpu.memory_space<vmem>>, vector<8x32xf32>,
    %c3_i32 = arith.constant 3 : i32
    %c7_i32_72 = arith.constant 7 : i32
    %199 = arith.subi %c7_i32_72, %c3_i32 : i32
    %c8_i32_73 = arith.constant 8 : i32
    %200 = arith.muli %c3_i32, %c8_i32_73 : i32
    %201 = tpu.assume_multiple %200, 8 : i32
    %c8_i32_74 = arith.constant 8 : i32
    %202 = arith.muli %199, %c8_i32_74 : i32
    %203 = tpu.assume_multiple %202, 8 : i32
    %204 = arith.index_cast %201 : i32 to index
    %c0_75 = arith.constant 0 : index
    %205 = vector.load %arg17[%204, %c0_75] : memref<64x256xf32, #tpu.memory_space<vmem>>, vector<8x128xf32>
    %206 = arith.truncf %172 : vector<8x32xf32> to vector<8x32xbf16>
    %cst_76 = arith.constant dense<0.000000e+00> : vector<8x128xf32>
    %207 = tpu.matmul %206, %8, %cst_76 {dimension_numbers = #tpu.dot_dimension_numbers<[1], [0], [0], [1], [0, 0, 1, 1], [], []>} : vector<8x32xbf16>, vector<32x128xbf16>, vector<8x128xf32> -> vector<8x128xf32>
    %208 = arith.addf %205, %207 : vector<8x128xf32>
    %209 = arith.index_cast %203 : i32 to index
    %c128_77 = arith.constant 128 : index
    %210 = vector.load %arg17[%209, %c128_77] : memref<64x256xf32, #tpu.memory_space<vmem>>, vector<8x128xf32>
    %211 = arith.truncf %194 : vector<8x32xf32> to vector<8x32xbf16>
    %cst_78 = arith.constant dense<0.000000e+00> : vector<8x128xf32>
    %212 = tpu.matmul %211, %9, %cst_78 {dimension_numbers = #tpu.dot_dimension_numbers<[1], [0], [0], [1], [0, 0, 1, 1], [], []>} : vector<8x32xbf16>, vector<32x128xbf16>, vector<8x128xf32> -> vector<8x128xf32>
    %213 = arith.addf %210, %212 : vector<8x128xf32>
    %214 = math.tanh %208 : vector<8x128xf32>
    %215 = vector.extract_strided_slice %214 {offsets = [0, 0], sizes = [8, 32], strides = [1, 1]} : vector<8x128xf32> to vector<8x32xf32>
    %cst_79 = arith.constant 1.000000e+00 : f32
    %216 = vector.broadcast %cst_79 : f32 to vector<8x32xf32>
    %217 = arith.addf %216, %215 : vector<8x32xf32>
    %cst_80 = arith.constant 5.000000e-01 : f32
    %218 = vector.broadcast %cst_80 : f32 to vector<8x32xf32>
    %219 = arith.mulf %218, %217 : vector<8x32xf32>
    %220 = vector.extract_strided_slice %214 {offsets = [0, 32], sizes = [8, 32], strides = [1, 1]} : vector<8x128xf32> to vector<8x32xf32>
    %cst_81 = arith.constant 1.000000e+00 : f32
    %221 = vector.broadcast %cst_81 : f32 to vector<8x32xf32>
    %222 = arith.addf %221, %220 : vector<8x32xf32>
    %cst_82 = arith.constant 5.000000e-01 : f32
    %223 = vector.broadcast %cst_82 : f32 to vector<8x32xf32>
    %224 = arith.mulf %223, %222 : vector<8x32xf32>
    %225 = vector.extract_strided_slice %214 {offsets = [0, 64], sizes = [8, 32], strides = [1, 1]} : vector<8x128xf32> to vector<8x32xf32>
    %226 = vector.extract_strided_slice %214 {offsets = [0, 96], sizes = [8, 32], strides = [1, 1]} : vector<8x128xf32> to vector<8x32xf32>
    %cst_83 = arith.constant 1.000000e+00 : f32
    %227 = vector.broadcast %cst_83 : f32 to vector<8x32xf32>
    %228 = arith.addf %227, %226 : vector<8x32xf32>
    %cst_84 = arith.constant 5.000000e-01 : f32
    %229 = vector.broadcast %cst_84 : f32 to vector<8x32xf32>
    %230 = arith.mulf %229, %228 : vector<8x32xf32>
    %231 = arith.mulf %224, %170 : vector<8x32xf32>
    %232 = arith.mulf %219, %225 : vector<8x32xf32>
    %233 = arith.addf %231, %232 : vector<8x32xf32>
    %234 = math.tanh %233 : vector<8x32xf32>
    %235 = arith.mulf %230, %234 : vector<8x32xf32>
    %236 = math.tanh %213 : vector<8x128xf32>
    %237 = vector.extract_strided_slice %236 {offsets = [0, 0], sizes = [8, 32], strides = [1, 1]} : vector<8x128xf32> to vector<8x32xf32>
    %cst_85 = arith.constant 1.000000e+00 : f32
    %238 = vector.broadcast %cst_85 : f32 to vector<8x32xf32>
    %239 = arith.addf %238, %237 : vector<8x32xf32>
    %cst_86 = arith.constant 5.000000e-01 : f32
    %240 = vector.broadcast %cst_86 : f32 to vector<8x32xf32>
    %241 = arith.mulf %240, %239 : vector<8x32xf32>
    %242 = vector.extract_strided_slice %236 {offsets = [0, 32], sizes = [8, 32], strides = [1, 1]} : vector<8x128xf32> to vector<8x32xf32>
    %cst_87 = arith.constant 1.000000e+00 : f32
    %243 = vector.broadcast %cst_87 : f32 to vector<8x32xf32>
    %244 = arith.addf %243, %242 : vector<8x32xf32>
    %cst_88 = arith.constant 5.000000e-01 : f32
    %245 = vector.broadcast %cst_88 : f32 to vector<8x32xf32>
    %246 = arith.mulf %245, %244 : vector<8x32xf32>
    %247 = vector.extract_strided_slice %236 {offsets = [0, 64], sizes = [8, 32], strides = [1, 1]} : vector<8x128xf32> to vector<8x32xf32>
    %248 = vector.extract_strided_slice %236 {offsets = [0, 96], sizes = [8, 32], strides = [1, 1]} : vector<8x128xf32> to vector<8x32xf32>
    %cst_89 = arith.constant 1.000000e+00 : f32
    %249 = vector.broadcast %cst_89 : f32 to vector<8x32xf32>
    %250 = arith.addf %249, %248 : vector<8x32xf32>
    %cst_90 = arith.constant 5.000000e-01 : f32
    %251 = vector.broadcast %cst_90 : f32 to vector<8x32xf32>
    %252 = arith.mulf %251, %250 : vector<8x32xf32>
    %253 = arith.mulf %246, %192 : vector<8x32xf32>
    %254 = arith.mulf %241, %247 : vector<8x32xf32>
    %255 = arith.addf %253, %254 : vector<8x32xf32>
    %256 = math.tanh %255 : vector<8x32xf32>
    %257 = arith.mulf %252, %256 : vector<8x32xf32>
    %258 = arith.index_cast %201 : i32 to index
    %c0_91 = arith.constant 0 : index
    %259 = vector.load %arg18[%258, %c0_91] : memref<64x32xf32, #tpu.memory_space<vmem>>, vector<8x32xf32>
    tpu.vector_store %arg18[%258, %c0_91], %235 {strides = array<i32>} : memref<64x32xf32, #tpu.memory_space<vmem>>, vector<8x32xf32>,
    %260 = arith.index_cast %203 : i32 to index
    %c0_92 = arith.constant 0 : index
    %261 = vector.load %arg19[%260, %c0_92] : memref<64x32xf32, #tpu.memory_space<vmem>>, vector<8x32xf32>
    tpu.vector_store %arg19[%260, %c0_92], %257 {strides = array<i32>} : memref<64x32xf32, #tpu.memory_space<vmem>>, vector<8x32xf32>,
    %c4_i32 = arith.constant 4 : i32
    %c7_i32_93 = arith.constant 7 : i32
    %262 = arith.subi %c7_i32_93, %c4_i32 : i32
    %c8_i32_94 = arith.constant 8 : i32
    %263 = arith.muli %c4_i32, %c8_i32_94 : i32
    %264 = tpu.assume_multiple %263, 8 : i32
    %c8_i32_95 = arith.constant 8 : i32
    %265 = arith.muli %262, %c8_i32_95 : i32
    %266 = tpu.assume_multiple %265, 8 : i32
    %267 = arith.index_cast %264 : i32 to index
    %c0_96 = arith.constant 0 : index
    %268 = vector.load %arg17[%267, %c0_96] : memref<64x256xf32, #tpu.memory_space<vmem>>, vector<8x128xf32>
    %269 = arith.truncf %235 : vector<8x32xf32> to vector<8x32xbf16>
    %cst_97 = arith.constant dense<0.000000e+00> : vector<8x128xf32>
    %270 = tpu.matmul %269, %8, %cst_97 {dimension_numbers = #tpu.dot_dimension_numbers<[1], [0], [0], [1], [0, 0, 1, 1], [], []>} : vector<8x32xbf16>, vector<32x128xbf16>, vector<8x128xf32> -> vector<8x128xf32>
    %271 = arith.addf %268, %270 : vector<8x128xf32>
    %272 = arith.index_cast %266 : i32 to index
    %c128_98 = arith.constant 128 : index
    %273 = vector.load %arg17[%272, %c128_98] : memref<64x256xf32, #tpu.memory_space<vmem>>, vector<8x128xf32>
    %274 = arith.truncf %257 : vector<8x32xf32> to vector<8x32xbf16>
    %cst_99 = arith.constant dense<0.000000e+00> : vector<8x128xf32>
    %275 = tpu.matmul %274, %9, %cst_99 {dimension_numbers = #tpu.dot_dimension_numbers<[1], [0], [0], [1], [0, 0, 1, 1], [], []>} : vector<8x32xbf16>, vector<32x128xbf16>, vector<8x128xf32> -> vector<8x128xf32>
    %276 = arith.addf %273, %275 : vector<8x128xf32>
    %277 = math.tanh %271 : vector<8x128xf32>
    %278 = vector.extract_strided_slice %277 {offsets = [0, 0], sizes = [8, 32], strides = [1, 1]} : vector<8x128xf32> to vector<8x32xf32>
    %cst_100 = arith.constant 1.000000e+00 : f32
    %279 = vector.broadcast %cst_100 : f32 to vector<8x32xf32>
    %280 = arith.addf %279, %278 : vector<8x32xf32>
    %cst_101 = arith.constant 5.000000e-01 : f32
    %281 = vector.broadcast %cst_101 : f32 to vector<8x32xf32>
    %282 = arith.mulf %281, %280 : vector<8x32xf32>
    %283 = vector.extract_strided_slice %277 {offsets = [0, 32], sizes = [8, 32], strides = [1, 1]} : vector<8x128xf32> to vector<8x32xf32>
    %cst_102 = arith.constant 1.000000e+00 : f32
    %284 = vector.broadcast %cst_102 : f32 to vector<8x32xf32>
    %285 = arith.addf %284, %283 : vector<8x32xf32>
    %cst_103 = arith.constant 5.000000e-01 : f32
    %286 = vector.broadcast %cst_103 : f32 to vector<8x32xf32>
    %287 = arith.mulf %286, %285 : vector<8x32xf32>
    %288 = vector.extract_strided_slice %277 {offsets = [0, 64], sizes = [8, 32], strides = [1, 1]} : vector<8x128xf32> to vector<8x32xf32>
    %289 = vector.extract_strided_slice %277 {offsets = [0, 96], sizes = [8, 32], strides = [1, 1]} : vector<8x128xf32> to vector<8x32xf32>
    %cst_104 = arith.constant 1.000000e+00 : f32
    %290 = vector.broadcast %cst_104 : f32 to vector<8x32xf32>
    %291 = arith.addf %290, %289 : vector<8x32xf32>
    %cst_105 = arith.constant 5.000000e-01 : f32
    %292 = vector.broadcast %cst_105 : f32 to vector<8x32xf32>
    %293 = arith.mulf %292, %291 : vector<8x32xf32>
    %294 = arith.mulf %287, %233 : vector<8x32xf32>
    %295 = arith.mulf %282, %288 : vector<8x32xf32>
    %296 = arith.addf %294, %295 : vector<8x32xf32>
    %297 = math.tanh %296 : vector<8x32xf32>
    %298 = arith.mulf %293, %297 : vector<8x32xf32>
    %299 = math.tanh %276 : vector<8x128xf32>
    %300 = vector.extract_strided_slice %299 {offsets = [0, 0], sizes = [8, 32], strides = [1, 1]} : vector<8x128xf32> to vector<8x32xf32>
    %cst_106 = arith.constant 1.000000e+00 : f32
    %301 = vector.broadcast %cst_106 : f32 to vector<8x32xf32>
    %302 = arith.addf %301, %300 : vector<8x32xf32>
    %cst_107 = arith.constant 5.000000e-01 : f32
    %303 = vector.broadcast %cst_107 : f32 to vector<8x32xf32>
    %304 = arith.mulf %303, %302 : vector<8x32xf32>
    %305 = vector.extract_strided_slice %299 {offsets = [0, 32], sizes = [8, 32], strides = [1, 1]} : vector<8x128xf32> to vector<8x32xf32>
    %cst_108 = arith.constant 1.000000e+00 : f32
    %306 = vector.broadcast %cst_108 : f32 to vector<8x32xf32>
    %307 = arith.addf %306, %305 : vector<8x32xf32>
    %cst_109 = arith.constant 5.000000e-01 : f32
    %308 = vector.broadcast %cst_109 : f32 to vector<8x32xf32>
    %309 = arith.mulf %308, %307 : vector<8x32xf32>
    %310 = vector.extract_strided_slice %299 {offsets = [0, 64], sizes = [8, 32], strides = [1, 1]} : vector<8x128xf32> to vector<8x32xf32>
    %311 = vector.extract_strided_slice %299 {offsets = [0, 96], sizes = [8, 32], strides = [1, 1]} : vector<8x128xf32> to vector<8x32xf32>
    %cst_110 = arith.constant 1.000000e+00 : f32
    %312 = vector.broadcast %cst_110 : f32 to vector<8x32xf32>
    %313 = arith.addf %312, %311 : vector<8x32xf32>
    %cst_111 = arith.constant 5.000000e-01 : f32
    %314 = vector.broadcast %cst_111 : f32 to vector<8x32xf32>
    %315 = arith.mulf %314, %313 : vector<8x32xf32>
    %316 = arith.mulf %309, %255 : vector<8x32xf32>
    %317 = arith.mulf %304, %310 : vector<8x32xf32>
    %318 = arith.addf %316, %317 : vector<8x32xf32>
    %319 = math.tanh %318 : vector<8x32xf32>
    %320 = arith.mulf %315, %319 : vector<8x32xf32>
    %321 = arith.index_cast %264 : i32 to index
    %c0_112 = arith.constant 0 : index
    %322 = vector.load %arg18[%321, %c0_112] : memref<64x32xf32, #tpu.memory_space<vmem>>, vector<8x32xf32>
    tpu.vector_store %arg18[%321, %c0_112], %298 {strides = array<i32>} : memref<64x32xf32, #tpu.memory_space<vmem>>, vector<8x32xf32>,
    %323 = arith.index_cast %266 : i32 to index
    %c0_113 = arith.constant 0 : index
    %324 = vector.load %arg19[%323, %c0_113] : memref<64x32xf32, #tpu.memory_space<vmem>>, vector<8x32xf32>
    tpu.vector_store %arg19[%323, %c0_113], %320 {strides = array<i32>} : memref<64x32xf32, #tpu.memory_space<vmem>>, vector<8x32xf32>,
    %c5_i32 = arith.constant 5 : i32
    %c7_i32_114 = arith.constant 7 : i32
    %325 = arith.subi %c7_i32_114, %c5_i32 : i32
    %c8_i32_115 = arith.constant 8 : i32
    %326 = arith.muli %c5_i32, %c8_i32_115 : i32
    %327 = tpu.assume_multiple %326, 8 : i32
    %c8_i32_116 = arith.constant 8 : i32
    %328 = arith.muli %325, %c8_i32_116 : i32
    %329 = tpu.assume_multiple %328, 8 : i32
    %330 = arith.index_cast %327 : i32 to index
    %c0_117 = arith.constant 0 : index
    %331 = vector.load %arg17[%330, %c0_117] : memref<64x256xf32, #tpu.memory_space<vmem>>, vector<8x128xf32>
    %332 = arith.truncf %298 : vector<8x32xf32> to vector<8x32xbf16>
    %cst_118 = arith.constant dense<0.000000e+00> : vector<8x128xf32>
    %333 = tpu.matmul %332, %8, %cst_118 {dimension_numbers = #tpu.dot_dimension_numbers<[1], [0], [0], [1], [0, 0, 1, 1], [], []>} : vector<8x32xbf16>, vector<32x128xbf16>, vector<8x128xf32> -> vector<8x128xf32>
    %334 = arith.addf %331, %333 : vector<8x128xf32>
    %335 = arith.index_cast %329 : i32 to index
    %c128_119 = arith.constant 128 : index
    %336 = vector.load %arg17[%335, %c128_119] : memref<64x256xf32, #tpu.memory_space<vmem>>, vector<8x128xf32>
    %337 = arith.truncf %320 : vector<8x32xf32> to vector<8x32xbf16>
    %cst_120 = arith.constant dense<0.000000e+00> : vector<8x128xf32>
    %338 = tpu.matmul %337, %9, %cst_120 {dimension_numbers = #tpu.dot_dimension_numbers<[1], [0], [0], [1], [0, 0, 1, 1], [], []>} : vector<8x32xbf16>, vector<32x128xbf16>, vector<8x128xf32> -> vector<8x128xf32>
    %339 = arith.addf %336, %338 : vector<8x128xf32>
    %340 = math.tanh %334 : vector<8x128xf32>
    %341 = vector.extract_strided_slice %340 {offsets = [0, 0], sizes = [8, 32], strides = [1, 1]} : vector<8x128xf32> to vector<8x32xf32>
    %cst_121 = arith.constant 1.000000e+00 : f32
    %342 = vector.broadcast %cst_121 : f32 to vector<8x32xf32>
    %343 = arith.addf %342, %341 : vector<8x32xf32>
    %cst_122 = arith.constant 5.000000e-01 : f32
    %344 = vector.broadcast %cst_122 : f32 to vector<8x32xf32>
    %345 = arith.mulf %344, %343 : vector<8x32xf32>
    %346 = vector.extract_strided_slice %340 {offsets = [0, 32], sizes = [8, 32], strides = [1, 1]} : vector<8x128xf32> to vector<8x32xf32>
    %cst_123 = arith.constant 1.000000e+00 : f32
    %347 = vector.broadcast %cst_123 : f32 to vector<8x32xf32>
    %348 = arith.addf %347, %346 : vector<8x32xf32>
    %cst_124 = arith.constant 5.000000e-01 : f32
    %349 = vector.broadcast %cst_124 : f32 to vector<8x32xf32>
    %350 = arith.mulf %349, %348 : vector<8x32xf32>
    %351 = vector.extract_strided_slice %340 {offsets = [0, 64], sizes = [8, 32], strides = [1, 1]} : vector<8x128xf32> to vector<8x32xf32>
    %352 = vector.extract_strided_slice %340 {offsets = [0, 96], sizes = [8, 32], strides = [1, 1]} : vector<8x128xf32> to vector<8x32xf32>
    %cst_125 = arith.constant 1.000000e+00 : f32
    %353 = vector.broadcast %cst_125 : f32 to vector<8x32xf32>
    %354 = arith.addf %353, %352 : vector<8x32xf32>
    %cst_126 = arith.constant 5.000000e-01 : f32
    %355 = vector.broadcast %cst_126 : f32 to vector<8x32xf32>
    %356 = arith.mulf %355, %354 : vector<8x32xf32>
    %357 = arith.mulf %350, %296 : vector<8x32xf32>
    %358 = arith.mulf %345, %351 : vector<8x32xf32>
    %359 = arith.addf %357, %358 : vector<8x32xf32>
    %360 = math.tanh %359 : vector<8x32xf32>
    %361 = arith.mulf %356, %360 : vector<8x32xf32>
    %362 = math.tanh %339 : vector<8x128xf32>
    %363 = vector.extract_strided_slice %362 {offsets = [0, 0], sizes = [8, 32], strides = [1, 1]} : vector<8x128xf32> to vector<8x32xf32>
    %cst_127 = arith.constant 1.000000e+00 : f32
    %364 = vector.broadcast %cst_127 : f32 to vector<8x32xf32>
    %365 = arith.addf %364, %363 : vector<8x32xf32>
    %cst_128 = arith.constant 5.000000e-01 : f32
    %366 = vector.broadcast %cst_128 : f32 to vector<8x32xf32>
    %367 = arith.mulf %366, %365 : vector<8x32xf32>
    %368 = vector.extract_strided_slice %362 {offsets = [0, 32], sizes = [8, 32], strides = [1, 1]} : vector<8x128xf32> to vector<8x32xf32>
    %cst_129 = arith.constant 1.000000e+00 : f32
    %369 = vector.broadcast %cst_129 : f32 to vector<8x32xf32>
    %370 = arith.addf %369, %368 : vector<8x32xf32>
    %cst_130 = arith.constant 5.000000e-01 : f32
    %371 = vector.broadcast %cst_130 : f32 to vector<8x32xf32>
    %372 = arith.mulf %371, %370 : vector<8x32xf32>
    %373 = vector.extract_strided_slice %362 {offsets = [0, 64], sizes = [8, 32], strides = [1, 1]} : vector<8x128xf32> to vector<8x32xf32>
    %374 = vector.extract_strided_slice %362 {offsets = [0, 96], sizes = [8, 32], strides = [1, 1]} : vector<8x128xf32> to vector<8x32xf32>
    %cst_131 = arith.constant 1.000000e+00 : f32
    %375 = vector.broadcast %cst_131 : f32 to vector<8x32xf32>
    %376 = arith.addf %375, %374 : vector<8x32xf32>
    %cst_132 = arith.constant 5.000000e-01 : f32
    %377 = vector.broadcast %cst_132 : f32 to vector<8x32xf32>
    %378 = arith.mulf %377, %376 : vector<8x32xf32>
    %379 = arith.mulf %372, %318 : vector<8x32xf32>
    %380 = arith.mulf %367, %373 : vector<8x32xf32>
    %381 = arith.addf %379, %380 : vector<8x32xf32>
    %382 = math.tanh %381 : vector<8x32xf32>
    %383 = arith.mulf %378, %382 : vector<8x32xf32>
    %384 = arith.index_cast %327 : i32 to index
    %c0_133 = arith.constant 0 : index
    %385 = vector.load %arg18[%384, %c0_133] : memref<64x32xf32, #tpu.memory_space<vmem>>, vector<8x32xf32>
    tpu.vector_store %arg18[%384, %c0_133], %361 {strides = array<i32>} : memref<64x32xf32, #tpu.memory_space<vmem>>, vector<8x32xf32>,
    %386 = arith.index_cast %329 : i32 to index
    %c0_134 = arith.constant 0 : index
    %387 = vector.load %arg19[%386, %c0_134] : memref<64x32xf32, #tpu.memory_space<vmem>>, vector<8x32xf32>
    tpu.vector_store %arg19[%386, %c0_134], %383 {strides = array<i32>} : memref<64x32xf32, #tpu.memory_space<vmem>>, vector<8x32xf32>,
    %c6_i32 = arith.constant 6 : i32
    %c7_i32_135 = arith.constant 7 : i32
    %388 = arith.subi %c7_i32_135, %c6_i32 : i32
    %c8_i32_136 = arith.constant 8 : i32
    %389 = arith.muli %c6_i32, %c8_i32_136 : i32
    %390 = tpu.assume_multiple %389, 8 : i32
    %c8_i32_137 = arith.constant 8 : i32
    %391 = arith.muli %388, %c8_i32_137 : i32
    %392 = tpu.assume_multiple %391, 8 : i32
    %393 = arith.index_cast %390 : i32 to index
    %c0_138 = arith.constant 0 : index
    %394 = vector.load %arg17[%393, %c0_138] : memref<64x256xf32, #tpu.memory_space<vmem>>, vector<8x128xf32>
    %395 = arith.truncf %361 : vector<8x32xf32> to vector<8x32xbf16>
    %cst_139 = arith.constant dense<0.000000e+00> : vector<8x128xf32>
    %396 = tpu.matmul %395, %8, %cst_139 {dimension_numbers = #tpu.dot_dimension_numbers<[1], [0], [0], [1], [0, 0, 1, 1], [], []>} : vector<8x32xbf16>, vector<32x128xbf16>, vector<8x128xf32> -> vector<8x128xf32>
    %397 = arith.addf %394, %396 : vector<8x128xf32>
    %398 = arith.index_cast %392 : i32 to index
    %c128_140 = arith.constant 128 : index
    %399 = vector.load %arg17[%398, %c128_140] : memref<64x256xf32, #tpu.memory_space<vmem>>, vector<8x128xf32>
    %400 = arith.truncf %383 : vector<8x32xf32> to vector<8x32xbf16>
    %cst_141 = arith.constant dense<0.000000e+00> : vector<8x128xf32>
    %401 = tpu.matmul %400, %9, %cst_141 {dimension_numbers = #tpu.dot_dimension_numbers<[1], [0], [0], [1], [0, 0, 1, 1], [], []>} : vector<8x32xbf16>, vector<32x128xbf16>, vector<8x128xf32> -> vector<8x128xf32>
    %402 = arith.addf %399, %401 : vector<8x128xf32>
    %403 = math.tanh %397 : vector<8x128xf32>
    %404 = vector.extract_strided_slice %403 {offsets = [0, 0], sizes = [8, 32], strides = [1, 1]} : vector<8x128xf32> to vector<8x32xf32>
    %cst_142 = arith.constant 1.000000e+00 : f32
    %405 = vector.broadcast %cst_142 : f32 to vector<8x32xf32>
    %406 = arith.addf %405, %404 : vector<8x32xf32>
    %cst_143 = arith.constant 5.000000e-01 : f32
    %407 = vector.broadcast %cst_143 : f32 to vector<8x32xf32>
    %408 = arith.mulf %407, %406 : vector<8x32xf32>
    %409 = vector.extract_strided_slice %403 {offsets = [0, 32], sizes = [8, 32], strides = [1, 1]} : vector<8x128xf32> to vector<8x32xf32>
    %cst_144 = arith.constant 1.000000e+00 : f32
    %410 = vector.broadcast %cst_144 : f32 to vector<8x32xf32>
    %411 = arith.addf %410, %409 : vector<8x32xf32>
    %cst_145 = arith.constant 5.000000e-01 : f32
    %412 = vector.broadcast %cst_145 : f32 to vector<8x32xf32>
    %413 = arith.mulf %412, %411 : vector<8x32xf32>
    %414 = vector.extract_strided_slice %403 {offsets = [0, 64], sizes = [8, 32], strides = [1, 1]} : vector<8x128xf32> to vector<8x32xf32>
    %415 = vector.extract_strided_slice %403 {offsets = [0, 96], sizes = [8, 32], strides = [1, 1]} : vector<8x128xf32> to vector<8x32xf32>
    %cst_146 = arith.constant 1.000000e+00 : f32
    %416 = vector.broadcast %cst_146 : f32 to vector<8x32xf32>
    %417 = arith.addf %416, %415 : vector<8x32xf32>
    %cst_147 = arith.constant 5.000000e-01 : f32
    %418 = vector.broadcast %cst_147 : f32 to vector<8x32xf32>
    %419 = arith.mulf %418, %417 : vector<8x32xf32>
    %420 = arith.mulf %413, %359 : vector<8x32xf32>
    %421 = arith.mulf %408, %414 : vector<8x32xf32>
    %422 = arith.addf %420, %421 : vector<8x32xf32>
    %423 = math.tanh %422 : vector<8x32xf32>
    %424 = arith.mulf %419, %423 : vector<8x32xf32>
    %425 = math.tanh %402 : vector<8x128xf32>
    %426 = vector.extract_strided_slice %425 {offsets = [0, 0], sizes = [8, 32], strides = [1, 1]} : vector<8x128xf32> to vector<8x32xf32>
    %cst_148 = arith.constant 1.000000e+00 : f32
    %427 = vector.broadcast %cst_148 : f32 to vector<8x32xf32>
    %428 = arith.addf %427, %426 : vector<8x32xf32>
    %cst_149 = arith.constant 5.000000e-01 : f32
    %429 = vector.broadcast %cst_149 : f32 to vector<8x32xf32>
    %430 = arith.mulf %429, %428 : vector<8x32xf32>
    %431 = vector.extract_strided_slice %425 {offsets = [0, 32], sizes = [8, 32], strides = [1, 1]} : vector<8x128xf32> to vector<8x32xf32>
    %cst_150 = arith.constant 1.000000e+00 : f32
    %432 = vector.broadcast %cst_150 : f32 to vector<8x32xf32>
    %433 = arith.addf %432, %431 : vector<8x32xf32>
    %cst_151 = arith.constant 5.000000e-01 : f32
    %434 = vector.broadcast %cst_151 : f32 to vector<8x32xf32>
    %435 = arith.mulf %434, %433 : vector<8x32xf32>
    %436 = vector.extract_strided_slice %425 {offsets = [0, 64], sizes = [8, 32], strides = [1, 1]} : vector<8x128xf32> to vector<8x32xf32>
    %437 = vector.extract_strided_slice %425 {offsets = [0, 96], sizes = [8, 32], strides = [1, 1]} : vector<8x128xf32> to vector<8x32xf32>
    %cst_152 = arith.constant 1.000000e+00 : f32
    %438 = vector.broadcast %cst_152 : f32 to vector<8x32xf32>
    %439 = arith.addf %438, %437 : vector<8x32xf32>
    %cst_153 = arith.constant 5.000000e-01 : f32
    %440 = vector.broadcast %cst_153 : f32 to vector<8x32xf32>
    %441 = arith.mulf %440, %439 : vector<8x32xf32>
    %442 = arith.mulf %435, %381 : vector<8x32xf32>
    %443 = arith.mulf %430, %436 : vector<8x32xf32>
    %444 = arith.addf %442, %443 : vector<8x32xf32>
    %445 = math.tanh %444 : vector<8x32xf32>
    %446 = arith.mulf %441, %445 : vector<8x32xf32>
    %447 = arith.index_cast %390 : i32 to index
    %c0_154 = arith.constant 0 : index
    %448 = vector.load %arg18[%447, %c0_154] : memref<64x32xf32, #tpu.memory_space<vmem>>, vector<8x32xf32>
    tpu.vector_store %arg18[%447, %c0_154], %424 {strides = array<i32>} : memref<64x32xf32, #tpu.memory_space<vmem>>, vector<8x32xf32>,
    %449 = arith.index_cast %392 : i32 to index
    %c0_155 = arith.constant 0 : index
    %450 = vector.load %arg19[%449, %c0_155] : memref<64x32xf32, #tpu.memory_space<vmem>>, vector<8x32xf32>
    tpu.vector_store %arg19[%449, %c0_155], %446 {strides = array<i32>} : memref<64x32xf32, #tpu.memory_space<vmem>>, vector<8x32xf32>,
    %c7_i32_156 = arith.constant 7 : i32
    %c7_i32_157 = arith.constant 7 : i32
    %451 = arith.subi %c7_i32_157, %c7_i32_156 : i32
    %c8_i32_158 = arith.constant 8 : i32
    %452 = arith.muli %c7_i32_156, %c8_i32_158 : i32
    %453 = tpu.assume_multiple %452, 8 : i32
    %c8_i32_159 = arith.constant 8 : i32
    %454 = arith.muli %451, %c8_i32_159 : i32
    %455 = tpu.assume_multiple %454, 8 : i32
    %456 = arith.index_cast %453 : i32 to index
    %c0_160 = arith.constant 0 : index
    %457 = vector.load %arg17[%456, %c0_160] : memref<64x256xf32, #tpu.memory_space<vmem>>, vector<8x128xf32>
    %458 = arith.truncf %424 : vector<8x32xf32> to vector<8x32xbf16>
    %cst_161 = arith.constant dense<0.000000e+00> : vector<8x128xf32>
    %459 = tpu.matmul %458, %8, %cst_161 {dimension_numbers = #tpu.dot_dimension_numbers<[1], [0], [0], [1], [0, 0, 1, 1], [], []>} : vector<8x32xbf16>, vector<32x128xbf16>, vector<8x128xf32> -> vector<8x128xf32>
    %460 = arith.addf %457, %459 : vector<8x128xf32>
    %461 = arith.index_cast %455 : i32 to index
    %c128_162 = arith.constant 128 : index
    %462 = vector.load %arg17[%461, %c128_162] : memref<64x256xf32, #tpu.memory_space<vmem>>, vector<8x128xf32>
    %463 = arith.truncf %446 : vector<8x32xf32> to vector<8x32xbf16>
    %cst_163 = arith.constant dense<0.000000e+00> : vector<8x128xf32>
    %464 = tpu.matmul %463, %9, %cst_163 {dimension_numbers = #tpu.dot_dimension_numbers<[1], [0], [0], [1], [0, 0, 1, 1], [], []>} : vector<8x32xbf16>, vector<32x128xbf16>, vector<8x128xf32> -> vector<8x128xf32>
    %465 = arith.addf %462, %464 : vector<8x128xf32>
    %466 = math.tanh %460 : vector<8x128xf32>
    %467 = vector.extract_strided_slice %466 {offsets = [0, 0], sizes = [8, 32], strides = [1, 1]} : vector<8x128xf32> to vector<8x32xf32>
    %cst_164 = arith.constant 1.000000e+00 : f32
    %468 = vector.broadcast %cst_164 : f32 to vector<8x32xf32>
    %469 = arith.addf %468, %467 : vector<8x32xf32>
    %cst_165 = arith.constant 5.000000e-01 : f32
    %470 = vector.broadcast %cst_165 : f32 to vector<8x32xf32>
    %471 = arith.mulf %470, %469 : vector<8x32xf32>
    %472 = vector.extract_strided_slice %466 {offsets = [0, 32], sizes = [8, 32], strides = [1, 1]} : vector<8x128xf32> to vector<8x32xf32>
    %cst_166 = arith.constant 1.000000e+00 : f32
    %473 = vector.broadcast %cst_166 : f32 to vector<8x32xf32>
    %474 = arith.addf %473, %472 : vector<8x32xf32>
    %cst_167 = arith.constant 5.000000e-01 : f32
    %475 = vector.broadcast %cst_167 : f32 to vector<8x32xf32>
    %476 = arith.mulf %475, %474 : vector<8x32xf32>
    %477 = vector.extract_strided_slice %466 {offsets = [0, 64], sizes = [8, 32], strides = [1, 1]} : vector<8x128xf32> to vector<8x32xf32>
    %478 = vector.extract_strided_slice %466 {offsets = [0, 96], sizes = [8, 32], strides = [1, 1]} : vector<8x128xf32> to vector<8x32xf32>
    %cst_168 = arith.constant 1.000000e+00 : f32
    %479 = vector.broadcast %cst_168 : f32 to vector<8x32xf32>
    %480 = arith.addf %479, %478 : vector<8x32xf32>
    %cst_169 = arith.constant 5.000000e-01 : f32
    %481 = vector.broadcast %cst_169 : f32 to vector<8x32xf32>
    %482 = arith.mulf %481, %480 : vector<8x32xf32>
    %483 = arith.mulf %476, %422 : vector<8x32xf32>
    %484 = arith.mulf %471, %477 : vector<8x32xf32>
    %485 = arith.addf %483, %484 : vector<8x32xf32>
    %486 = math.tanh %485 : vector<8x32xf32>
    %487 = arith.mulf %482, %486 : vector<8x32xf32>
    %488 = math.tanh %465 : vector<8x128xf32>
    %489 = vector.extract_strided_slice %488 {offsets = [0, 0], sizes = [8, 32], strides = [1, 1]} : vector<8x128xf32> to vector<8x32xf32>
    %cst_170 = arith.constant 1.000000e+00 : f32
    %490 = vector.broadcast %cst_170 : f32 to vector<8x32xf32>
    %491 = arith.addf %490, %489 : vector<8x32xf32>
    %cst_171 = arith.constant 5.000000e-01 : f32
    %492 = vector.broadcast %cst_171 : f32 to vector<8x32xf32>
    %493 = arith.mulf %492, %491 : vector<8x32xf32>
    %494 = vector.extract_strided_slice %488 {offsets = [0, 32], sizes = [8, 32], strides = [1, 1]} : vector<8x128xf32> to vector<8x32xf32>
    %cst_172 = arith.constant 1.000000e+00 : f32
    %495 = vector.broadcast %cst_172 : f32 to vector<8x32xf32>
    %496 = arith.addf %495, %494 : vector<8x32xf32>
    %cst_173 = arith.constant 5.000000e-01 : f32
    %497 = vector.broadcast %cst_173 : f32 to vector<8x32xf32>
    %498 = arith.mulf %497, %496 : vector<8x32xf32>
    %499 = vector.extract_strided_slice %488 {offsets = [0, 64], sizes = [8, 32], strides = [1, 1]} : vector<8x128xf32> to vector<8x32xf32>
    %500 = vector.extract_strided_slice %488 {offsets = [0, 96], sizes = [8, 32], strides = [1, 1]} : vector<8x128xf32> to vector<8x32xf32>
    %cst_174 = arith.constant 1.000000e+00 : f32
    %501 = vector.broadcast %cst_174 : f32 to vector<8x32xf32>
    %502 = arith.addf %501, %500 : vector<8x32xf32>
    %cst_175 = arith.constant 5.000000e-01 : f32
    %503 = vector.broadcast %cst_175 : f32 to vector<8x32xf32>
    %504 = arith.mulf %503, %502 : vector<8x32xf32>
    %505 = arith.mulf %498, %444 : vector<8x32xf32>
    %506 = arith.mulf %493, %499 : vector<8x32xf32>
    %507 = arith.addf %505, %506 : vector<8x32xf32>
    %508 = math.tanh %507 : vector<8x32xf32>
    %509 = arith.mulf %504, %508 : vector<8x32xf32>
    %510 = arith.index_cast %453 : i32 to index
    %c0_176 = arith.constant 0 : index
    %511 = vector.load %arg18[%510, %c0_176] : memref<64x32xf32, #tpu.memory_space<vmem>>, vector<8x32xf32>
    tpu.vector_store %arg18[%510, %c0_176], %487 {strides = array<i32>} : memref<64x32xf32, #tpu.memory_space<vmem>>, vector<8x32xf32>,
    %512 = arith.index_cast %455 : i32 to index
    %c0_177 = arith.constant 0 : index
    %513 = vector.load %arg19[%512, %c0_177] : memref<64x32xf32, #tpu.memory_space<vmem>>, vector<8x32xf32>
    tpu.vector_store %arg19[%512, %c0_177], %509 {strides = array<i32>} : memref<64x32xf32, #tpu.memory_space<vmem>>, vector<8x32xf32>,
    %c8_i32_178 = arith.constant 8 : i32
    %c0_179 = arith.constant 0 : index
    %c0_180 = arith.constant 0 : index
    %514 = vector.load %arg18[%c0_179, %c0_180] : memref<64x32xf32, #tpu.memory_space<vmem>>, vector<64x32xf32>
    %515 = arith.truncf %514 : vector<64x32xf32> to vector<64x32xbf16>
    %c0_181 = arith.constant 0 : index
    %c0_182 = arith.constant 0 : index
    %516 = vector.load %arg6[%c0_181, %c0_182] : memref<32x128xbf16, #tpu.memory_space<vmem>>, vector<32x128xbf16>
    %cst_183 = arith.constant dense<0.000000e+00> : vector<64x128xf32>
    %517 = tpu.matmul %515, %516, %cst_183 {dimension_numbers = #tpu.dot_dimension_numbers<[1], [0], [0], [1], [0, 0, 1, 1], [], []>} : vector<64x32xbf16>, vector<32x128xbf16>, vector<64x128xf32> -> vector<64x128xf32>
    %c0_184 = arith.constant 0 : index
    %c0_185 = arith.constant 0 : index
    %518 = vector.load %arg19[%c0_184, %c0_185] : memref<64x32xf32, #tpu.memory_space<vmem>>, vector<64x32xf32>
    %519 = arith.truncf %518 : vector<64x32xf32> to vector<64x32xbf16>
    %c0_186 = arith.constant 0 : index
    %c0_187 = arith.constant 0 : index
    %520 = vector.load %arg7[%c0_186, %c0_187] : memref<32x128xbf16, #tpu.memory_space<vmem>>, vector<32x128xbf16>
    %cst_188 = arith.constant dense<0.000000e+00> : vector<64x128xf32>
    %521 = tpu.matmul %519, %520, %cst_188 {dimension_numbers = #tpu.dot_dimension_numbers<[1], [0], [0], [1], [0, 0, 1, 1], [], []>} : vector<64x32xbf16>, vector<32x128xbf16>, vector<64x128xf32> -> vector<64x128xf32>
    %522 = arith.addf %517, %521 : vector<64x128xf32>
    %c0_189 = arith.constant 0 : index
    %c0_190 = arith.constant 0 : index
    %523 = vector.load %arg9[%c0_189, %c0_190] : memref<1x128xf32, #tpu.memory_space<vmem>>, vector<1x128xf32>
    %524 = vector.broadcast %523 : vector<1x128xf32> to vector<64x128xf32>
    %525 = arith.addf %522, %524 : vector<64x128xf32>
    %c0_191 = arith.constant 0 : index
    %c0_192 = arith.constant 0 : index
    %526 = vector.load %arg17[%c0_191, %c0_192] : memref<64x256xf32, #tpu.memory_space<vmem>>, vector<64x128xf32>
    tpu.vector_store %arg17[%c0_191, %c0_192], %525 {strides = array<i32>} : memref<64x256xf32, #tpu.memory_space<vmem>>, vector<64x128xf32>,
    %c0_193 = arith.constant 0 : index
    %c0_194 = arith.constant 0 : index
    %527 = vector.load %arg8[%c0_193, %c0_194] : memref<32x128xbf16, #tpu.memory_space<vmem>>, vector<32x128xbf16>
    %c0_i32_195 = arith.constant 0 : i32
    %c8_i32_196 = arith.constant 8 : i32
    %528 = arith.muli %c0_i32_195, %c8_i32_196 : i32
    %529 = tpu.assume_multiple %528, 8 : i32
    %530 = arith.index_cast %529 : i32 to index
    %c0_197 = arith.constant 0 : index
    %531 = vector.load %arg17[%530, %c0_197] : memref<64x256xf32, #tpu.memory_space<vmem>>, vector<8x128xf32>
    %532 = arith.truncf %7 : vector<8x32xf32> to vector<8x32xbf16>
    %cst_198 = arith.constant dense<0.000000e+00> : vector<8x128xf32>
    %533 = tpu.matmul %532, %527, %cst_198 {dimension_numbers = #tpu.dot_dimension_numbers<[1], [0], [0], [1], [0, 0, 1, 1], [], []>} : vector<8x32xbf16>, vector<32x128xbf16>, vector<8x128xf32> -> vector<8x128xf32>
    %534 = arith.addf %531, %533 : vector<8x128xf32>
    %535 = math.tanh %534 : vector<8x128xf32>
    %536 = vector.extract_strided_slice %535 {offsets = [0, 0], sizes = [8, 32], strides = [1, 1]} : vector<8x128xf32> to vector<8x32xf32>
    %cst_199 = arith.constant 1.000000e+00 : f32
    %537 = vector.broadcast %cst_199 : f32 to vector<8x32xf32>
    %538 = arith.addf %537, %536 : vector<8x32xf32>
    %cst_200 = arith.constant 5.000000e-01 : f32
    %539 = vector.broadcast %cst_200 : f32 to vector<8x32xf32>
    %540 = arith.mulf %539, %538 : vector<8x32xf32>
    %541 = vector.extract_strided_slice %535 {offsets = [0, 32], sizes = [8, 32], strides = [1, 1]} : vector<8x128xf32> to vector<8x32xf32>
    %cst_201 = arith.constant 1.000000e+00 : f32
    %542 = vector.broadcast %cst_201 : f32 to vector<8x32xf32>
    %543 = arith.addf %542, %541 : vector<8x32xf32>
    %cst_202 = arith.constant 5.000000e-01 : f32
    %544 = vector.broadcast %cst_202 : f32 to vector<8x32xf32>
    %545 = arith.mulf %544, %543 : vector<8x32xf32>
    %546 = vector.extract_strided_slice %535 {offsets = [0, 64], sizes = [8, 32], strides = [1, 1]} : vector<8x128xf32> to vector<8x32xf32>
    %547 = vector.extract_strided_slice %535 {offsets = [0, 96], sizes = [8, 32], strides = [1, 1]} : vector<8x128xf32> to vector<8x32xf32>
    %cst_203 = arith.constant 1.000000e+00 : f32
    %548 = vector.broadcast %cst_203 : f32 to vector<8x32xf32>
    %549 = arith.addf %548, %547 : vector<8x32xf32>
    %cst_204 = arith.constant 5.000000e-01 : f32
    %550 = vector.broadcast %cst_204 : f32 to vector<8x32xf32>
    %551 = arith.mulf %550, %549 : vector<8x32xf32>
    %552 = arith.mulf %545, %7 : vector<8x32xf32>
    %553 = arith.mulf %540, %546 : vector<8x32xf32>
    %554 = arith.addf %552, %553 : vector<8x32xf32>
    %555 = math.tanh %554 : vector<8x32xf32>
    %556 = arith.mulf %551, %555 : vector<8x32xf32>
    %c1_i32_205 = arith.constant 1 : i32
    %c8_i32_206 = arith.constant 8 : i32
    %557 = arith.muli %c1_i32_205, %c8_i32_206 : i32
    %558 = tpu.assume_multiple %557, 8 : i32
    %559 = arith.index_cast %558 : i32 to index
    %c0_207 = arith.constant 0 : index
    %560 = vector.load %arg17[%559, %c0_207] : memref<64x256xf32, #tpu.memory_space<vmem>>, vector<8x128xf32>
    %561 = arith.truncf %556 : vector<8x32xf32> to vector<8x32xbf16>
    %cst_208 = arith.constant dense<0.000000e+00> : vector<8x128xf32>
    %562 = tpu.matmul %561, %527, %cst_208 {dimension_numbers = #tpu.dot_dimension_numbers<[1], [0], [0], [1], [0, 0, 1, 1], [], []>} : vector<8x32xbf16>, vector<32x128xbf16>, vector<8x128xf32> -> vector<8x128xf32>
    %563 = arith.addf %560, %562 : vector<8x128xf32>
    %564 = math.tanh %563 : vector<8x128xf32>
    %565 = vector.extract_strided_slice %564 {offsets = [0, 0], sizes = [8, 32], strides = [1, 1]} : vector<8x128xf32> to vector<8x32xf32>
    %cst_209 = arith.constant 1.000000e+00 : f32
    %566 = vector.broadcast %cst_209 : f32 to vector<8x32xf32>
    %567 = arith.addf %566, %565 : vector<8x32xf32>
    %cst_210 = arith.constant 5.000000e-01 : f32
    %568 = vector.broadcast %cst_210 : f32 to vector<8x32xf32>
    %569 = arith.mulf %568, %567 : vector<8x32xf32>
    %570 = vector.extract_strided_slice %564 {offsets = [0, 32], sizes = [8, 32], strides = [1, 1]} : vector<8x128xf32> to vector<8x32xf32>
    %cst_211 = arith.constant 1.000000e+00 : f32
    %571 = vector.broadcast %cst_211 : f32 to vector<8x32xf32>
    %572 = arith.addf %571, %570 : vector<8x32xf32>
    %cst_212 = arith.constant 5.000000e-01 : f32
    %573 = vector.broadcast %cst_212 : f32 to vector<8x32xf32>
    %574 = arith.mulf %573, %572 : vector<8x32xf32>
    %575 = vector.extract_strided_slice %564 {offsets = [0, 64], sizes = [8, 32], strides = [1, 1]} : vector<8x128xf32> to vector<8x32xf32>
    %576 = vector.extract_strided_slice %564 {offsets = [0, 96], sizes = [8, 32], strides = [1, 1]} : vector<8x128xf32> to vector<8x32xf32>
    %cst_213 = arith.constant 1.000000e+00 : f32
    %577 = vector.broadcast %cst_213 : f32 to vector<8x32xf32>
    %578 = arith.addf %577, %576 : vector<8x32xf32>
    %cst_214 = arith.constant 5.000000e-01 : f32
    %579 = vector.broadcast %cst_214 : f32 to vector<8x32xf32>
    %580 = arith.mulf %579, %578 : vector<8x32xf32>
    %581 = arith.mulf %574, %554 : vector<8x32xf32>
    %582 = arith.mulf %569, %575 : vector<8x32xf32>
    %583 = arith.addf %581, %582 : vector<8x32xf32>
    %584 = math.tanh %583 : vector<8x32xf32>
    %585 = arith.mulf %580, %584 : vector<8x32xf32>
    %c2_i32_215 = arith.constant 2 : i32
    %c8_i32_216 = arith.constant 8 : i32
    %586 = arith.muli %c2_i32_215, %c8_i32_216 : i32
    %587 = tpu.assume_multiple %586, 8 : i32
    %588 = arith.index_cast %587 : i32 to index
    %c0_217 = arith.constant 0 : index
    %589 = vector.load %arg17[%588, %c0_217] : memref<64x256xf32, #tpu.memory_space<vmem>>, vector<8x128xf32>
    %590 = arith.truncf %585 : vector<8x32xf32> to vector<8x32xbf16>
    %cst_218 = arith.constant dense<0.000000e+00> : vector<8x128xf32>
    %591 = tpu.matmul %590, %527, %cst_218 {dimension_numbers = #tpu.dot_dimension_numbers<[1], [0], [0], [1], [0, 0, 1, 1], [], []>} : vector<8x32xbf16>, vector<32x128xbf16>, vector<8x128xf32> -> vector<8x128xf32>
    %592 = arith.addf %589, %591 : vector<8x128xf32>
    %593 = math.tanh %592 : vector<8x128xf32>
    %594 = vector.extract_strided_slice %593 {offsets = [0, 0], sizes = [8, 32], strides = [1, 1]} : vector<8x128xf32> to vector<8x32xf32>
    %cst_219 = arith.constant 1.000000e+00 : f32
    %595 = vector.broadcast %cst_219 : f32 to vector<8x32xf32>
    %596 = arith.addf %595, %594 : vector<8x32xf32>
    %cst_220 = arith.constant 5.000000e-01 : f32
    %597 = vector.broadcast %cst_220 : f32 to vector<8x32xf32>
    %598 = arith.mulf %597, %596 : vector<8x32xf32>
    %599 = vector.extract_strided_slice %593 {offsets = [0, 32], sizes = [8, 32], strides = [1, 1]} : vector<8x128xf32> to vector<8x32xf32>
    %cst_221 = arith.constant 1.000000e+00 : f32
    %600 = vector.broadcast %cst_221 : f32 to vector<8x32xf32>
    %601 = arith.addf %600, %599 : vector<8x32xf32>
    %cst_222 = arith.constant 5.000000e-01 : f32
    %602 = vector.broadcast %cst_222 : f32 to vector<8x32xf32>
    %603 = arith.mulf %602, %601 : vector<8x32xf32>
    %604 = vector.extract_strided_slice %593 {offsets = [0, 64], sizes = [8, 32], strides = [1, 1]} : vector<8x128xf32> to vector<8x32xf32>
    %605 = vector.extract_strided_slice %593 {offsets = [0, 96], sizes = [8, 32], strides = [1, 1]} : vector<8x128xf32> to vector<8x32xf32>
    %cst_223 = arith.constant 1.000000e+00 : f32
    %606 = vector.broadcast %cst_223 : f32 to vector<8x32xf32>
    %607 = arith.addf %606, %605 : vector<8x32xf32>
    %cst_224 = arith.constant 5.000000e-01 : f32
    %608 = vector.broadcast %cst_224 : f32 to vector<8x32xf32>
    %609 = arith.mulf %608, %607 : vector<8x32xf32>
    %610 = arith.mulf %603, %583 : vector<8x32xf32>
    %611 = arith.mulf %598, %604 : vector<8x32xf32>
    %612 = arith.addf %610, %611 : vector<8x32xf32>
    %613 = math.tanh %612 : vector<8x32xf32>
    %614 = arith.mulf %609, %613 : vector<8x32xf32>
    %c3_i32_225 = arith.constant 3 : i32
    %c8_i32_226 = arith.constant 8 : i32
    %615 = arith.muli %c3_i32_225, %c8_i32_226 : i32
    %616 = tpu.assume_multiple %615, 8 : i32
    %617 = arith.index_cast %616 : i32 to index
    %c0_227 = arith.constant 0 : index
    %618 = vector.load %arg17[%617, %c0_227] : memref<64x256xf32, #tpu.memory_space<vmem>>, vector<8x128xf32>
    %619 = arith.truncf %614 : vector<8x32xf32> to vector<8x32xbf16>
    %cst_228 = arith.constant dense<0.000000e+00> : vector<8x128xf32>
    %620 = tpu.matmul %619, %527, %cst_228 {dimension_numbers = #tpu.dot_dimension_numbers<[1], [0], [0], [1], [0, 0, 1, 1], [], []>} : vector<8x32xbf16>, vector<32x128xbf16>, vector<8x128xf32> -> vector<8x128xf32>
    %621 = arith.addf %618, %620 : vector<8x128xf32>
    %622 = math.tanh %621 : vector<8x128xf32>
    %623 = vector.extract_strided_slice %622 {offsets = [0, 0], sizes = [8, 32], strides = [1, 1]} : vector<8x128xf32> to vector<8x32xf32>
    %cst_229 = arith.constant 1.000000e+00 : f32
    %624 = vector.broadcast %cst_229 : f32 to vector<8x32xf32>
    %625 = arith.addf %624, %623 : vector<8x32xf32>
    %cst_230 = arith.constant 5.000000e-01 : f32
    %626 = vector.broadcast %cst_230 : f32 to vector<8x32xf32>
    %627 = arith.mulf %626, %625 : vector<8x32xf32>
    %628 = vector.extract_strided_slice %622 {offsets = [0, 32], sizes = [8, 32], strides = [1, 1]} : vector<8x128xf32> to vector<8x32xf32>
    %cst_231 = arith.constant 1.000000e+00 : f32
    %629 = vector.broadcast %cst_231 : f32 to vector<8x32xf32>
    %630 = arith.addf %629, %628 : vector<8x32xf32>
    %cst_232 = arith.constant 5.000000e-01 : f32
    %631 = vector.broadcast %cst_232 : f32 to vector<8x32xf32>
    %632 = arith.mulf %631, %630 : vector<8x32xf32>
    %633 = vector.extract_strided_slice %622 {offsets = [0, 64], sizes = [8, 32], strides = [1, 1]} : vector<8x128xf32> to vector<8x32xf32>
    %634 = vector.extract_strided_slice %622 {offsets = [0, 96], sizes = [8, 32], strides = [1, 1]} : vector<8x128xf32> to vector<8x32xf32>
    %cst_233 = arith.constant 1.000000e+00 : f32
    %635 = vector.broadcast %cst_233 : f32 to vector<8x32xf32>
    %636 = arith.addf %635, %634 : vector<8x32xf32>
    %cst_234 = arith.constant 5.000000e-01 : f32
    %637 = vector.broadcast %cst_234 : f32 to vector<8x32xf32>
    %638 = arith.mulf %637, %636 : vector<8x32xf32>
    %639 = arith.mulf %632, %612 : vector<8x32xf32>
    %640 = arith.mulf %627, %633 : vector<8x32xf32>
    %641 = arith.addf %639, %640 : vector<8x32xf32>
    %642 = math.tanh %641 : vector<8x32xf32>
    %643 = arith.mulf %638, %642 : vector<8x32xf32>
    %c4_i32_235 = arith.constant 4 : i32
    %c8_i32_236 = arith.constant 8 : i32
    %644 = arith.muli %c4_i32_235, %c8_i32_236 : i32
    %645 = tpu.assume_multiple %644, 8 : i32
    %646 = arith.index_cast %645 : i32 to index
    %c0_237 = arith.constant 0 : index
    %647 = vector.load %arg17[%646, %c0_237] : memref<64x256xf32, #tpu.memory_space<vmem>>, vector<8x128xf32>
    %648 = arith.truncf %643 : vector<8x32xf32> to vector<8x32xbf16>
    %cst_238 = arith.constant dense<0.000000e+00> : vector<8x128xf32>
    %649 = tpu.matmul %648, %527, %cst_238 {dimension_numbers = #tpu.dot_dimension_numbers<[1], [0], [0], [1], [0, 0, 1, 1], [], []>} : vector<8x32xbf16>, vector<32x128xbf16>, vector<8x128xf32> -> vector<8x128xf32>
    %650 = arith.addf %647, %649 : vector<8x128xf32>
    %651 = math.tanh %650 : vector<8x128xf32>
    %652 = vector.extract_strided_slice %651 {offsets = [0, 0], sizes = [8, 32], strides = [1, 1]} : vector<8x128xf32> to vector<8x32xf32>
    %cst_239 = arith.constant 1.000000e+00 : f32
    %653 = vector.broadcast %cst_239 : f32 to vector<8x32xf32>
    %654 = arith.addf %653, %652 : vector<8x32xf32>
    %cst_240 = arith.constant 5.000000e-01 : f32
    %655 = vector.broadcast %cst_240 : f32 to vector<8x32xf32>
    %656 = arith.mulf %655, %654 : vector<8x32xf32>
    %657 = vector.extract_strided_slice %651 {offsets = [0, 32], sizes = [8, 32], strides = [1, 1]} : vector<8x128xf32> to vector<8x32xf32>
    %cst_241 = arith.constant 1.000000e+00 : f32
    %658 = vector.broadcast %cst_241 : f32 to vector<8x32xf32>
    %659 = arith.addf %658, %657 : vector<8x32xf32>
    %cst_242 = arith.constant 5.000000e-01 : f32
    %660 = vector.broadcast %cst_242 : f32 to vector<8x32xf32>
    %661 = arith.mulf %660, %659 : vector<8x32xf32>
    %662 = vector.extract_strided_slice %651 {offsets = [0, 64], sizes = [8, 32], strides = [1, 1]} : vector<8x128xf32> to vector<8x32xf32>
    %663 = vector.extract_strided_slice %651 {offsets = [0, 96], sizes = [8, 32], strides = [1, 1]} : vector<8x128xf32> to vector<8x32xf32>
    %cst_243 = arith.constant 1.000000e+00 : f32
    %664 = vector.broadcast %cst_243 : f32 to vector<8x32xf32>
    %665 = arith.addf %664, %663 : vector<8x32xf32>
    %cst_244 = arith.constant 5.000000e-01 : f32
    %666 = vector.broadcast %cst_244 : f32 to vector<8x32xf32>
    %667 = arith.mulf %666, %665 : vector<8x32xf32>
    %668 = arith.mulf %661, %641 : vector<8x32xf32>
    %669 = arith.mulf %656, %662 : vector<8x32xf32>
    %670 = arith.addf %668, %669 : vector<8x32xf32>
    %671 = math.tanh %670 : vector<8x32xf32>
    %672 = arith.mulf %667, %671 : vector<8x32xf32>
    %c5_i32_245 = arith.constant 5 : i32
    %c8_i32_246 = arith.constant 8 : i32
    %673 = arith.muli %c5_i32_245, %c8_i32_246 : i32
    %674 = tpu.assume_multiple %673, 8 : i32
    %675 = arith.index_cast %674 : i32 to index
    %c0_247 = arith.constant 0 : index
    %676 = vector.load %arg17[%675, %c0_247] : memref<64x256xf32, #tpu.memory_space<vmem>>, vector<8x128xf32>
    %677 = arith.truncf %672 : vector<8x32xf32> to vector<8x32xbf16>
    %cst_248 = arith.constant dense<0.000000e+00> : vector<8x128xf32>
    %678 = tpu.matmul %677, %527, %cst_248 {dimension_numbers = #tpu.dot_dimension_numbers<[1], [0], [0], [1], [0, 0, 1, 1], [], []>} : vector<8x32xbf16>, vector<32x128xbf16>, vector<8x128xf32> -> vector<8x128xf32>
    %679 = arith.addf %676, %678 : vector<8x128xf32>
    %680 = math.tanh %679 : vector<8x128xf32>
    %681 = vector.extract_strided_slice %680 {offsets = [0, 0], sizes = [8, 32], strides = [1, 1]} : vector<8x128xf32> to vector<8x32xf32>
    %cst_249 = arith.constant 1.000000e+00 : f32
    %682 = vector.broadcast %cst_249 : f32 to vector<8x32xf32>
    %683 = arith.addf %682, %681 : vector<8x32xf32>
    %cst_250 = arith.constant 5.000000e-01 : f32
    %684 = vector.broadcast %cst_250 : f32 to vector<8x32xf32>
    %685 = arith.mulf %684, %683 : vector<8x32xf32>
    %686 = vector.extract_strided_slice %680 {offsets = [0, 32], sizes = [8, 32], strides = [1, 1]} : vector<8x128xf32> to vector<8x32xf32>
    %cst_251 = arith.constant 1.000000e+00 : f32
    %687 = vector.broadcast %cst_251 : f32 to vector<8x32xf32>
    %688 = arith.addf %687, %686 : vector<8x32xf32>
    %cst_252 = arith.constant 5.000000e-01 : f32
    %689 = vector.broadcast %cst_252 : f32 to vector<8x32xf32>
    %690 = arith.mulf %689, %688 : vector<8x32xf32>
    %691 = vector.extract_strided_slice %680 {offsets = [0, 64], sizes = [8, 32], strides = [1, 1]} : vector<8x128xf32> to vector<8x32xf32>
    %692 = vector.extract_strided_slice %680 {offsets = [0, 96], sizes = [8, 32], strides = [1, 1]} : vector<8x128xf32> to vector<8x32xf32>
    %cst_253 = arith.constant 1.000000e+00 : f32
    %693 = vector.broadcast %cst_253 : f32 to vector<8x32xf32>
    %694 = arith.addf %693, %692 : vector<8x32xf32>
    %cst_254 = arith.constant 5.000000e-01 : f32
    %695 = vector.broadcast %cst_254 : f32 to vector<8x32xf32>
    %696 = arith.mulf %695, %694 : vector<8x32xf32>
    %697 = arith.mulf %690, %670 : vector<8x32xf32>
    %698 = arith.mulf %685, %691 : vector<8x32xf32>
    %699 = arith.addf %697, %698 : vector<8x32xf32>
    %700 = math.tanh %699 : vector<8x32xf32>
    %701 = arith.mulf %696, %700 : vector<8x32xf32>
    %c6_i32_255 = arith.constant 6 : i32
    %c8_i32_256 = arith.constant 8 : i32
    %702 = arith.muli %c6_i32_255, %c8_i32_256 : i32
    %703 = tpu.assume_multiple %702, 8 : i32
    %704 = arith.index_cast %703 : i32 to index
    %c0_257 = arith.constant 0 : index
    %705 = vector.load %arg17[%704, %c0_257] : memref<64x256xf32, #tpu.memory_space<vmem>>, vector<8x128xf32>
    %706 = arith.truncf %701 : vector<8x32xf32> to vector<8x32xbf16>
    %cst_258 = arith.constant dense<0.000000e+00> : vector<8x128xf32>
    %707 = tpu.matmul %706, %527, %cst_258 {dimension_numbers = #tpu.dot_dimension_numbers<[1], [0], [0], [1], [0, 0, 1, 1], [], []>} : vector<8x32xbf16>, vector<32x128xbf16>, vector<8x128xf32> -> vector<8x128xf32>
    %708 = arith.addf %705, %707 : vector<8x128xf32>
    %709 = math.tanh %708 : vector<8x128xf32>
    %710 = vector.extract_strided_slice %709 {offsets = [0, 0], sizes = [8, 32], strides = [1, 1]} : vector<8x128xf32> to vector<8x32xf32>
    %cst_259 = arith.constant 1.000000e+00 : f32
    %711 = vector.broadcast %cst_259 : f32 to vector<8x32xf32>
    %712 = arith.addf %711, %710 : vector<8x32xf32>
    %cst_260 = arith.constant 5.000000e-01 : f32
    %713 = vector.broadcast %cst_260 : f32 to vector<8x32xf32>
    %714 = arith.mulf %713, %712 : vector<8x32xf32>
    %715 = vector.extract_strided_slice %709 {offsets = [0, 32], sizes = [8, 32], strides = [1, 1]} : vector<8x128xf32> to vector<8x32xf32>
    %cst_261 = arith.constant 1.000000e+00 : f32
    %716 = vector.broadcast %cst_261 : f32 to vector<8x32xf32>
    %717 = arith.addf %716, %715 : vector<8x32xf32>
    %cst_262 = arith.constant 5.000000e-01 : f32
    %718 = vector.broadcast %cst_262 : f32 to vector<8x32xf32>
    %719 = arith.mulf %718, %717 : vector<8x32xf32>
    %720 = vector.extract_strided_slice %709 {offsets = [0, 64], sizes = [8, 32], strides = [1, 1]} : vector<8x128xf32> to vector<8x32xf32>
    %721 = vector.extract_strided_slice %709 {offsets = [0, 96], sizes = [8, 32], strides = [1, 1]} : vector<8x128xf32> to vector<8x32xf32>
    %cst_263 = arith.constant 1.000000e+00 : f32
    %722 = vector.broadcast %cst_263 : f32 to vector<8x32xf32>
    %723 = arith.addf %722, %721 : vector<8x32xf32>
    %cst_264 = arith.constant 5.000000e-01 : f32
    %724 = vector.broadcast %cst_264 : f32 to vector<8x32xf32>
    %725 = arith.mulf %724, %723 : vector<8x32xf32>
    %726 = arith.mulf %719, %699 : vector<8x32xf32>
    %727 = arith.mulf %714, %720 : vector<8x32xf32>
    %728 = arith.addf %726, %727 : vector<8x32xf32>
    %729 = math.tanh %728 : vector<8x32xf32>
    %730 = arith.mulf %725, %729 : vector<8x32xf32>
    %c7_i32_265 = arith.constant 7 : i32
    %c8_i32_266 = arith.constant 8 : i32
    %731 = arith.muli %c7_i32_265, %c8_i32_266 : i32
    %732 = tpu.assume_multiple %731, 8 : i32
    %733 = arith.index_cast %732 : i32 to index
    %c0_267 = arith.constant 0 : index
    %734 = vector.load %arg17[%733, %c0_267] : memref<64x256xf32, #tpu.memory_space<vmem>>, vector<8x128xf32>
    %735 = arith.truncf %730 : vector<8x32xf32> to vector<8x32xbf16>
    %cst_268 = arith.constant dense<0.000000e+00> : vector<8x128xf32>
    %736 = tpu.matmul %735, %527, %cst_268 {dimension_numbers = #tpu.dot_dimension_numbers<[1], [0], [0], [1], [0, 0, 1, 1], [], []>} : vector<8x32xbf16>, vector<32x128xbf16>, vector<8x128xf32> -> vector<8x128xf32>
    %737 = arith.addf %734, %736 : vector<8x128xf32>
    %738 = math.tanh %737 : vector<8x128xf32>
    %739 = vector.extract_strided_slice %738 {offsets = [0, 0], sizes = [8, 32], strides = [1, 1]} : vector<8x128xf32> to vector<8x32xf32>
    %cst_269 = arith.constant 1.000000e+00 : f32
    %740 = vector.broadcast %cst_269 : f32 to vector<8x32xf32>
    %741 = arith.addf %740, %739 : vector<8x32xf32>
    %cst_270 = arith.constant 5.000000e-01 : f32
    %742 = vector.broadcast %cst_270 : f32 to vector<8x32xf32>
    %743 = arith.mulf %742, %741 : vector<8x32xf32>
    %744 = vector.extract_strided_slice %738 {offsets = [0, 32], sizes = [8, 32], strides = [1, 1]} : vector<8x128xf32> to vector<8x32xf32>
    %cst_271 = arith.constant 1.000000e+00 : f32
    %745 = vector.broadcast %cst_271 : f32 to vector<8x32xf32>
    %746 = arith.addf %745, %744 : vector<8x32xf32>
    %cst_272 = arith.constant 5.000000e-01 : f32
    %747 = vector.broadcast %cst_272 : f32 to vector<8x32xf32>
    %748 = arith.mulf %747, %746 : vector<8x32xf32>
    %749 = vector.extract_strided_slice %738 {offsets = [0, 64], sizes = [8, 32], strides = [1, 1]} : vector<8x128xf32> to vector<8x32xf32>
    %750 = vector.extract_strided_slice %738 {offsets = [0, 96], sizes = [8, 32], strides = [1, 1]} : vector<8x128xf32> to vector<8x32xf32>
    %cst_273 = arith.constant 1.000000e+00 : f32
    %751 = vector.broadcast %cst_273 : f32 to vector<8x32xf32>
    %752 = arith.addf %751, %750 : vector<8x32xf32>
    %cst_274 = arith.constant 5.000000e-01 : f32
    %753 = vector.broadcast %cst_274 : f32 to vector<8x32xf32>
    %754 = arith.mulf %753, %752 : vector<8x32xf32>
    %755 = arith.mulf %748, %728 : vector<8x32xf32>
    %756 = arith.mulf %743, %749 : vector<8x32xf32>
    %757 = arith.addf %755, %756 : vector<8x32xf32>
    %758 = math.tanh %757 : vector<8x32xf32>
    %759 = arith.mulf %754, %758 : vector<8x32xf32>
    %c8_i32_275 = arith.constant 8 : i32
    %cst_276 = arith.constant dense<0.000000e+00> : vector<8xf32>
    %760 = vector.multi_reduction <add>, %759, %cst_276 [1] : vector<8x32xf32> to vector<8xf32>
    %761 = vector.shape_cast %760 : vector<8xf32> to vector<8x1xf32>
    %cst_277 = arith.constant 3.200000e+01 : f32
    %762 = vector.broadcast %cst_277 : f32 to vector<8x1xf32>
    %763 = arith.divf %761, %762 : vector<8x1xf32>
    %764 = vector.broadcast %763 : vector<8x1xf32> to vector<8x32xf32>
    %765 = arith.subf %759, %764 : vector<8x32xf32>
    %766 = arith.mulf %765, %765 : vector<8x32xf32>
    %cst_278 = arith.constant dense<0.000000e+00> : vector<8xf32>
    %767 = vector.multi_reduction <add>, %766, %cst_278 [1] : vector<8x32xf32> to vector<8xf32>
    %768 = vector.shape_cast %767 : vector<8xf32> to vector<8x1xf32>
    %cst_279 = arith.constant 3.200000e+01 : f32
    %769 = vector.broadcast %cst_279 : f32 to vector<8x1xf32>
    %770 = arith.divf %768, %769 : vector<8x1xf32>
    %771 = vector.broadcast %763 : vector<8x1xf32> to vector<8x32xf32>
    %772 = arith.subf %759, %771 : vector<8x32xf32>
    %cst_280 = arith.constant 9.99999974E-6 : f32
    %773 = vector.broadcast %cst_280 : f32 to vector<8x1xf32>
    %774 = arith.addf %770, %773 : vector<8x1xf32>
    %775 = math.rsqrt %774 : vector<8x1xf32>
    %776 = vector.broadcast %775 : vector<8x1xf32> to vector<8x32xf32>
    %777 = arith.mulf %772, %776 : vector<8x32xf32>
    %c0_281 = arith.constant 0 : index
    %c0_282 = arith.constant 0 : index
    %778 = vector.load %arg10[%c0_281, %c0_282] : memref<1x32xf32, #tpu.memory_space<vmem>>, vector<1x32xf32>
    %779 = vector.broadcast %778 : vector<1x32xf32> to vector<8x32xf32>
    %780 = arith.mulf %777, %779 : vector<8x32xf32>
    %c0_283 = arith.constant 0 : index
    %c0_284 = arith.constant 0 : index
    %781 = vector.load %arg11[%c0_283, %c0_284] : memref<1x32xf32, #tpu.memory_space<vmem>>, vector<1x32xf32>
    %782 = vector.broadcast %781 : vector<1x32xf32> to vector<8x32xf32>
    %783 = arith.addf %780, %782 : vector<8x32xf32>
    %c0_285 = arith.constant 0 : index
    %c0_286 = arith.constant 0 : index
    %784 = vector.load %arg12[%c0_285, %c0_286] : memref<32x128xf32, #tpu.memory_space<vmem>>, vector<32x128xf32>
    %cst_287 = arith.constant dense<0.000000e+00> : vector<8x128xf32>
    %785 = tpu.matmul %783, %784, %cst_287 {dimension_numbers = #tpu.dot_dimension_numbers<[1], [0], [0], [1], [0, 0, 1, 1], [], []>} : vector<8x32xf32>, vector<32x128xf32>, vector<8x128xf32> -> vector<8x128xf32>
    %c0_288 = arith.constant 0 : index
    %c0_289 = arith.constant 0 : index
    %786 = vector.load %arg13[%c0_288, %c0_289] : memref<1x128xf32, #tpu.memory_space<vmem>>, vector<1x128xf32>
    %787 = vector.broadcast %786 : vector<1x128xf32> to vector<8x128xf32>
    %788 = arith.addf %785, %787 : vector<8x128xf32>
    %cst_290 = arith.constant 0.000000e+00 : f32
    %789 = vector.broadcast %cst_290 : f32 to vector<8x128xf32>
    %790 = arith.maximumf %788, %789 : vector<8x128xf32>
    %c0_291 = arith.constant 0 : index
    %c0_292 = arith.constant 0 : index
    %791 = vector.load %arg14[%c0_291, %c0_292] : memref<128x128xf32, #tpu.memory_space<vmem>>, vector<128x128xf32>
    %cst_293 = arith.constant dense<0.000000e+00> : vector<8x128xf32>
    %792 = tpu.matmul %790, %791, %cst_293 {dimension_numbers = #tpu.dot_dimension_numbers<[1], [0], [0], [1], [0, 0, 1, 1], [], []>} : vector<8x128xf32>, vector<128x128xf32>, vector<8x128xf32> -> vector<8x128xf32>
    %c0_294 = arith.constant 0 : index
    %c0_295 = arith.constant 0 : index
    %793 = vector.load %arg15[%c0_294, %c0_295] : memref<1x128xf32, #tpu.memory_space<vmem>>, vector<1x128xf32>
    %794 = vector.broadcast %793 : vector<1x128xf32> to vector<8x128xf32>
    %795 = arith.addf %792, %794 : vector<8x128xf32>
    %c0_296 = arith.constant 0 : index
    %c0_297 = arith.constant 0 : index
    %796 = vector.load %arg16[%c0_296, %c0_297] : memref<8x128xf32, #tpu.memory_space<vmem>>, vector<8x128xf32>
    tpu.vector_store %arg16[%c0_296, %c0_297], %795 {strides = array<i32>} : memref<8x128xf32, #tpu.memory_space<vmem>>, vector<8x128xf32>,
    return
  }
  func.func @transform_0(%arg0: i32) -> (i32, i32) {
    %c0_i32 = arith.constant 0 : i32
    %c0_i32_0 = arith.constant 0 : i32
    return %arg0, %c0_i32 : i32, i32
  }
  func.func @transform_1(%arg0: i32) -> (i32, i32) {
    %c0_i32 = arith.constant 0 : i32
    %c0_i32_0 = arith.constant 0 : i32
    %c0_i32_1 = arith.constant 0 : i32
    return %c0_i32, %c0_i32_0 : i32, i32
  }
  func.func @transform_2(%arg0: i32) -> (i32, i32) {
    %c0_i32 = arith.constant 0 : i32
    %c0_i32_0 = arith.constant 0 : i32
    %c0_i32_1 = arith.constant 0 : i32
    return %c0_i32, %c0_i32_0 : i32, i32
  }
  func.func @transform_3(%arg0: i32) -> (i32, i32) {
    %c0_i32 = arith.constant 0 : i32
    %c0_i32_0 = arith.constant 0 : i32
    %c0_i32_1 = arith.constant 0 : i32
    return %c0_i32, %c0_i32_0 : i32, i32
  }
  func.func @transform_4(%arg0: i32) -> (i32, i32) {
    %c0_i32 = arith.constant 0 : i32
    %c0_i32_0 = arith.constant 0 : i32
    %c0_i32_1 = arith.constant 0 : i32
    return %c0_i32, %c0_i32_0 : i32, i32
  }
  func.func @transform_5(%arg0: i32) -> (i32, i32) {
    %c0_i32 = arith.constant 0 : i32
    %c0_i32_0 = arith.constant 0 : i32
    %c0_i32_1 = arith.constant 0 : i32
    return %c0_i32, %c0_i32_0 : i32, i32
  }
  func.func @transform_6(%arg0: i32) -> (i32, i32) {
    %c0_i32 = arith.constant 0 : i32
    %c0_i32_0 = arith.constant 0 : i32
    %c0_i32_1 = arith.constant 0 : i32
    return %c0_i32, %c0_i32_0 : i32, i32
  }
  func.func @transform_7(%arg0: i32) -> (i32, i32) {
    %c0_i32 = arith.constant 0 : i32
    %c0_i32_0 = arith.constant 0 : i32
    %c0_i32_1 = arith.constant 0 : i32
    return %c0_i32, %c0_i32_0 : i32, i32
  }
  func.func @transform_8(%arg0: i32) -> (i32, i32) {
    %c0_i32 = arith.constant 0 : i32
    %c0_i32_0 = arith.constant 0 : i32
    %c0_i32_1 = arith.constant 0 : i32
    return %c0_i32, %c0_i32_0 : i32, i32
  }
  func.func @transform_9(%arg0: i32) -> (i32, i32) {
    %c0_i32 = arith.constant 0 : i32
    %c0_i32_0 = arith.constant 0 : i32
    %c0_i32_1 = arith.constant 0 : i32
    return %c0_i32, %c0_i32_0 : i32, i32
  }
  func.func @transform_10(%arg0: i32) -> (i32, i32) {
    %c0_i32 = arith.constant 0 : i32
    %c0_i32_0 = arith.constant 0 : i32
    %c0_i32_1 = arith.constant 0 : i32
    return %c0_i32, %c0_i32_0 : i32, i32
  }
  func.func @transform_11(%arg0: i32) -> (i32, i32) {
    %c0_i32 = arith.constant 0 : i32
    %c0_i32_0 = arith.constant 0 : i32
    %c0_i32_1 = arith.constant 0 : i32
    return %c0_i32, %c0_i32_0 : i32, i32
  }
  func.func @transform_12(%arg0: i32) -> (i32, i32) {
    %c0_i32 = arith.constant 0 : i32
    %c0_i32_0 = arith.constant 0 : i32
    %c0_i32_1 = arith.constant 0 : i32
    return %c0_i32, %c0_i32_0 : i32, i32
  }
  func.func @transform_13(%arg0: i32) -> (i32, i32) {
    %c0_i32 = arith.constant 0 : i32
    %c0_i32_0 = arith.constant 0 : i32
    %c0_i32_1 = arith.constant 0 : i32
    return %c0_i32, %c0_i32_0 : i32, i32
  }
  func.func @transform_14(%arg0: i32) -> (i32, i32) {
    %c0_i32 = arith.constant 0 : i32
    %c0_i32_0 = arith.constant 0 : i32
    %c0_i32_1 = arith.constant 0 : i32
    return %c0_i32, %c0_i32_0 : i32, i32
  }
  func.func @transform_15(%arg0: i32) -> (i32, i32) {
    %c0_i32 = arith.constant 0 : i32
    %c0_i32_0 = arith.constant 0 : i32
    return %arg0, %c0_i32 : i32, i32
  }
}

</mosaic_0001>

<llo_original>
// kernel: lstm_model_forward.1
$region0: #{lstm_model_forward.1}
  #allocation0 [shape = 'u32[]', space=smem, size = 0x4, offset = 0x4, fixed_abs, tag = 'smem constant byte address 0x4 - core index']
  #allocation1 [shape = 'u32[144,128]{1,0:T(1,128)}', space=vmem, size = 0x12000, scoped, tag = 'internal scratch']
  #allocation2 [shape = 'f32[64,256]{1,0:T(8,128)}', space=vmem, size = 0x10000, scoped, tag = 'scratch operand']
  #allocation3 [shape = 'f32[64,32]{1,0:T(8,128)}', space=vmem, size = 0x8000, scoped, tag = 'scratch operand']
  #allocation4 [shape = 'f32[64,32]{1,0:T(8,128)}', space=vmem, size = 0x8000, scoped, tag = 'scratch operand']
  %s0 = inlined_call_operand.vmem [shape: bf16[64,128], index: 0, kind: input, shape index: {}]
  %s1 = inlined_call_operand.hbm [shape: bf16[128,256], index: 1, kind: input, shape index: {}]
  %s2 = inlined_call_operand.vmem [shape: f32[1,256], index: 2, kind: input, shape index: {}]
  %s3 = inlined_call_operand.hbm [shape: bf16[32,128], index: 3, kind: input, shape index: {}]
  %s4 = inlined_call_operand.hbm [shape: bf16[32,128], index: 4, kind: input, shape index: {}]
  %s5 = inlined_call_operand.hbm [shape: bf16[32,128], index: 5, kind: input, shape index: {}]
  %s6 = inlined_call_operand.hbm [shape: bf16[32,128], index: 6, kind: input, shape index: {}]
  %s7 = inlined_call_operand.hbm [shape: bf16[32,128], index: 7, kind: input, shape index: {}]
  %s8 = inlined_call_operand.vmem [shape: f32[1,128], index: 8, kind: input, shape index: {}]
  %s9 = inlined_call_operand.vmem [shape: f32[1,32], index: 9, kind: input, shape index: {}]
  %s10 = inlined_call_operand.vmem [shape: f32[1,32], index: 10, kind: input, shape index: {}]
  %s11 = inlined_call_operand.hbm [shape: f32[32,128], index: 11, kind: input, shape index: {}]
  %s12 = inlined_call_operand.hbm [shape: f32[1,128], index: 12, kind: input, shape index: {}]
  %s13 = inlined_call_operand.vmem [shape: f32[128,128], index: 13, kind: input, shape index: {}]
  %s14 = inlined_call_operand.hbm [shape: f32[1,128], index: 14, kind: input, shape index: {}]
  %s15 = inlined_call_operand.vmem [shape: f32[8,128], index: 15, kind: output, shape index: {}]
  %s16 = sld [smem:[#allocation0]]
  $region106: #{lstm_model_forward.1} parent=0
    _
  %s18 = ssub.s32 1, %s16
  %s19 = scalar_select 0, %s18, %s16
  $region1: #{lstm_model_forward.1} parent=0
    #allocation5 [shape = 'u8[65536]{0}', space=vmem, size = 0x10000, scoped, tag = 'input window, operand 1, single buffered']
    #allocation6 [shape = 's32[1]{0}', space=sflag, size = 0x4, scoped, tag = 'scoped memory for lstm_model_forward.1']
    #allocation7 [shape = 'u8[8192]{0}', space=vmem, size = 0x2000, scoped, tag = 'input window, operand 3, single buffered']
    #allocation8 [shape = 's32[1]{0}', space=sflag, size = 0x4, scoped, tag = 'scoped memory for lstm_model_forward.1']
    #allocation9 [shape = 'u8[8192]{0}', space=vmem, size = 0x2000, scoped, tag = 'input window, operand 4, single buffered']
    #allocation10 [shape = 'u8[8192]{0}', space=vmem, size = 0x2000, scoped, tag = 'input window, operand 5, single buffered']
    #allocation11 [shape = 's32[1]{0}', space=sflag, size = 0x4, scoped, tag = 'scoped memory for lstm_model_forward.1']
    #allocation12 [shape = 'u8[8192]{0}', space=vmem, size = 0x2000, scoped, tag = 'input window, operand 6, single buffered']
    #allocation13 [shape = 'u8[8192]{0}', space=vmem, size = 0x2000, scoped, tag = 'input window, operand 7, single buffered']
    #allocation14 [shape = 's32[1]{0}', space=sflag, size = 0x4, scoped, tag = 'scoped memory for lstm_model_forward.1']
    #allocation15 [shape = 'u8[16384]{0}', space=vmem, size = 0x4000, scoped, tag = 'input window, operand 11, single buffered']
    #allocation16 [shape = 'u8[512]{0}', space=vmem, size = 0x400, scoped, tag = 'input window, operand 12, single buffered']
    #allocation17 [shape = 's32[1]{0}', space=sflag, size = 0x4, scoped, tag = 'scoped memory for lstm_model_forward.1']
    #allocation18 [shape = 'u8[512]{0}', space=vmem, size = 0x400, scoped, tag = 'input window, operand 14, single buffered']
    %20 = vsyncpa [#allocation6], 0
    %21 = vsyncpa [#allocation8], 0
    %22 = vsyncpa [#allocation11], 0
    %23 = vsyncpa [#allocation14], 0
    %24 = vsyncpa [#allocation17], 0
    // Predicated region
    $region2: #{lstm_model_forward.1} parent=1 // pred_check
      _
    $region3: #{lstm_model_forward.1} parent=1 // pred_check_branch
      %26 = sbr.rel (0) target = $region5
    $region4: #{lstm_model_forward.1} parent=1 // pred_region
      _
    $region5: #{lstm_model_forward.1} parent=1 // pred_fallthru
      _
    // Predicated region
    $region6: #{lstm_model_forward.1} parent=1 // pred_check
      _
    $region7: #{lstm_model_forward.1} parent=1 // pred_check_branch
      %28 = sbr.rel (0) target = $region9
    $region8: #{lstm_model_forward.1} parent=1 // pred_region
      %s30 = ssub.s32 2048, 2048
      %31 = vsyncadd [#allocation6], %s30
      %s32 = sshll.u32 [#allocation5], 4
      %s33 = int_to_ptr.vmem [resolvable:$true] %s32
      %38 = dma.hbm_to_vmem [thread:$0]  %s1, 2048, %s33, [#allocation6], 128, 128, 8
    $region9: #{lstm_model_forward.1} parent=1 // pred_fallthru
      _
    // Predicated region
    $region10: #{lstm_model_forward.1} parent=1 // pred_check
      _
    $region11: #{lstm_model_forward.1} parent=1 // pred_check_branch
      %40 = sbr.rel (0) target = $region13
    $region12: #{lstm_model_forward.1} parent=1 // pred_region
      _
    $region13: #{lstm_model_forward.1} parent=1 // pred_fallthru
      _
    // Predicated region
    $region14: #{lstm_model_forward.1} parent=1 // pred_check
      _
    $region15: #{lstm_model_forward.1} parent=1 // pred_check_branch
      %42 = sbr.rel (0) target = $region17
    $region16: #{lstm_model_forward.1} parent=1 // pred_region
      %s44 = ssub.s32 256, 256
      %45 = vsyncadd [#allocation8], %s44
      %s46 = sshll.u32 [#allocation7], 4
      %s47 = int_to_ptr.vmem [resolvable:$true] %s46
      %52 = dma.hbm_to_vmem [thread:$0]  %s3, 256, %s47, [#allocation8], 64, 64, 4
    $region17: #{lstm_model_forward.1} parent=1 // pred_fallthru
      _
    // Predicated region
    $region18: #{lstm_model_forward.1} parent=1 // pred_check
      _
    $region19: #{lstm_model_forward.1} parent=1 // pred_check_branch
      %54 = sbr.rel (0) target = $region21
    $region20: #{lstm_model_forward.1} parent=1 // pred_region
      %s56 = ssub.s32 256, 256
      %57 = vsyncadd [#allocation8], %s56
      %s58 = sshll.u32 [#allocation9], 4
      %s59 = int_to_ptr.vmem [resolvable:$true] %s58
      %64 = dma.hbm_to_vmem [thread:$0]  %s4, 256, %s59, [#allocation8], 64, 64, 4
    $region21: #{lstm_model_forward.1} parent=1 // pred_fallthru
      _
    // Predicated region
    $region22: #{lstm_model_forward.1} parent=1 // pred_check
      _
    $region23: #{lstm_model_forward.1} parent=1 // pred_check_branch
      %66 = sbr.rel (0) target = $region25
    $region24: #{lstm_model_forward.1} parent=1 // pred_region
      %s68 = ssub.s32 256, 256
      %69 = vsyncadd [#allocation11], %s68
      %s70 = sshll.u32 [#allocation10], 4
      %s71 = int_to_ptr.vmem [resolvable:$true] %s70
      %76 = dma.hbm_to_vmem [thread:$0]  %s5, 256, %s71, [#allocation11], 64, 64, 4
    $region25: #{lstm_model_forward.1} parent=1 // pred_fallthru
      _
    // Predicated region
    $region26: #{lstm_model_forward.1} parent=1 // pred_check
      _
    $region27: #{lstm_model_forward.1} parent=1 // pred_check_branch
      %78 = sbr.rel (0) target = $region29
    $region28: #{lstm_model_forward.1} parent=1 // pred_region
      %s80 = ssub.s32 256, 256
      %81 = vsyncadd [#allocation11], %s80
      %s82 = sshll.u32 [#allocation12], 4
      %s83 = int_to_ptr.vmem [resolvable:$true] %s82
      %88 = dma.hbm_to_vmem [thread:$0]  %s6, 256, %s83, [#allocation11], 64, 64, 4
    $region29: #{lstm_model_forward.1} parent=1 // pred_fallthru
      _
    // Predicated region
    $region30: #{lstm_model_forward.1} parent=1 // pred_check
      _
    $region31: #{lstm_model_forward.1} parent=1 // pred_check_branch
      %90 = sbr.rel (0) target = $region33
    $region32: #{lstm_model_forward.1} parent=1 // pred_region
      %s92 = ssub.s32 256, 256
      %93 = vsyncadd [#allocation14], %s92
      %s94 = sshll.u32 [#allocation13], 4
      %s95 = int_to_ptr.vmem [resolvable:$true] %s94
      %100 = dma.hbm_to_vmem [thread:$0]  %s7, 256, %s95, [#allocation14], 64, 64, 4
    $region33: #{lstm_model_forward.1} parent=1 // pred_fallthru
      _
    // Predicated region
    $region34: #{lstm_model_forward.1} parent=1 // pred_check
      _
    $region35: #{lstm_model_forward.1} parent=1 // pred_check_branch
      %102 = sbr.rel (0) target = $region37
    $region36: #{lstm_model_forward.1} parent=1 // pred_region
      _
    $region37: #{lstm_model_forward.1} parent=1 // pred_fallthru
      _
    // Predicated region
    $region38: #{lstm_model_forward.1} parent=1 // pred_check
      _
    $region39: #{lstm_model_forward.1} parent=1 // pred_check_branch
      %104 = sbr.rel (0) target = $region41
    $region40: #{lstm_model_forward.1} parent=1 // pred_region
      _
    $region41: #{lstm_model_forward.1} parent=1 // pred_fallthru
      _
    // Predicated region
    $region42: #{lstm_model_forward.1} parent=1 // pred_check
      _
    $region43: #{lstm_model_forward.1} parent=1 // pred_check_branch
      %106 = sbr.rel (0) target = $region45
    $region44: #{lstm_model_forward.1} parent=1 // pred_region
      _
    $region45: #{lstm_model_forward.1} parent=1 // pred_fallthru
      _
    // Predicated region
    $region46: #{lstm_model_forward.1} parent=1 // pred_check
      _
    $region47: #{lstm_model_forward.1} parent=1 // pred_check_branch
      %108 = sbr.rel (0) target = $region49
    $region48: #{lstm_model_forward.1} parent=1 // pred_region
      %s110 = ssub.s32 512, 512
      %111 = vsyncadd [#allocation14], %s110
      %s112 = sshll.u32 [#allocation15], 4
      %s113 = int_to_ptr.vmem [resolvable:$true] %s112
      %118 = dma.hbm_to_vmem [thread:$0]  %s11, 512, %s113, [#allocation14], 128, 128, 8
    $region49: #{lstm_model_forward.1} parent=1 // pred_fallthru
      _
    // Predicated region
    $region50: #{lstm_model_forward.1} parent=1 // pred_check
      _
    $region51: #{lstm_model_forward.1} parent=1 // pred_check_branch
      %120 = sbr.rel (0) target = $region53
    $region52: #{lstm_model_forward.1} parent=1 // pred_region
      %s122 = ssub.s32 16, 16
      %123 = vsyncadd [#allocation17], %s122
      %s125 = sshll.u32 [#allocation16], 4
      %s126 = int_to_ptr.vmem [resolvable:$true] %s125
      %128 = dma.hbm_to_vmem [thread:$0]  %s12, 16, %s126, [#allocation17]
    $region53: #{lstm_model_forward.1} parent=1 // pred_fallthru
      _
    // Predicated region
    $region54: #{lstm_model_forward.1} parent=1 // pred_check
      _
    $region55: #{lstm_model_forward.1} parent=1 // pred_check_branch
      %130 = sbr.rel (0) target = $region57
    $region56: #{lstm_model_forward.1} parent=1 // pred_region
      _
    $region57: #{lstm_model_forward.1} parent=1 // pred_fallthru
      _
    // Predicated region
    $region58: #{lstm_model_forward.1} parent=1 // pred_check
      _
    $region59: #{lstm_model_forward.1} parent=1 // pred_check_branch
      %132 = sbr.rel (0) target = $region61
    $region60: #{lstm_model_forward.1} parent=1 // pred_region
      %s134 = ssub.s32 16, 16
      %135 = vsyncadd [#allocation17], %s134
      %s137 = sshll.u32 [#allocation18], 4
      %s138 = int_to_ptr.vmem [resolvable:$true] %s137
      %140 = dma.hbm_to_vmem [thread:$0]  %s14, 16, %s138, [#allocation17]
    $region61: #{lstm_model_forward.1} parent=1 // pred_fallthru
      _
    // Predicated region
    $region62: #{lstm_model_forward.1} parent=1 // pred_check
      _
    $region63: #{lstm_model_forward.1} parent=1 // pred_check_branch
      %142 = sbr.rel (0) target = $region65
    $region64: #{lstm_model_forward.1} parent=1 // pred_region
      %143 = dma.done [#allocation6], 2048
    $region65: #{lstm_model_forward.1} parent=1 // pred_fallthru
      _
    // Predicated region
    $region66: #{lstm_model_forward.1} parent=1 // pred_check
      _
    $region67: #{lstm_model_forward.1} parent=1 // pred_check_branch
      %145 = sbr.rel (0) target = $region69
    $region68: #{lstm_model_forward.1} parent=1 // pred_region
      %146 = dma.done [#allocation8], 256
    $region69: #{lstm_model_forward.1} parent=1 // pred_fallthru
      _
    // Predicated region
    $region70: #{lstm_model_forward.1} parent=1 // pred_check
      _
    $region71: #{lstm_model_forward.1} parent=1 // pred_check_branch
      %148 = sbr.rel (0) target = $region73
    $region72: #{lstm_model_forward.1} parent=1 // pred_region
      %149 = dma.done [#allocation8], 256
    $region73: #{lstm_model_forward.1} parent=1 // pred_fallthru
      _
    // Predicated region
    $region74: #{lstm_model_forward.1} parent=1 // pred_check
      _
    $region75: #{lstm_model_forward.1} parent=1 // pred_check_branch
      %151 = sbr.rel (0) target = $region77
    $region76: #{lstm_model_forward.1} parent=1 // pred_region
      %152 = dma.done [#allocation11], 256
    $region77: #{lstm_model_forward.1} parent=1 // pred_fallthru
      _
    // Predicated region
    $region78: #{lstm_model_forward.1} parent=1 // pred_check
      _
    $region79: #{lstm_model_forward.1} parent=1 // pred_check_branch
      %154 = sbr.rel (0) target = $region81
    $region80: #{lstm_model_forward.1} parent=1 // pred_region
      %155 = dma.done [#allocation11], 256
    $region81: #{lstm_model_forward.1} parent=1 // pred_fallthru
      _
    // Predicated region
    $region82: #{lstm_model_forward.1} parent=1 // pred_check
      _
    $region83: #{lstm_model_forward.1} parent=1 // pred_check_branch
      %157 = sbr.rel (0) target = $region85
    $region84: #{lstm_model_forward.1} parent=1 // pred_region
      %158 = dma.done [#allocation14], 256
    $region85: #{lstm_model_forward.1} parent=1 // pred_fallthru
      _
    // Predicated region
    $region86: #{lstm_model_forward.1} parent=1 // pred_check
      _
    $region87: #{lstm_model_forward.1} parent=1 // pred_check_branch
      %160 = sbr.rel (0) target = $region89
    $region88: #{lstm_model_forward.1} parent=1 // pred_region
      %161 = dma.done [#allocation14], 512
    $region89: #{lstm_model_forward.1} parent=1 // pred_fallthru
      _
    // Predicated region
    $region90: #{lstm_model_forward.1} parent=1 // pred_check
      _
    $region91: #{lstm_model_forward.1} parent=1 // pred_check_branch
      %163 = sbr.rel (0) target = $region93
    $region92: #{lstm_model_forward.1} parent=1 // pred_region
      %164 = dma.done [#allocation17], 16
    $region93: #{lstm_model_forward.1} parent=1 // pred_fallthru
      _
    // Predicated region
    $region94: #{lstm_model_forward.1} parent=1 // pred_check
      _
    $region95: #{lstm_model_forward.1} parent=1 // pred_check_branch
      %166 = sbr.rel (0) target = $region97
    $region96: #{lstm_model_forward.1} parent=1 // pred_region
      %167 = dma.done [#allocation17], 16
    $region97: #{lstm_model_forward.1} parent=1 // pred_fallthru
      _
    %v169 = vld [vmem:[%s0] sm:$0xf]
    %v170 = vld [vmem:[%s0 + $0x4] sm:$0xf]
    %v171 = vld [vmem:[%s0 + $0x8] sm:$0xf]
    %v172 = vld [vmem:[%s0 + $0xc] sm:$0xf]
    %v173 = vld [vmem:[%s0 + $0x10] sm:$0xf]
    %v174 = vld [vmem:[%s0 + $0x14] sm:$0xf]
    %v175 = vld [vmem:[%s0 + $0x18] sm:$0xf]
    %v176 = vld [vmem:[%s0 + $0x1c] sm:$0xf]
    %v177 = vld [vmem:[#allocation5] sm:$0xff]
    %v178 = vld [vmem:[#allocation5 + $0x8] sm:$0xff]
    %v179 = vld [vmem:[#allocation5 + $0x10] sm:$0xff]
    %v180 = vld [vmem:[#allocation5 + $0x18] sm:$0xff]
    %v181 = vld [vmem:[#allocation5 + $0x20] sm:$0xff]
    %v182 = vld [vmem:[#allocation5 + $0x28] sm:$0xff]
    %v183 = vld [vmem:[#allocation5 + $0x30] sm:$0xff]
    %v184 = vld [vmem:[#allocation5 + $0x38] sm:$0xff]
    %v185 = vld [vmem:[#allocation5 + $0x40] sm:$0xff]
    %v186 = vld [vmem:[#allocation5 + $0x48] sm:$0xff]
    %v187 = vld [vmem:[#allocation5 + $0x50] sm:$0xff]
    %v188 = vld [vmem:[#allocation5 + $0x58] sm:$0xff]
    %v189 = vld [vmem:[#allocation5 + $0x60] sm:$0xff]
    %v190 = vld [vmem:[#allocation5 + $0x68] sm:$0xff]
    %v191 = vld [vmem:[#allocation5 + $0x70] sm:$0xff]
    %v192 = vld [vmem:[#allocation5 + $0x78] sm:$0xff]
    %v193 = vld [vmem:[%s2] sm:$0x3]
    %v195 = vlaneseq
    %v196 = vshrl.u32 %v195, 7
    %v197 = vsub.s32 0, %v196
    %v198 = vrot.slane %v193, %v197
    %v199 = vlaneseq
    %v200 = vshrl.u32 %v199, 7
    %v201 = vsub.s32 1, %v200
    %v202 = vrot.slane %v193, %v201
    %v213 = vunpack.c.l.b16 %v169
    %v214 = vunpack.c.l.b16 %v170
    %v215 = vunpack.c.l.b16 %v171
    %v216 = vunpack.c.l.b16 %v172
    %v217 = vunpack.c.l.b16 %v173
    %v218 = vunpack.c.l.b16 %v174
    %v219 = vunpack.c.l.b16 %v175
    %v220 = vunpack.c.l.b16 %v176
    %v221 = vpack.c.b16 %v214, %v213
    %v222 = vpack.c.b16 %v216, %v215
    %v223 = vpack.c.b16 %v218, %v217
    %v224 = vpack.c.b16 %v220, %v219
    %v245 = vunpack.c.l.b16 %v177
    %v246 = vunpack.c.h.b16 %v177
    %v247 = vunpack.c.l.b16 %v178
    %v248 = vunpack.c.h.b16 %v178
    %v249 = vunpack.c.l.b16 %v179
    %v250 = vunpack.c.h.b16 %v179
    %v251 = vunpack.c.l.b16 %v180
    %v252 = vunpack.c.h.b16 %v180
    %v253 = vunpack.c.l.b16 %v181
    %v254 = vunpack.c.h.b16 %v181
    %v255 = vunpack.c.l.b16 %v182
    %v256 = vunpack.c.h.b16 %v182
    %v257 = vunpack.c.l.b16 %v183
    %v258 = vunpack.c.h.b16 %v183
    %v259 = vunpack.c.l.b16 %v184
    %v260 = vunpack.c.h.b16 %v184
    %v261 = vunpack.c.l.b16 %v185
    %v262 = vunpack.c.h.b16 %v185
    %v263 = vunpack.c.l.b16 %v186
    %v264 = vunpack.c.h.b16 %v186
    %v265 = vunpack.c.l.b16 %v187
    %v266 = vunpack.c.h.b16 %v187
    %v267 = vunpack.c.l.b16 %v188
    %v268 = vunpack.c.h.b16 %v188
    %v269 = vunpack.c.l.b16 %v189
    %v270 = vunpack.c.h.b16 %v189
    %v271 = vunpack.c.l.b16 %v190
    %v272 = vunpack.c.h.b16 %v190
    %v273 = vunpack.c.l.b16 %v191
    %v274 = vunpack.c.h.b16 %v191
    %v275 = vunpack.c.l.b16 %v192
    %v276 = vunpack.c.h.b16 %v192
    %v277 = vpack.c.b16 %v247, %v245
    %v278 = vpack.c.b16 %v248, %v246
    %v279 = vpack.c.b16 %v251, %v249
    %v280 = vpack.c.b16 %v252, %v250
    %v281 = vpack.c.b16 %v255, %v253
    %v282 = vpack.c.b16 %v256, %v254
    %v283 = vpack.c.b16 %v259, %v257
    %v284 = vpack.c.b16 %v260, %v258
    %v285 = vpack.c.b16 %v263, %v261
    %v286 = vpack.c.b16 %v264, %v262
    %v287 = vpack.c.b16 %v267, %v265
    %v288 = vpack.c.b16 %v268, %v266
    %v289 = vpack.c.b16 %v271, %v269
    %v290 = vpack.c.b16 %v272, %v270
    %v291 = vpack.c.b16 %v275, %v273
    %v292 = vpack.c.b16 %v276, %v274
    %309 = vmatprep.subr.bf16.mxu0 %v278
    %310 = vmatpush1.bf16.msra.mxu0 %v277
    %311 = vmatprep.subr.bf16.mxu0 %v280
    %312 = vmatpush1.bf16.msra.mxu0 %v279
    %313 = vmatprep.subr.bf16.mxu0 %v282
    %314 = vmatpush1.bf16.msra.mxu0 %v281
    %315 = vmatprep.subr.bf16.mxu0 %v284
    %316 = vmatpush1.bf16.msra.mxu0 %v283
    %317 = vmatprep.subr.bf16.mxu0 %v286
    %318 = vmatpush1.bf16.msra.mxu0 %v285
    %319 = vmatprep.subr.bf16.mxu0 %v288
    %320 = vmatpush1.bf16.msra.mxu0 %v287
    %321 = vmatprep.subr.bf16.mxu0 %v290
    %322 = vmatpush1.bf16.msra.mxu0 %v289
    %323 = vmatprep.subr.bf16.mxu0 %v292
    %324 = vmatpush1.bf16.msra.mxu0 %v291
    %325 = vmatprep.subr.bf16.mxu0 0
    %326 = vmatpush1.bf16.msra.mxu0 0
    %327 = vmatprep.subr.bf16.mxu0 0
    %328 = vmatpush1.bf16.msra.mxu0 0
    %329 = vmatprep.subr.bf16.mxu0 0
    %330 = vmatpush1.bf16.msra.mxu0 0
    %331 = vmatprep.subr.bf16.mxu0 0
    %332 = vmatpush1.bf16.msra.mxu0 0
    %333 = vmatprep.subr.bf16.mxu0 0
    %334 = vmatpush1.bf16.msra.mxu0 0
    %335 = vmatprep.subr.bf16.mxu0 0
    %336 = vmatpush1.bf16.msra.mxu0 0
    %337 = vmatprep.subr.bf16.mxu0 0
    %338 = vmatpush1.bf16.msra.mxu0 0
    %339 = vmatprep.subr.bf16.mxu0 0
    %340 = vmatpush1.bf16.msra.mxu0 0
    %341 = vmatprep.mubr.bf16.mxu0 0
    %342 = vmatmul.mubr.bf16.gmra.mrb[0].mxu0 %v221
    %v343 = vpop.f32.mrb[0].mxu0
    %v344 = vadd.f32 %v198, %v343
    %v345 = vpop.f32.mrb[0].mxu0
    %v346 = vadd.f32 %v202, %v345
    %v347 = vpop.f32.mrb[0].mxu0
    %v348 = vadd.f32 %v198, %v347
    %v349 = vpop.f32.mrb[0].mxu0
    %v350 = vadd.f32 %v202, %v349
    %351 = vmatprep.mubr.bf16.mxu0 0
    %352 = vmatmul.mubr.bf16.gmra.mrb[0].mxu0 %v222
    %v353 = vpop.f32.mrb[0].mxu0
    %v354 = vadd.f32 %v198, %v353
    %v355 = vpop.f32.mrb[0].mxu0
    %v356 = vadd.f32 %v202, %v355
    %v357 = vpop.f32.mrb[0].mxu0
    %v358 = vadd.f32 %v198, %v357
    %v359 = vpop.f32.mrb[0].mxu0
    %v360 = vadd.f32 %v202, %v359
    %361 = vmatprep.mubr.bf16.mxu0 0
    %362 = vmatmul.mubr.bf16.gmra.mrb[0].mxu0 %v223
    %v363 = vpop.f32.mrb[0].mxu0
    %v364 = vadd.f32 %v198, %v363
    %v365 = vpop.f32.mrb[0].mxu0
    %v366 = vadd.f32 %v202, %v365
    %v367 = vpop.f32.mrb[0].mxu0
    %v368 = vadd.f32 %v198, %v367
    %v369 = vpop.f32.mrb[0].mxu0
    %v370 = vadd.f32 %v202, %v369
    %371 = vmatprep.mubr.bf16.mxu0 0
    %372 = vmatmul.mubr.bf16.gmra.mrb[0].mxu0 %v224
    %v373 = vpop.f32.mrb[0].mxu0
    %v374 = vadd.f32 %v198, %v373
    %v375 = vpop.f32.mrb[0].mxu0
    %v376 = vadd.f32 %v202, %v375
    %v377 = vpop.f32.mrb[0].mxu0
    %v378 = vadd.f32 %v198, %v377
    %v379 = vpop.f32.mrb[0].mxu0
    %v380 = vadd.f32 %v202, %v379
    %381 = vdwg.mxu0
    %382 = vst [vmem:[#allocation2] sm:$0xff] %v344
    %383 = vst [vmem:[#allocation2 + $0x8] sm:$0xff] %v346
    %384 = vst [vmem:[#allocation2 + $0x10] sm:$0xff] %v348
    %385 = vst [vmem:[#allocation2 + $0x18] sm:$0xff] %v350
    %386 = vst [vmem:[#allocation2 + $0x20] sm:$0xff] %v354
    %387 = vst [vmem:[#allocation2 + $0x28] sm:$0xff] %v356
    %388 = vst [vmem:[#allocation2 + $0x30] sm:$0xff] %v358
    %389 = vst [vmem:[#allocation2 + $0x38] sm:$0xff] %v360
    %390 = vst [vmem:[#allocation2 + $0x40] sm:$0xff] %v364
    %391 = vst [vmem:[#allocation2 + $0x48] sm:$0xff] %v366
    %392 = vst [vmem:[#allocation2 + $0x50] sm:$0xff] %v368
    %393 = vst [vmem:[#allocation2 + $0x58] sm:$0xff] %v370
    %394 = vst [vmem:[#allocation2 + $0x60] sm:$0xff] %v374
    %395 = vst [vmem:[#allocation2 + $0x68] sm:$0xff] %v376
    %396 = vst [vmem:[#allocation2 + $0x70] sm:$0xff] %v378
    %397 = vst [vmem:[#allocation2 + $0x78] sm:$0xff] %v380
    %v398 = vld [vmem:[#allocation7] sm:$0xf]
    %v399 = vld [vmem:[#allocation7 + $0x4] sm:$0xf]
    %v400 = vld [vmem:[#allocation7 + $0x8] sm:$0xf]
    %v401 = vld [vmem:[#allocation7 + $0xc] sm:$0xf]
    %v402 = vld [vmem:[#allocation9] sm:$0xf]
    %v403 = vld [vmem:[#allocation9 + $0x4] sm:$0xf]
    %v404 = vld [vmem:[#allocation9 + $0x8] sm:$0xf]
    %v405 = vld [vmem:[#allocation9 + $0xc] sm:$0xf]
    %s406 = smul.u32 0, 2
    %s407 = smul.addr %s406, 8
    %s408 = scalar_lea.vmem [#allocation2], %s407
    %v409 = vld [vmem:[%s408] sm:$0xff]
    %v414 = vunpack.c.l.b16 %v398
    %v415 = vunpack.c.l.b16 %v399
    %v416 = vunpack.c.l.b16 %v400
    %v417 = vunpack.c.l.b16 %v401
    %v418 = vpack.c.b16 %v415, %v414
    %v419 = vpack.c.b16 %v417, %v416
    %vm422 = vcmask 261120
    %v424 = vsel %vm422, 0, 0
    %426 = vmatprep.subr.bf16.mxu0 0
    %427 = vmatpush1.bf16.msra.mxu0 %v418
    %428 = vmatprep.subr.bf16.mxu0 0
    %429 = vmatpush1.bf16.msra.mxu0 %v419
    %430 = vmatprep.subr.bf16.mxu0 0
    %431 = vmatpush1.bf16.msra.mxu0 0
    %432 = vmatprep.subr.bf16.mxu0 0
    %433 = vmatpush1.bf16.msra.mxu0 0
    %434 = vmatprep.subr.bf16.mxu0 0
    %435 = vmatpush1.bf16.msra.mxu0 0
    %436 = vmatprep.subr.bf16.mxu0 0
    %437 = vmatpush1.bf16.msra.mxu0 0
    %438 = vmatprep.subr.bf16.mxu0 0
    %439 = vmatpush1.bf16.msra.mxu0 0
    %440 = vmatprep.subr.bf16.mxu0 0
    %441 = vmatpush1.bf16.msra.mxu0 0
    %442 = vmatprep.subr.bf16.mxu0 0
    %443 = vmatpush1.bf16.msra.mxu0 0
    %444 = vmatprep.subr.bf16.mxu0 0
    %445 = vmatpush1.bf16.msra.mxu0 0
    %446 = vmatprep.subr.bf16.mxu0 0
    %447 = vmatpush1.bf16.msra.mxu0 0
    %448 = vmatprep.subr.bf16.mxu0 0
    %449 = vmatpush1.bf16.msra.mxu0 0
    %450 = vmatprep.subr.bf16.mxu0 0
    %451 = vmatpush1.bf16.msra.mxu0 0
    %452 = vmatprep.subr.bf16.mxu0 0
    %453 = vmatpush1.bf16.msra.mxu0 0
    %454 = vmatprep.subr.bf16.mxu0 0
    %455 = vmatpush1.bf16.msra.mxu0 0
    %456 = vmatprep.subr.bf16.mxu0 0
    %457 = vmatpush1.bf16.msra.mxu0 0
    %458 = vmatprep.mubr.bf16.mxu0 0
    %459 = vmatmul.mubr.bf16.gmra.mrb[0].mxu0 %v424
    %v460 = vpop.f32.mrb[0].mxu0
    %v461 = vadd.f32 0.0, %v460
    %v462 = vpop.f32.mrb[0].mxu0
    %v463 = vpop.f32.mrb[0].mxu0
    %v464 = vpop.f32.mrb[0].mxu0
    %465 = vdwg.mxu0
    %v466 = vadd.f32 %v409, %v461
    %s467 = smul.u32 7, 2
    %s468 = smul.addr %s467, 8
    %s469 = scalar_lea.vmem [#allocation2], %s468
    %v470 = vld [vmem:[%s469 + $0x8] sm:$0xff]
    %v475 = vunpack.c.l.b16 %v402
    %v476 = vunpack.c.l.b16 %v403
    %v477 = vunpack.c.l.b16 %v404
    %v478 = vunpack.c.l.b16 %v405
    %v479 = vpack.c.b16 %v476, %v475
    %v480 = vpack.c.b16 %v478, %v477
    %483 = vmatprep.subr.bf16.mxu0 0
    %484 = vmatpush1.bf16.msra.mxu0 %v479
    %485 = vmatprep.subr.bf16.mxu0 0
    %486 = vmatpush1.bf16.msra.mxu0 %v480
    %487 = vmatprep.subr.bf16.mxu0 0
    %488 = vmatpush1.bf16.msra.mxu0 0
    %489 = vmatprep.subr.bf16.mxu0 0
    %490 = vmatpush1.bf16.msra.mxu0 0
    %491 = vmatprep.subr.bf16.mxu0 0
    %492 = vmatpush1.bf16.msra.mxu0 0
    %493 = vmatprep.subr.bf16.mxu0 0
    %494 = vmatpush1.bf16.msra.mxu0 0
    %495 = vmatprep.subr.bf16.mxu0 0
    %496 = vmatpush1.bf16.msra.mxu0 0
    %497 = vmatprep.subr.bf16.mxu0 0
    %498 = vmatpush1.bf16.msra.mxu0 0
    %499 = vmatprep.subr.bf16.mxu0 0
    %500 = vmatpush1.bf16.msra.mxu0 0
    %501 = vmatprep.subr.bf16.mxu0 0
    %502 = vmatpush1.bf16.msra.mxu0 0
    %503 = vmatprep.subr.bf16.mxu0 0
    %504 = vmatpush1.bf16.msra.mxu0 0
    %505 = vmatprep.subr.bf16.mxu0 0
    %506 = vmatpush1.bf16.msra.mxu0 0
    %507 = vmatprep.subr.bf16.mxu0 0
    %508 = vmatpush1.bf16.msra.mxu0 0
    %509 = vmatprep.subr.bf16.mxu0 0
    %510 = vmatpush1.bf16.msra.mxu0 0
    %511 = vmatprep.subr.bf16.mxu0 0
    %512 = vmatpush1.bf16.msra.mxu0 0
    %513 = vmatprep.subr.bf16.mxu0 0
    %514 = vmatpush1.bf16.msra.mxu0 0
    %515 = vmatprep.mubr.bf16.mxu0 0
    %516 = vmatmul.mubr.bf16.gmra.mrb[0].mxu0 %v424
    %v517 = vpop.f32.mrb[0].mxu0
    %v518 = vadd.f32 0.0, %v517
    %v519 = vpop.f32.mrb[0].mxu0
    %v520 = vpop.f32.mrb[0].mxu0
    %v521 = vpop.f32.mrb[0].mxu0
    %522 = vdwg.mxu0
    %v523 = vadd.f32 %v470, %v518
    %v524 = vtanh.pop %v466
    %v525 = vadd.f32 %v524, 1.0
    %v526 = vmul.f32 %v525, 0.5
    %v527 = vmul.f32 %v526, 0.0
    %529 = vrot.lane.b32.xlu0 %v524, 64
    %v530 = vpop.permute.xlu0 %529
    %v532 = vmul.f32 %v526, %v530
    %534 = vrot.lane.b32.xlu0 %v532, 32
    %v535 = vpop.permute.xlu0 %534
    %v537 = vadd.f32 %v527, %v535
    %v538 = vtanh.pop %v537
    %540 = vrot.lane.b32.xlu0 %v538, 64
    %v541 = vpop.permute.xlu0 %540
    %v543 = vmul.f32 %v526, %v541
    %v544 = vtanh.pop %v523
    %v545 = vadd.f32 %v544, 1.0
    %v546 = vmul.f32 %v545, 0.5
    %v547 = vmul.f32 %v546, 0.0
    %549 = vrot.lane.b32.xlu0 %v544, 64
    %v550 = vpop.permute.xlu0 %549
    %v552 = vmul.f32 %v546, %v550
    %554 = vrot.lane.b32.xlu0 %v552, 32
    %v555 = vpop.permute.xlu0 %554
    %v557 = vadd.f32 %v547, %v555
    %v558 = vtanh.pop %v557
    %560 = vrot.lane.b32.xlu0 %v558, 64
    %v561 = vpop.permute.xlu0 %560
    %v563 = vmul.f32 %v546, %v561
    %565 = vrot.lane.b32.xlu0 %v543, 32
    %v566 = vpop.permute.xlu0 %565
    %568 = vst.msk [vmem:[#allocation3] sm:$0xff] %vm422, %v566
    %570 = vrot.lane.b32.xlu0 %v563, 32
    %v571 = vpop.permute.xlu0 %570
    %s573 = scalar_lea.vmem [#allocation4], 56
    %574 = vst.msk [vmem:[%s573] sm:$0xff] %vm422, %v571
    %s575 = smul.u32 1, 2
    %s576 = smul.addr %s575, 8
    %s577 = scalar_lea.vmem [#allocation2], %s576
    %v578 = vld [vmem:[%s577] sm:$0xff]
    %v579 = vpack.c.bf16 %v543, %v543
    %581 = vrot.lane.b32.xlu0 %v579, 32
    %v582 = vpop.permute.xlu0 %581
    %v584 = vsel %vm422, %v582, 0
    %586 = vmatprep.subr.bf16.mxu0 0
    %587 = vmatpush1.bf16.msra.mxu0 %v418
    %588 = vmatprep.subr.bf16.mxu0 0
    %589 = vmatpush1.bf16.msra.mxu0 %v419
    %590 = vmatprep.subr.bf16.mxu0 0
    %591 = vmatpush1.bf16.msra.mxu0 0
    %592 = vmatprep.subr.bf16.mxu0 0
    %593 = vmatpush1.bf16.msra.mxu0 0
    %594 = vmatprep.subr.bf16.mxu0 0
    %595 = vmatpush1.bf16.msra.mxu0 0
    %596 = vmatprep.subr.bf16.mxu0 0
    %597 = vmatpush1.bf16.msra.mxu0 0
    %598 = vmatprep.subr.bf16.mxu0 0
    %599 = vmatpush1.bf16.msra.mxu0 0
    %600 = vmatprep.subr.bf16.mxu0 0
    %601 = vmatpush1.bf16.msra.mxu0 0
    %602 = vmatprep.subr.bf16.mxu0 0
    %603 = vmatpush1.bf16.msra.mxu0 0
    %604 = vmatprep.subr.bf16.mxu0 0
    %605 = vmatpush1.bf16.msra.mxu0 0
    %606 = vmatprep.subr.bf16.mxu0 0
    %607 = vmatpush1.bf16.msra.mxu0 0
    %608 = vmatprep.subr.bf16.mxu0 0
    %609 = vmatpush1.bf16.msra.mxu0 0
    %610 = vmatprep.subr.bf16.mxu0 0
    %611 = vmatpush1.bf16.msra.mxu0 0
    %612 = vmatprep.subr.bf16.mxu0 0
    %613 = vmatpush1.bf16.msra.mxu0 0
    %614 = vmatprep.subr.bf16.mxu0 0
    %615 = vmatpush1.bf16.msra.mxu0 0
    %616 = vmatprep.subr.bf16.mxu0 0
    %617 = vmatpush1.bf16.msra.mxu0 0
    %618 = vmatprep.mubr.bf16.mxu0 0
    %619 = vmatmul.mubr.bf16.gmra.mrb[0].mxu0 %v584
    %v620 = vpop.f32.mrb[0].mxu0
    %v621 = vadd.f32 0.0, %v620
    %v622 = vpop.f32.mrb[0].mxu0
    %v623 = vpop.f32.mrb[0].mxu0
    %v624 = vpop.f32.mrb[0].mxu0
    %625 = vdwg.mxu0
    %v626 = vadd.f32 %v578, %v621
    %s627 = smul.u32 6, 2
    %s628 = smul.addr %s627, 8
    %s629 = scalar_lea.vmem [#allocation2], %s628
    %v630 = vld [vmem:[%s629 + $0x8] sm:$0xff]
    %v631 = vpack.c.bf16 %v563, %v563
    %633 = vrot.lane.b32.xlu0 %v631, 32
    %v634 = vpop.permute.xlu0 %633
    %v636 = vsel %vm422, %v634, 0
    %638 = vmatprep.subr.bf16.mxu0 0
    %639 = vmatpush1.bf16.msra.mxu0 %v479
    %640 = vmatprep.subr.bf16.mxu0 0
    %641 = vmatpush1.bf16.msra.mxu0 %v480
    %642 = vmatprep.subr.bf16.mxu0 0
    %643 = vmatpush1.bf16.msra.mxu0 0
    %644 = vmatprep.subr.bf16.mxu0 0
    %645 = vmatpush1.bf16.msra.mxu0 0
    %646 = vmatprep.subr.bf16.mxu0 0
    %647 = vmatpush1.bf16.msra.mxu0 0
    %648 = vmatprep.subr.bf16.mxu0 0
    %649 = vmatpush1.bf16.msra.mxu0 0
    %650 = vmatprep.subr.bf16.mxu0 0
    %651 = vmatpush1.bf16.msra.mxu0 0
    %652 = vmatprep.subr.bf16.mxu0 0
    %653 = vmatpush1.bf16.msra.mxu0 0
    %654 = vmatprep.subr.bf16.mxu0 0
    %655 = vmatpush1.bf16.msra.mxu0 0
    %656 = vmatprep.subr.bf16.mxu0 0
    %657 = vmatpush1.bf16.msra.mxu0 0
    %658 = vmatprep.subr.bf16.mxu0 0
    %659 = vmatpush1.bf16.msra.mxu0 0
    %660 = vmatprep.subr.bf16.mxu0 0
    %661 = vmatpush1.bf16.msra.mxu0 0
    %662 = vmatprep.subr.bf16.mxu0 0
    %663 = vmatpush1.bf16.msra.mxu0 0
    %664 = vmatprep.subr.bf16.mxu0 0
    %665 = vmatpush1.bf16.msra.mxu0 0
    %666 = vmatprep.subr.bf16.mxu0 0
    %667 = vmatpush1.bf16.msra.mxu0 0
    %668 = vmatprep.subr.bf16.mxu0 0
    %669 = vmatpush1.bf16.msra.mxu0 0
    %670 = vmatprep.mubr.bf16.mxu0 0
    %671 = vmatmul.mubr.bf16.gmra.mrb[0].mxu0 %v636
    %v672 = vpop.f32.mrb[0].mxu0
    %v673 = vadd.f32 0.0, %v672
    %v674 = vpop.f32.mrb[0].mxu0
    %v675 = vpop.f32.mrb[0].mxu0
    %v676 = vpop.f32.mrb[0].mxu0
    %677 = vdwg.mxu0
    %v678 = vadd.f32 %v630, %v673
    %v679 = vtanh.pop %v626
    %v680 = vadd.f32 %v679, 1.0
    %v681 = vmul.f32 %v680, 0.5
    %v682 = vmul.f32 %v681, %v537
    %684 = vrot.lane.b32.xlu0 %v679, 64
    %v685 = vpop.permute.xlu0 %684
    %v687 = vmul.f32 %v681, %v685
    %689 = vrot.lane.b32.xlu0 %v687, 32
    %v690 = vpop.permute.xlu0 %689
    %v692 = vadd.f32 %v682, %v690
    %v693 = vtanh.pop %v692
    %695 = vrot.lane.b32.xlu0 %v693, 64
    %v696 = vpop.permute.xlu0 %695
    %v698 = vmul.f32 %v681, %v696
    %v699 = vtanh.pop %v678
    %v700 = vadd.f32 %v699, 1.0
    %v701 = vmul.f32 %v700, 0.5
    %v702 = vmul.f32 %v701, %v557
    %704 = vrot.lane.b32.xlu0 %v699, 64
    %v705 = vpop.permute.xlu0 %704
    %v707 = vmul.f32 %v701, %v705
    %709 = vrot.lane.b32.xlu0 %v707, 32
    %v710 = vpop.permute.xlu0 %709
    %v712 = vadd.f32 %v702, %v710
    %v713 = vtanh.pop %v712
    %715 = vrot.lane.b32.xlu0 %v713, 64
    %v716 = vpop.permute.xlu0 %715
    %v718 = vmul.f32 %v701, %v716
    %720 = vrot.lane.b32.xlu0 %v698, 32
    %v721 = vpop.permute.xlu0 %720
    %s723 = scalar_lea.vmem [#allocation3], 8
    %724 = vst.msk [vmem:[%s723] sm:$0xff] %vm422, %v721
    %726 = vrot.lane.b32.xlu0 %v718, 32
    %v727 = vpop.permute.xlu0 %726
    %s729 = scalar_lea.vmem [#allocation4], 48
    %730 = vst.msk [vmem:[%s729] sm:$0xff] %vm422, %v727
    %s731 = smul.u32 2, 2
    %s732 = smul.addr %s731, 8
    %s733 = scalar_lea.vmem [#allocation2], %s732
    %v734 = vld [vmem:[%s733] sm:$0xff]
    %v735 = vpack.c.bf16 %v698, %v698
    %737 = vrot.lane.b32.xlu0 %v735, 32
    %v738 = vpop.permute.xlu0 %737
    %v740 = vsel %vm422, %v738, 0
    %742 = vmatprep.subr.bf16.mxu0 0
    %743 = vmatpush1.bf16.msra.mxu0 %v418
    %744 = vmatprep.subr.bf16.mxu0 0
    %745 = vmatpush1.bf16.msra.mxu0 %v419
    %746 = vmatprep.subr.bf16.mxu0 0
    %747 = vmatpush1.bf16.msra.mxu0 0
    %748 = vmatprep.subr.bf16.mxu0 0
    %749 = vmatpush1.bf16.msra.mxu0 0
    %750 = vmatprep.subr.bf16.mxu0 0
    %751 = vmatpush1.bf16.msra.mxu0 0
    %752 = vmatprep.subr.bf16.mxu0 0
    %753 = vmatpush1.bf16.msra.mxu0 0
    %754 = vmatprep.subr.bf16.mxu0 0
    %755 = vmatpush1.bf16.msra.mxu0 0
    %756 = vmatprep.subr.bf16.mxu0 0
    %757 = vmatpush1.bf16.msra.mxu0 0
    %758 = vmatprep.subr.bf16.mxu0 0
    %759 = vmatpush1.bf16.msra.mxu0 0
    %760 = vmatprep.subr.bf16.mxu0 0
    %761 = vmatpush1.bf16.msra.mxu0 0
    %762 = vmatprep.subr.bf16.mxu0 0
    %763 = vmatpush1.bf16.msra.mxu0 0
    %764 = vmatprep.subr.bf16.mxu0 0
    %765 = vmatpush1.bf16.msra.mxu0 0
    %766 = vmatprep.subr.bf16.mxu0 0
    %767 = vmatpush1.bf16.msra.mxu0 0
    %768 = vmatprep.subr.bf16.mxu0 0
    %769 = vmatpush1.bf16.msra.mxu0 0
    %770 = vmatprep.subr.bf16.mxu0 0
    %771 = vmatpush1.bf16.msra.mxu0 0
    %772 = vmatprep.subr.bf16.mxu0 0
    %773 = vmatpush1.bf16.msra.mxu0 0
    %774 = vmatprep.mubr.bf16.mxu0 0
    %775 = vmatmul.mubr.bf16.gmra.mrb[0].mxu0 %v740
    %v776 = vpop.f32.mrb[0].mxu0
    %v777 = vadd.f32 0.0, %v776
    %v778 = vpop.f32.mrb[0].mxu0
    %v779 = vpop.f32.mrb[0].mxu0
    %v780 = vpop.f32.mrb[0].mxu0
    %781 = vdwg.mxu0
    %v782 = vadd.f32 %v734, %v777
    %s783 = smul.u32 5, 2
    %s784 = smul.addr %s783, 8
    %s785 = scalar_lea.vmem [#allocation2], %s784
    %v786 = vld [vmem:[%s785 + $0x8] sm:$0xff]
    %v787 = vpack.c.bf16 %v718, %v718
    %789 = vrot.lane.b32.xlu0 %v787, 32
    %v790 = vpop.permute.xlu0 %789
    %v792 = vsel %vm422, %v790, 0
    %794 = vmatprep.subr.bf16.mxu0 0
    %795 = vmatpush1.bf16.msra.mxu0 %v479
    %796 = vmatprep.subr.bf16.mxu0 0
    %797 = vmatpush1.bf16.msra.mxu0 %v480
    %798 = vmatprep.subr.bf16.mxu0 0
    %799 = vmatpush1.bf16.msra.mxu0 0
    %800 = vmatprep.subr.bf16.mxu0 0
    %801 = vmatpush1.bf16.msra.mxu0 0
    %802 = vmatprep.subr.bf16.mxu0 0
    %803 = vmatpush1.bf16.msra.mxu0 0
    %804 = vmatprep.subr.bf16.mxu0 0
    %805 = vmatpush1.bf16.msra.mxu0 0
    %806 = vmatprep.subr.bf16.mxu0 0
    %807 = vmatpush1.bf16.msra.mxu0 0
    %808 = vmatprep.subr.bf16.mxu0 0
    %809 = vmatpush1.bf16.msra.mxu0 0
    %810 = vmatprep.subr.bf16.mxu0 0
    %811 = vmatpush1.bf16.msra.mxu0 0
    %812 = vmatprep.subr.bf16.mxu0 0
    %813 = vmatpush1.bf16.msra.mxu0 0
    %814 = vmatprep.subr.bf16.mxu0 0
    %815 = vmatpush1.bf16.msra.mxu0 0
    %816 = vmatprep.subr.bf16.mxu0 0
    %817 = vmatpush1.bf16.msra.mxu0 0
    %818 = vmatprep.subr.bf16.mxu0 0
    %819 = vmatpush1.bf16.msra.mxu0 0
    %820 = vmatprep.subr.bf16.mxu0 0
    %821 = vmatpush1.bf16.msra.mxu0 0
    %822 = vmatprep.subr.bf16.mxu0 0
    %823 = vmatpush1.bf16.msra.mxu0 0
    %824 = vmatprep.subr.bf16.mxu0 0
    %825 = vmatpush1.bf16.msra.mxu0 0
    %826 = vmatprep.mubr.bf16.mxu0 0
    %827 = vmatmul.mubr.bf16.gmra.mrb[0].mxu0 %v792
    %v828 = vpop.f32.mrb[0].mxu0
    %v829 = vadd.f32 0.0, %v828
    %v830 = vpop.f32.mrb[0].mxu0
    %v831 = vpop.f32.mrb[0].mxu0
    %v832 = vpop.f32.mrb[0].mxu0
    %833 = vdwg.mxu0
    %v834 = vadd.f32 %v786, %v829
    %v835 = vtanh.pop %v782
    %v836 = vadd.f32 %v835, 1.0
    %v837 = vmul.f32 %v836, 0.5
    %v838 = vmul.f32 %v837, %v692
    %840 = vrot.lane.b32.xlu0 %v835, 64
    %v841 = vpop.permute.xlu0 %840
    %v843 = vmul.f32 %v837, %v841
    %845 = vrot.lane.b32.xlu0 %v843, 32
    %v846 = vpop.permute.xlu0 %845
    %v848 = vadd.f32 %v838, %v846
    %v849 = vtanh.pop %v848
    %851 = vrot.lane.b32.xlu0 %v849, 64
    %v852 = vpop.permute.xlu0 %851
    %v854 = vmul.f32 %v837, %v852
    %v855 = vtanh.pop %v834
    %v856 = vadd.f32 %v855, 1.0
    %v857 = vmul.f32 %v856, 0.5
    %v858 = vmul.f32 %v857, %v712
    %860 = vrot.lane.b32.xlu0 %v855, 64
    %v861 = vpop.permute.xlu0 %860
    %v863 = vmul.f32 %v857, %v861
    %865 = vrot.lane.b32.xlu0 %v863, 32
    %v866 = vpop.permute.xlu0 %865
    %v868 = vadd.f32 %v858, %v866
    %v869 = vtanh.pop %v868
    %871 = vrot.lane.b32.xlu0 %v869, 64
    %v872 = vpop.permute.xlu0 %871
    %v874 = vmul.f32 %v857, %v872
    %876 = vrot.lane.b32.xlu0 %v854, 32
    %v877 = vpop.permute.xlu0 %876
    %s879 = scalar_lea.vmem [#allocation3], 16
    %880 = vst.msk [vmem:[%s879] sm:$0xff] %vm422, %v877
    %882 = vrot.lane.b32.xlu0 %v874, 32
    %v883 = vpop.permute.xlu0 %882
    %s885 = scalar_lea.vmem [#allocation4], 40
    %886 = vst.msk [vmem:[%s885] sm:$0xff] %vm422, %v883
    %s887 = smul.u32 3, 2
    %s888 = smul.addr %s887, 8
    %s889 = scalar_lea.vmem [#allocation2], %s888
    %v890 = vld [vmem:[%s889] sm:$0xff]
    %v891 = vpack.c.bf16 %v854, %v854
    %893 = vrot.lane.b32.xlu0 %v891, 32
    %v894 = vpop.permute.xlu0 %893
    %v896 = vsel %vm422, %v894, 0
    %898 = vmatprep.subr.bf16.mxu0 0
    %899 = vmatpush1.bf16.msra.mxu0 %v418
    %900 = vmatprep.subr.bf16.mxu0 0
    %901 = vmatpush1.bf16.msra.mxu0 %v419
    %902 = vmatprep.subr.bf16.mxu0 0
    %903 = vmatpush1.bf16.msra.mxu0 0
    %904 = vmatprep.subr.bf16.mxu0 0
    %905 = vmatpush1.bf16.msra.mxu0 0
    %906 = vmatprep.subr.bf16.mxu0 0
    %907 = vmatpush1.bf16.msra.mxu0 0
    %908 = vmatprep.subr.bf16.mxu0 0
    %909 = vmatpush1.bf16.msra.mxu0 0
    %910 = vmatprep.subr.bf16.mxu0 0
    %911 = vmatpush1.bf16.msra.mxu0 0
    %912 = vmatprep.subr.bf16.mxu0 0
    %913 = vmatpush1.bf16.msra.mxu0 0
    %914 = vmatprep.subr.bf16.mxu0 0
    %915 = vmatpush1.bf16.msra.mxu0 0
    %916 = vmatprep.subr.bf16.mxu0 0
    %917 = vmatpush1.bf16.msra.mxu0 0
    %918 = vmatprep.subr.bf16.mxu0 0
    %919 = vmatpush1.bf16.msra.mxu0 0
    %920 = vmatprep.subr.bf16.mxu0 0
    %921 = vmatpush1.bf16.msra.mxu0 0
    %922 = vmatprep.subr.bf16.mxu0 0
    %923 = vmatpush1.bf16.msra.mxu0 0
    %924 = vmatprep.subr.bf16.mxu0 0
    %925 = vmatpush1.bf16.msra.mxu0 0
    %926 = vmatprep.subr.bf16.mxu0 0
    %927 = vmatpush1.bf16.msra.mxu0 0
    %928 = vmatprep.subr.bf16.mxu0 0
    %929 = vmatpush1.bf16.msra.mxu0 0
    %930 = vmatprep.mubr.bf16.mxu0 0
    %931 = vmatmul.mubr.bf16.gmra.mrb[0].mxu0 %v896
    %v932 = vpop.f32.mrb[0].mxu0
    %v933 = vadd.f32 0.0, %v932
    %v934 = vpop.f32.mrb[0].mxu0
    %v935 = vpop.f32.mrb[0].mxu0
    %v936 = vpop.f32.mrb[0].mxu0
    %937 = vdwg.mxu0
    %v938 = vadd.f32 %v890, %v933
    %s939 = smul.u32 4, 2
    %s940 = smul.addr %s939, 8
    %s941 = scalar_lea.vmem [#allocation2], %s940
    %v942 = vld [vmem:[%s941 + $0x8] sm:$0xff]
    %v943 = vpack.c.bf16 %v874, %v874
    %945 = vrot.lane.b32.xlu0 %v943, 32
    %v946 = vpop.permute.xlu0 %945
    %v948 = vsel %vm422, %v946, 0
    %950 = vmatprep.subr.bf16.mxu0 0
    %951 = vmatpush1.bf16.msra.mxu0 %v479
    %952 = vmatprep.subr.bf16.mxu0 0
    %953 = vmatpush1.bf16.msra.mxu0 %v480
    %954 = vmatprep.subr.bf16.mxu0 0
    %955 = vmatpush1.bf16.msra.mxu0 0
    %956 = vmatprep.subr.bf16.mxu0 0
    %957 = vmatpush1.bf16.msra.mxu0 0
    %958 = vmatprep.subr.bf16.mxu0 0
    %959 = vmatpush1.bf16.msra.mxu0 0
    %960 = vmatprep.subr.bf16.mxu0 0
    %961 = vmatpush1.bf16.msra.mxu0 0
    %962 = vmatprep.subr.bf16.mxu0 0
    %963 = vmatpush1.bf16.msra.mxu0 0
    %964 = vmatprep.subr.bf16.mxu0 0
    %965 = vmatpush1.bf16.msra.mxu0 0
    %966 = vmatprep.subr.bf16.mxu0 0
    %967 = vmatpush1.bf16.msra.mxu0 0
    %968 = vmatprep.subr.bf16.mxu0 0
    %969 = vmatpush1.bf16.msra.mxu0 0
    %970 = vmatprep.subr.bf16.mxu0 0
    %971 = vmatpush1.bf16.msra.mxu0 0
    %972 = vmatprep.subr.bf16.mxu0 0
    %973 = vmatpush1.bf16.msra.mxu0 0
    %974 = vmatprep.subr.bf16.mxu0 0
    %975 = vmatpush1.bf16.msra.mxu0 0
    %976 = vmatprep.subr.bf16.mxu0 0
    %977 = vmatpush1.bf16.msra.mxu0 0
    %978 = vmatprep.subr.bf16.mxu0 0
    %979 = vmatpush1.bf16.msra.mxu0 0
    %980 = vmatprep.subr.bf16.mxu0 0
    %981 = vmatpush1.bf16.msra.mxu0 0
    %982 = vmatprep.mubr.bf16.mxu0 0
    %983 = vmatmul.mubr.bf16.gmra.mrb[0].mxu0 %v948
    %v984 = vpop.f32.mrb[0].mxu0
    %v985 = vadd.f32 0.0, %v984
    %v986 = vpop.f32.mrb[0].mxu0
    %v987 = vpop.f32.mrb[0].mxu0
    %v988 = vpop.f32.mrb[0].mxu0
    %989 = vdwg.mxu0
    %v990 = vadd.f32 %v942, %v985
    %v991 = vtanh.pop %v938
    %v992 = vadd.f32 %v991, 1.0
    %v993 = vmul.f32 %v992, 0.5
    %v994 = vmul.f32 %v993, %v848
    %996 = vrot.lane.b32.xlu0 %v991, 64
    %v997 = vpop.permute.xlu0 %996
    %v999 = vmul.f32 %v993, %v997
    %1001 = vrot.lane.b32.xlu0 %v999, 32
    %v1002 = vpop.permute.xlu0 %1001
    %v1004 = vadd.f32 %v994, %v1002
    %v1005 = vtanh.pop %v1004
    %1007 = vrot.lane.b32.xlu0 %v1005, 64
    %v1008 = vpop.permute.xlu0 %1007
    %v1010 = vmul.f32 %v993, %v1008
    %v1011 = vtanh.pop %v990
    %v1012 = vadd.f32 %v1011, 1.0
    %v1013 = vmul.f32 %v1012, 0.5
    %v1014 = vmul.f32 %v1013, %v868
    %1016 = vrot.lane.b32.xlu0 %v1011, 64
    %v1017 = vpop.permute.xlu0 %1016
    %v1019 = vmul.f32 %v1013, %v1017
    %1021 = vrot.lane.b32.xlu0 %v1019, 32
    %v1022 = vpop.permute.xlu0 %1021
    %v1024 = vadd.f32 %v1014, %v1022
    %v1025 = vtanh.pop %v1024
    %1027 = vrot.lane.b32.xlu0 %v1025, 64
    %v1028 = vpop.permute.xlu0 %1027
    %v1030 = vmul.f32 %v1013, %v1028
    %1032 = vrot.lane.b32.xlu0 %v1010, 32
    %v1033 = vpop.permute.xlu0 %1032
    %s1035 = scalar_lea.vmem [#allocation3], 24
    %1036 = vst.msk [vmem:[%s1035] sm:$0xff] %vm422, %v1033
    %1038 = vrot.lane.b32.xlu0 %v1030, 32
    %v1039 = vpop.permute.xlu0 %1038
    %s1041 = scalar_lea.vmem [#allocation4], 32
    %1042 = vst.msk [vmem:[%s1041] sm:$0xff] %vm422, %v1039
    %v1043 = vld [vmem:[%s941] sm:$0xff]
    %v1044 = vpack.c.bf16 %v1010, %v1010
    %1046 = vrot.lane.b32.xlu0 %v1044, 32
    %v1047 = vpop.permute.xlu0 %1046
    %v1049 = vsel %vm422, %v1047, 0
    %1051 = vmatprep.subr.bf16.mxu0 0
    %1052 = vmatpush1.bf16.msra.mxu0 %v418
    %1053 = vmatprep.subr.bf16.mxu0 0
    %1054 = vmatpush1.bf16.msra.mxu0 %v419
    %1055 = vmatprep.subr.bf16.mxu0 0
    %1056 = vmatpush1.bf16.msra.mxu0 0
    %1057 = vmatprep.subr.bf16.mxu0 0
    %1058 = vmatpush1.bf16.msra.mxu0 0
    %1059 = vmatprep.subr.bf16.mxu0 0
    %1060 = vmatpush1.bf16.msra.mxu0 0
    %1061 = vmatprep.subr.bf16.mxu0 0
    %1062 = vmatpush1.bf16.msra.mxu0 0
    %1063 = vmatprep.subr.bf16.mxu0 0
    %1064 = vmatpush1.bf16.msra.mxu0 0
    %1065 = vmatprep.subr.bf16.mxu0 0
    %1066 = vmatpush1.bf16.msra.mxu0 0
    %1067 = vmatprep.subr.bf16.mxu0 0
    %1068 = vmatpush1.bf16.msra.mxu0 0
    %1069 = vmatprep.subr.bf16.mxu0 0
    %1070 = vmatpush1.bf16.msra.mxu0 0
    %1071 = vmatprep.subr.bf16.mxu0 0
    %1072 = vmatpush1.bf16.msra.mxu0 0
    %1073 = vmatprep.subr.bf16.mxu0 0
    %1074 = vmatpush1.bf16.msra.mxu0 0
    %1075 = vmatprep.subr.bf16.mxu0 0
    %1076 = vmatpush1.bf16.msra.mxu0 0
    %1077 = vmatprep.subr.bf16.mxu0 0
    %1078 = vmatpush1.bf16.msra.mxu0 0
    %1079 = vmatprep.subr.bf16.mxu0 0
    %1080 = vmatpush1.bf16.msra.mxu0 0
    %1081 = vmatprep.subr.bf16.mxu0 0
    %1082 = vmatpush1.bf16.msra.mxu0 0
    %1083 = vmatprep.mubr.bf16.mxu0 0
    %1084 = vmatmul.mubr.bf16.gmra.mrb[0].mxu0 %v1049
    %v1085 = vpop.f32.mrb[0].mxu0
    %v1086 = vadd.f32 0.0, %v1085
    %v1087 = vpop.f32.mrb[0].mxu0
    %v1088 = vpop.f32.mrb[0].mxu0
    %v1089 = vpop.f32.mrb[0].mxu0
    %1090 = vdwg.mxu0
    %v1091 = vadd.f32 %v1043, %v1086
    %v1092 = vld [vmem:[%s889 + $0x8] sm:$0xff]
    %v1093 = vpack.c.bf16 %v1030, %v1030
    %1095 = vrot.lane.b32.xlu0 %v1093, 32
    %v1096 = vpop.permute.xlu0 %1095
    %v1098 = vsel %vm422, %v1096, 0
    %1100 = vmatprep.subr.bf16.mxu0 0
    %1101 = vmatpush1.bf16.msra.mxu0 %v479
    %1102 = vmatprep.subr.bf16.mxu0 0
    %1103 = vmatpush1.bf16.msra.mxu0 %v480
    %1104 = vmatprep.subr.bf16.mxu0 0
    %1105 = vmatpush1.bf16.msra.mxu0 0
    %1106 = vmatprep.subr.bf16.mxu0 0
    %1107 = vmatpush1.bf16.msra.mxu0 0
    %1108 = vmatprep.subr.bf16.mxu0 0
    %1109 = vmatpush1.bf16.msra.mxu0 0
    %1110 = vmatprep.subr.bf16.mxu0 0
    %1111 = vmatpush1.bf16.msra.mxu0 0
    %1112 = vmatprep.subr.bf16.mxu0 0
    %1113 = vmatpush1.bf16.msra.mxu0 0
    %1114 = vmatprep.subr.bf16.mxu0 0
    %1115 = vmatpush1.bf16.msra.mxu0 0
    %1116 = vmatprep.subr.bf16.mxu0 0
    %1117 = vmatpush1.bf16.msra.mxu0 0
    %1118 = vmatprep.subr.bf16.mxu0 0
    %1119 = vmatpush1.bf16.msra.mxu0 0
    %1120 = vmatprep.subr.bf16.mxu0 0
    %1121 = vmatpush1.bf16.msra.mxu0 0
    %1122 = vmatprep.subr.bf16.mxu0 0
    %1123 = vmatpush1.bf16.msra.mxu0 0
    %1124 = vmatprep.subr.bf16.mxu0 0
    %1125 = vmatpush1.bf16.msra.mxu0 0
    %1126 = vmatprep.subr.bf16.mxu0 0
    %1127 = vmatpush1.bf16.msra.mxu0 0
    %1128 = vmatprep.subr.bf16.mxu0 0
    %1129 = vmatpush1.bf16.msra.mxu0 0
    %1130 = vmatprep.subr.bf16.mxu0 0
    %1131 = vmatpush1.bf16.msra.mxu0 0
    %1132 = vmatprep.mubr.bf16.mxu0 0
    %1133 = vmatmul.mubr.bf16.gmra.mrb[0].mxu0 %v1098
    %v1134 = vpop.f32.mrb[0].mxu0
    %v1135 = vadd.f32 0.0, %v1134
    %v1136 = vpop.f32.mrb[0].mxu0
    %v1137 = vpop.f32.mrb[0].mxu0
    %v1138 = vpop.f32.mrb[0].mxu0
    %1139 = vdwg.mxu0
    %v1140 = vadd.f32 %v1092, %v1135
    %v1141 = vtanh.pop %v1091
    %v1142 = vadd.f32 %v1141, 1.0
    %v1143 = vmul.f32 %v1142, 0.5
    %v1144 = vmul.f32 %v1143, %v1004
    %1146 = vrot.lane.b32.xlu0 %v1141, 64
    %v1147 = vpop.permute.xlu0 %1146
    %v1149 = vmul.f32 %v1143, %v1147
    %1151 = vrot.lane.b32.xlu0 %v1149, 32
    %v1152 = vpop.permute.xlu0 %1151
    %v1154 = vadd.f32 %v1144, %v1152
    %v1155 = vtanh.pop %v1154
    %1157 = vrot.lane.b32.xlu0 %v1155, 64
    %v1158 = vpop.permute.xlu0 %1157
    %v1160 = vmul.f32 %v1143, %v1158
    %v1161 = vtanh.pop %v1140
    %v1162 = vadd.f32 %v1161, 1.0
    %v1163 = vmul.f32 %v1162, 0.5
    %v1164 = vmul.f32 %v1163, %v1024
    %1166 = vrot.lane.b32.xlu0 %v1161, 64
    %v1167 = vpop.permute.xlu0 %1166
    %v1169 = vmul.f32 %v1163, %v1167
    %1171 = vrot.lane.b32.xlu0 %v1169, 32
    %v1172 = vpop.permute.xlu0 %1171
    %v1174 = vadd.f32 %v1164, %v1172
    %v1175 = vtanh.pop %v1174
    %1177 = vrot.lane.b32.xlu0 %v1175, 64
    %v1178 = vpop.permute.xlu0 %1177
    %v1180 = vmul.f32 %v1163, %v1178
    %1182 = vrot.lane.b32.xlu0 %v1160, 32
    %v1183 = vpop.permute.xlu0 %1182
    %s1185 = scalar_lea.vmem [#allocation3], 32
    %1186 = vst.msk [vmem:[%s1185] sm:$0xff] %vm422, %v1183
    %1188 = vrot.lane.b32.xlu0 %v1180, 32
    %v1189 = vpop.permute.xlu0 %1188
    %s1191 = scalar_lea.vmem [#allocation4], 24
    %1192 = vst.msk [vmem:[%s1191] sm:$0xff] %vm422, %v1189
    %v1193 = vld [vmem:[%s785] sm:$0xff]
    %v1194 = vpack.c.bf16 %v1160, %v1160
    %1196 = vrot.lane.b32.xlu0 %v1194, 32
    %v1197 = vpop.permute.xlu0 %1196
    %v1199 = vsel %vm422, %v1197, 0
    %1201 = vmatprep.subr.bf16.mxu0 0
    %1202 = vmatpush1.bf16.msra.mxu0 %v418
    %1203 = vmatprep.subr.bf16.mxu0 0
    %1204 = vmatpush1.bf16.msra.mxu0 %v419
    %1205 = vmatprep.subr.bf16.mxu0 0
    %1206 = vmatpush1.bf16.msra.mxu0 0
    %1207 = vmatprep.subr.bf16.mxu0 0
    %1208 = vmatpush1.bf16.msra.mxu0 0
    %1209 = vmatprep.subr.bf16.mxu0 0
    %1210 = vmatpush1.bf16.msra.mxu0 0
    %1211 = vmatprep.subr.bf16.mxu0 0
    %1212 = vmatpush1.bf16.msra.mxu0 0
    %1213 = vmatprep.subr.bf16.mxu0 0
    %1214 = vmatpush1.bf16.msra.mxu0 0
    %1215 = vmatprep.subr.bf16.mxu0 0
    %1216 = vmatpush1.bf16.msra.mxu0 0
    %1217 = vmatprep.subr.bf16.mxu0 0
    %1218 = vmatpush1.bf16.msra.mxu0 0
    %1219 = vmatprep.subr.bf16.mxu0 0
    %1220 = vmatpush1.bf16.msra.mxu0 0
    %1221 = vmatprep.subr.bf16.mxu0 0
    %1222 = vmatpush1.bf16.msra.mxu0 0
    %1223 = vmatprep.subr.bf16.mxu0 0
    %1224 = vmatpush1.bf16.msra.mxu0 0
    %1225 = vmatprep.subr.bf16.mxu0 0
    %1226 = vmatpush1.bf16.msra.mxu0 0
    %1227 = vmatprep.subr.bf16.mxu0 0
    %1228 = vmatpush1.bf16.msra.mxu0 0
    %1229 = vmatprep.subr.bf16.mxu0 0
    %1230 = vmatpush1.bf16.msra.mxu0 0
    %1231 = vmatprep.subr.bf16.mxu0 0
    %1232 = vmatpush1.bf16.msra.mxu0 0
    %1233 = vmatprep.mubr.bf16.mxu0 0
    %1234 = vmatmul.mubr.bf16.gmra.mrb[0].mxu0 %v1199
    %v1235 = vpop.f32.mrb[0].mxu0
    %v1236 = vadd.f32 0.0, %v1235
    %v1237 = vpop.f32.mrb[0].mxu0
    %v1238 = vpop.f32.mrb[0].mxu0
    %v1239 = vpop.f32.mrb[0].mxu0
    %1240 = vdwg.mxu0
    %v1241 = vadd.f32 %v1193, %v1236
    %v1242 = vld [vmem:[%s733 + $0x8] sm:$0xff]
    %v1243 = vpack.c.bf16 %v1180, %v1180
    %1245 = vrot.lane.b32.xlu0 %v1243, 32
    %v1246 = vpop.permute.xlu0 %1245
    %v1248 = vsel %vm422, %v1246, 0
    %1250 = vmatprep.subr.bf16.mxu0 0
    %1251 = vmatpush1.bf16.msra.mxu0 %v479
    %1252 = vmatprep.subr.bf16.mxu0 0
    %1253 = vmatpush1.bf16.msra.mxu0 %v480
    %1254 = vmatprep.subr.bf16.mxu0 0
    %1255 = vmatpush1.bf16.msra.mxu0 0
    %1256 = vmatprep.subr.bf16.mxu0 0
    %1257 = vmatpush1.bf16.msra.mxu0 0
    %1258 = vmatprep.subr.bf16.mxu0 0
    %1259 = vmatpush1.bf16.msra.mxu0 0
    %1260 = vmatprep.subr.bf16.mxu0 0
    %1261 = vmatpush1.bf16.msra.mxu0 0
    %1262 = vmatprep.subr.bf16.mxu0 0
    %1263 = vmatpush1.bf16.msra.mxu0 0
    %1264 = vmatprep.subr.bf16.mxu0 0
    %1265 = vmatpush1.bf16.msra.mxu0 0
    %1266 = vmatprep.subr.bf16.mxu0 0
    %1267 = vmatpush1.bf16.msra.mxu0 0
    %1268 = vmatprep.subr.bf16.mxu0 0
    %1269 = vmatpush1.bf16.msra.mxu0 0
    %1270 = vmatprep.subr.bf16.mxu0 0
    %1271 = vmatpush1.bf16.msra.mxu0 0
    %1272 = vmatprep.subr.bf16.mxu0 0
    %1273 = vmatpush1.bf16.msra.mxu0 0
    %1274 = vmatprep.subr.bf16.mxu0 0
    %1275 = vmatpush1.bf16.msra.mxu0 0
    %1276 = vmatprep.subr.bf16.mxu0 0
    %1277 = vmatpush1.bf16.msra.mxu0 0
    %1278 = vmatprep.subr.bf16.mxu0 0
    %1279 = vmatpush1.bf16.msra.mxu0 0
    %1280 = vmatprep.subr.bf16.mxu0 0
    %1281 = vmatpush1.bf16.msra.mxu0 0
    %1282 = vmatprep.mubr.bf16.mxu0 0
    %1283 = vmatmul.mubr.bf16.gmra.mrb[0].mxu0 %v1248
    %v1284 = vpop.f32.mrb[0].mxu0
    %v1285 = vadd.f32 0.0, %v1284
    %v1286 = vpop.f32.mrb[0].mxu0
    %v1287 = vpop.f32.mrb[0].mxu0
    %v1288 = vpop.f32.mrb[0].mxu0
    %1289 = vdwg.mxu0
    %v1290 = vadd.f32 %v1242, %v1285
    %v1291 = vtanh.pop %v1241
    %v1292 = vadd.f32 %v1291, 1.0
    %v1293 = vmul.f32 %v1292, 0.5
    %v1294 = vmul.f32 %v1293, %v1154
    %1296 = vrot.lane.b32.xlu0 %v1291, 64
    %v1297 = vpop.permute.xlu0 %1296
    %v1299 = vmul.f32 %v1293, %v1297
    %1301 = vrot.lane.b32.xlu0 %v1299, 32
    %v1302 = vpop.permute.xlu0 %1301
    %v1304 = vadd.f32 %v1294, %v1302
    %v1305 = vtanh.pop %v1304
    %1307 = vrot.lane.b32.xlu0 %v1305, 64
    %v1308 = vpop.permute.xlu0 %1307
    %v1310 = vmul.f32 %v1293, %v1308
    %v1311 = vtanh.pop %v1290
    %v1312 = vadd.f32 %v1311, 1.0
    %v1313 = vmul.f32 %v1312, 0.5
    %v1314 = vmul.f32 %v1313, %v1174
    %1316 = vrot.lane.b32.xlu0 %v1311, 64
    %v1317 = vpop.permute.xlu0 %1316
    %v1319 = vmul.f32 %v1313, %v1317
    %1321 = vrot.lane.b32.xlu0 %v1319, 32
    %v1322 = vpop.permute.xlu0 %1321
    %v1324 = vadd.f32 %v1314, %v1322
    %v1325 = vtanh.pop %v1324
    %1327 = vrot.lane.b32.xlu0 %v1325, 64
    %v1328 = vpop.permute.xlu0 %1327
    %v1330 = vmul.f32 %v1313, %v1328
    %1332 = vrot.lane.b32.xlu0 %v1310, 32
    %v1333 = vpop.permute.xlu0 %1332
    %s1335 = scalar_lea.vmem [#allocation3], 40
    %1336 = vst.msk [vmem:[%s1335] sm:$0xff] %vm422, %v1333
    %1338 = vrot.lane.b32.xlu0 %v1330, 32
    %v1339 = vpop.permute.xlu0 %1338
    %s1341 = scalar_lea.vmem [#allocation4], 16
    %1342 = vst.msk [vmem:[%s1341] sm:$0xff] %vm422, %v1339
    %v1343 = vld [vmem:[%s629] sm:$0xff]
    %v1344 = vpack.c.bf16 %v1310, %v1310
    %1346 = vrot.lane.b32.xlu0 %v1344, 32
    %v1347 = vpop.permute.xlu0 %1346
    %v1349 = vsel %vm422, %v1347, 0
    %1351 = vmatprep.subr.bf16.mxu0 0
    %1352 = vmatpush1.bf16.msra.mxu0 %v418
    %1353 = vmatprep.subr.bf16.mxu0 0
    %1354 = vmatpush1.bf16.msra.mxu0 %v419
    %1355 = vmatprep.subr.bf16.mxu0 0
    %1356 = vmatpush1.bf16.msra.mxu0 0
    %1357 = vmatprep.subr.bf16.mxu0 0
    %1358 = vmatpush1.bf16.msra.mxu0 0
    %1359 = vmatprep.subr.bf16.mxu0 0
    %1360 = vmatpush1.bf16.msra.mxu0 0
    %1361 = vmatprep.subr.bf16.mxu0 0
    %1362 = vmatpush1.bf16.msra.mxu0 0
    %1363 = vmatprep.subr.bf16.mxu0 0
    %1364 = vmatpush1.bf16.msra.mxu0 0
    %1365 = vmatprep.subr.bf16.mxu0 0
    %1366 = vmatpush1.bf16.msra.mxu0 0
    %1367 = vmatprep.subr.bf16.mxu0 0
    %1368 = vmatpush1.bf16.msra.mxu0 0
    %1369 = vmatprep.subr.bf16.mxu0 0
    %1370 = vmatpush1.bf16.msra.mxu0 0
    %1371 = vmatprep.subr.bf16.mxu0 0
    %1372 = vmatpush1.bf16.msra.mxu0 0
    %1373 = vmatprep.subr.bf16.mxu0 0
    %1374 = vmatpush1.bf16.msra.mxu0 0
    %1375 = vmatprep.subr.bf16.mxu0 0
    %1376 = vmatpush1.bf16.msra.mxu0 0
    %1377 = vmatprep.subr.bf16.mxu0 0
    %1378 = vmatpush1.bf16.msra.mxu0 0
    %1379 = vmatprep.subr.bf16.mxu0 0
    %1380 = vmatpush1.bf16.msra.mxu0 0
    %1381 = vmatprep.subr.bf16.mxu0 0
    %1382 = vmatpush1.bf16.msra.mxu0 0
    %1383 = vmatprep.mubr.bf16.mxu0 0
    %1384 = vmatmul.mubr.bf16.gmra.mrb[0].mxu0 %v1349
    %v1385 = vpop.f32.mrb[0].mxu0
    %v1386 = vadd.f32 0.0, %v1385
    %v1387 = vpop.f32.mrb[0].mxu0
    %v1388 = vpop.f32.mrb[0].mxu0
    %v1389 = vpop.f32.mrb[0].mxu0
    %1390 = vdwg.mxu0
    %v1391 = vadd.f32 %v1343, %v1386
    %v1392 = vld [vmem:[%s577 + $0x8] sm:$0xff]
    %v1393 = vpack.c.bf16 %v1330, %v1330
    %1395 = vrot.lane.b32.xlu0 %v1393, 32
    %v1396 = vpop.permute.xlu0 %1395
    %v1398 = vsel %vm422, %v1396, 0
    %1400 = vmatprep.subr.bf16.mxu0 0
    %1401 = vmatpush1.bf16.msra.mxu0 %v479
    %1402 = vmatprep.subr.bf16.mxu0 0
    %1403 = vmatpush1.bf16.msra.mxu0 %v480
    %1404 = vmatprep.subr.bf16.mxu0 0
    %1405 = vmatpush1.bf16.msra.mxu0 0
    %1406 = vmatprep.subr.bf16.mxu0 0
    %1407 = vmatpush1.bf16.msra.mxu0 0
    %1408 = vmatprep.subr.bf16.mxu0 0
    %1409 = vmatpush1.bf16.msra.mxu0 0
    %1410 = vmatprep.subr.bf16.mxu0 0
    %1411 = vmatpush1.bf16.msra.mxu0 0
    %1412 = vmatprep.subr.bf16.mxu0 0
    %1413 = vmatpush1.bf16.msra.mxu0 0
    %1414 = vmatprep.subr.bf16.mxu0 0
    %1415 = vmatpush1.bf16.msra.mxu0 0
    %1416 = vmatprep.subr.bf16.mxu0 0
    %1417 = vmatpush1.bf16.msra.mxu0 0
    %1418 = vmatprep.subr.bf16.mxu0 0
    %1419 = vmatpush1.bf16.msra.mxu0 0
    %1420 = vmatprep.subr.bf16.mxu0 0
    %1421 = vmatpush1.bf16.msra.mxu0 0
    %1422 = vmatprep.subr.bf16.mxu0 0
    %1423 = vmatpush1.bf16.msra.mxu0 0
    %1424 = vmatprep.subr.bf16.mxu0 0
    %1425 = vmatpush1.bf16.msra.mxu0 0
    %1426 = vmatprep.subr.bf16.mxu0 0
    %1427 = vmatpush1.bf16.msra.mxu0 0
    %1428 = vmatprep.subr.bf16.mxu0 0
    %1429 = vmatpush1.bf16.msra.mxu0 0
    %1430 = vmatprep.subr.bf16.mxu0 0
    %1431 = vmatpush1.bf16.msra.mxu0 0
    %1432 = vmatprep.mubr.bf16.mxu0 0
    %1433 = vmatmul.mubr.bf16.gmra.mrb[0].mxu0 %v1398
    %v1434 = vpop.f32.mrb[0].mxu0
    %v1435 = vadd.f32 0.0, %v1434
    %v1436 = vpop.f32.mrb[0].mxu0
    %v1437 = vpop.f32.mrb[0].mxu0
    %v1438 = vpop.f32.mrb[0].mxu0
    %1439 = vdwg.mxu0
    %v1440 = vadd.f32 %v1392, %v1435
    %v1441 = vtanh.pop %v1391
    %v1442 = vadd.f32 %v1441, 1.0
    %v1443 = vmul.f32 %v1442, 0.5
    %v1444 = vmul.f32 %v1443, %v1304
    %1446 = vrot.lane.b32.xlu0 %v1441, 64
    %v1447 = vpop.permute.xlu0 %1446
    %v1449 = vmul.f32 %v1443, %v1447
    %1451 = vrot.lane.b32.xlu0 %v1449, 32
    %v1452 = vpop.permute.xlu0 %1451
    %v1454 = vadd.f32 %v1444, %v1452
    %v1455 = vtanh.pop %v1454
    %1457 = vrot.lane.b32.xlu0 %v1455, 64
    %v1458 = vpop.permute.xlu0 %1457
    %v1460 = vmul.f32 %v1443, %v1458
    %v1461 = vtanh.pop %v1440
    %v1462 = vadd.f32 %v1461, 1.0
    %v1463 = vmul.f32 %v1462, 0.5
    %v1464 = vmul.f32 %v1463, %v1324
    %1466 = vrot.lane.b32.xlu0 %v1461, 64
    %v1467 = vpop.permute.xlu0 %1466
    %v1469 = vmul.f32 %v1463, %v1467
    %1471 = vrot.lane.b32.xlu0 %v1469, 32
    %v1472 = vpop.permute.xlu0 %1471
    %v1474 = vadd.f32 %v1464, %v1472
    %v1475 = vtanh.pop %v1474
    %1477 = vrot.lane.b32.xlu0 %v1475, 64
    %v1478 = vpop.permute.xlu0 %1477
    %v1480 = vmul.f32 %v1463, %v1478
    %1482 = vrot.lane.b32.xlu0 %v1460, 32
    %v1483 = vpop.permute.xlu0 %1482
    %s1485 = scalar_lea.vmem [#allocation3], 48
    %1486 = vst.msk [vmem:[%s1485] sm:$0xff] %vm422, %v1483
    %1488 = vrot.lane.b32.xlu0 %v1480, 32
    %v1489 = vpop.permute.xlu0 %1488
    %s1491 = scalar_lea.vmem [#allocation4], 8
    %1492 = vst.msk [vmem:[%s1491] sm:$0xff] %vm422, %v1489
    %v1493 = vld [vmem:[%s469] sm:$0xff]
    %v1494 = vpack.c.bf16 %v1460, %v1460
    %1496 = vrot.lane.b32.xlu0 %v1494, 32
    %v1497 = vpop.permute.xlu0 %1496
    %v1499 = vsel %vm422, %v1497, 0
    %1501 = vmatprep.subr.bf16.mxu0 0
    %1502 = vmatpush1.bf16.msra.mxu0 %v418
    %1503 = vmatprep.subr.bf16.mxu0 0
    %1504 = vmatpush1.bf16.msra.mxu0 %v419
    %1505 = vmatprep.subr.bf16.mxu0 0
    %1506 = vmatpush1.bf16.msra.mxu0 0
    %1507 = vmatprep.subr.bf16.mxu0 0
    %1508 = vmatpush1.bf16.msra.mxu0 0
    %1509 = vmatprep.subr.bf16.mxu0 0
    %1510 = vmatpush1.bf16.msra.mxu0 0
    %1511 = vmatprep.subr.bf16.mxu0 0
    %1512 = vmatpush1.bf16.msra.mxu0 0
    %1513 = vmatprep.subr.bf16.mxu0 0
    %1514 = vmatpush1.bf16.msra.mxu0 0
    %1515 = vmatprep.subr.bf16.mxu0 0
    %1516 = vmatpush1.bf16.msra.mxu0 0
    %1517 = vmatprep.subr.bf16.mxu0 0
    %1518 = vmatpush1.bf16.msra.mxu0 0
    %1519 = vmatprep.subr.bf16.mxu0 0
    %1520 = vmatpush1.bf16.msra.mxu0 0
    %1521 = vmatprep.subr.bf16.mxu0 0
    %1522 = vmatpush1.bf16.msra.mxu0 0
    %1523 = vmatprep.subr.bf16.mxu0 0
    %1524 = vmatpush1.bf16.msra.mxu0 0
    %1525 = vmatprep.subr.bf16.mxu0 0
    %1526 = vmatpush1.bf16.msra.mxu0 0
    %1527 = vmatprep.subr.bf16.mxu0 0
    %1528 = vmatpush1.bf16.msra.mxu0 0
    %1529 = vmatprep.subr.bf16.mxu0 0
    %1530 = vmatpush1.bf16.msra.mxu0 0
    %1531 = vmatprep.subr.bf16.mxu0 0
    %1532 = vmatpush1.bf16.msra.mxu0 0
    %1533 = vmatprep.mubr.bf16.mxu0 0
    %1534 = vmatmul.mubr.bf16.gmra.mrb[0].mxu0 %v1499
    %v1535 = vpop.f32.mrb[0].mxu0
    %v1536 = vadd.f32 0.0, %v1535
    %v1537 = vpop.f32.mrb[0].mxu0
    %v1538 = vpop.f32.mrb[0].mxu0
    %v1539 = vpop.f32.mrb[0].mxu0
    %1540 = vdwg.mxu0
    %v1541 = vadd.f32 %v1493, %v1536
    %v1542 = vld [vmem:[%s408 + $0x8] sm:$0xff]
    %v1543 = vpack.c.bf16 %v1480, %v1480
    %1545 = vrot.lane.b32.xlu0 %v1543, 32
    %v1546 = vpop.permute.xlu0 %1545
    %v1548 = vsel %vm422, %v1546, 0
    %1550 = vmatprep.subr.bf16.mxu0 0
    %1551 = vmatpush1.bf16.msra.mxu0 %v479
    %1552 = vmatprep.subr.bf16.mxu0 0
    %1553 = vmatpush1.bf16.msra.mxu0 %v480
    %1554 = vmatprep.subr.bf16.mxu0 0
    %1555 = vmatpush1.bf16.msra.mxu0 0
    %1556 = vmatprep.subr.bf16.mxu0 0
    %1557 = vmatpush1.bf16.msra.mxu0 0
    %1558 = vmatprep.subr.bf16.mxu0 0
    %1559 = vmatpush1.bf16.msra.mxu0 0
    %1560 = vmatprep.subr.bf16.mxu0 0
    %1561 = vmatpush1.bf16.msra.mxu0 0
    %1562 = vmatprep.subr.bf16.mxu0 0
    %1563 = vmatpush1.bf16.msra.mxu0 0
    %1564 = vmatprep.subr.bf16.mxu0 0
    %1565 = vmatpush1.bf16.msra.mxu0 0
    %1566 = vmatprep.subr.bf16.mxu0 0
    %1567 = vmatpush1.bf16.msra.mxu0 0
    %1568 = vmatprep.subr.bf16.mxu0 0
    %1569 = vmatpush1.bf16.msra.mxu0 0
    %1570 = vmatprep.subr.bf16.mxu0 0
    %1571 = vmatpush1.bf16.msra.mxu0 0
    %1572 = vmatprep.subr.bf16.mxu0 0
    %1573 = vmatpush1.bf16.msra.mxu0 0
    %1574 = vmatprep.subr.bf16.mxu0 0
    %1575 = vmatpush1.bf16.msra.mxu0 0
    %1576 = vmatprep.subr.bf16.mxu0 0
    %1577 = vmatpush1.bf16.msra.mxu0 0
    %1578 = vmatprep.subr.bf16.mxu0 0
    %1579 = vmatpush1.bf16.msra.mxu0 0
    %1580 = vmatprep.subr.bf16.mxu0 0
    %1581 = vmatpush1.bf16.msra.mxu0 0
    %1582 = vmatprep.mubr.bf16.mxu0 0
    %1583 = vmatmul.mubr.bf16.gmra.mrb[0].mxu0 %v1548
    %v1584 = vpop.f32.mrb[0].mxu0
    %v1585 = vadd.f32 0.0, %v1584
    %v1586 = vpop.f32.mrb[0].mxu0
    %v1587 = vpop.f32.mrb[0].mxu0
    %v1588 = vpop.f32.mrb[0].mxu0
    %1589 = vdwg.mxu0
    %v1590 = vadd.f32 %v1542, %v1585
    %v1591 = vtanh.pop %v1541
    %v1592 = vadd.f32 %v1591, 1.0
    %v1593 = vmul.f32 %v1592, 0.5
    %v1594 = vmul.f32 %v1593, %v1454
    %1596 = vrot.lane.b32.xlu0 %v1591, 64
    %v1597 = vpop.permute.xlu0 %1596
    %v1599 = vmul.f32 %v1593, %v1597
    %1601 = vrot.lane.b32.xlu0 %v1599, 32
    %v1602 = vpop.permute.xlu0 %1601
    %v1604 = vadd.f32 %v1594, %v1602
    %v1605 = vtanh.pop %v1604
    %1607 = vrot.lane.b32.xlu0 %v1605, 64
    %v1608 = vpop.permute.xlu0 %1607
    %v1610 = vmul.f32 %v1593, %v1608
    %v1611 = vtanh.pop %v1590
    %v1612 = vadd.f32 %v1611, 1.0
    %v1613 = vmul.f32 %v1612, 0.5
    %v1614 = vmul.f32 %v1613, %v1474
    %1616 = vrot.lane.b32.xlu0 %v1611, 64
    %v1617 = vpop.permute.xlu0 %1616
    %v1619 = vmul.f32 %v1613, %v1617
    %1621 = vrot.lane.b32.xlu0 %v1619, 32
    %v1622 = vpop.permute.xlu0 %1621
    %v1624 = vadd.f32 %v1614, %v1622
    %v1625 = vtanh.pop %v1624
    %1627 = vrot.lane.b32.xlu0 %v1625, 64
    %v1628 = vpop.permute.xlu0 %1627
    %v1630 = vmul.f32 %v1613, %v1628
    %1632 = vrot.lane.b32.xlu0 %v1610, 32
    %v1633 = vpop.permute.xlu0 %1632
    %s1635 = scalar_lea.vmem [#allocation3], 56
    %1636 = vst.msk [vmem:[%s1635] sm:$0xff] %vm422, %v1633
    %1638 = vrot.lane.b32.xlu0 %v1630, 32
    %v1639 = vpop.permute.xlu0 %1638
    %1641 = vst.msk [vmem:[#allocation4] sm:$0xff] %vm422, %v1639
    %v1642 = vld [vmem:[#allocation3] sm:$0xff]
    %v1643 = vld [vmem:[#allocation3 + $0x8] sm:$0xff]
    %v1644 = vld [vmem:[#allocation3 + $0x10] sm:$0xff]
    %v1645 = vld [vmem:[#allocation3 + $0x18] sm:$0xff]
    %v1646 = vld [vmem:[#allocation3 + $0x20] sm:$0xff]
    %v1647 = vld [vmem:[#allocation3 + $0x28] sm:$0xff]
    %v1648 = vld [vmem:[#allocation3 + $0x30] sm:$0xff]
    %v1649 = vld [vmem:[#allocation3 + $0x38] sm:$0xff]
    %v1650 = vpack.c.bf16 %v1643, %v1642
    %v1651 = vpack.c.bf16 %v1645, %v1644
    %v1652 = vpack.c.bf16 %v1647, %v1646
    %v1653 = vpack.c.bf16 %v1649, %v1648
    %v1654 = vld [vmem:[#allocation10] sm:$0xf]
    %v1655 = vld [vmem:[#allocation10 + $0x4] sm:$0xf]
    %v1656 = vld [vmem:[#allocation10 + $0x8] sm:$0xf]
    %v1657 = vld [vmem:[#allocation10 + $0xc] sm:$0xf]
    %v1658 = vld [vmem:[#allocation4] sm:$0xff]
    %v1659 = vld [vmem:[#allocation4 + $0x8] sm:$0xff]
    %v1660 = vld [vmem:[#allocation4 + $0x10] sm:$0xff]
    %v1661 = vld [vmem:[#allocation4 + $0x18] sm:$0xff]
    %v1662 = vld [vmem:[#allocation4 + $0x20] sm:$0xff]
    %v1663 = vld [vmem:[#allocation4 + $0x28] sm:$0xff]
    %v1664 = vld [vmem:[#allocation4 + $0x30] sm:$0xff]
    %v1665 = vld [vmem:[#allocation4 + $0x38] sm:$0xff]
    %v1666 = vpack.c.bf16 %v1659, %v1658
    %v1667 = vpack.c.bf16 %v1661, %v1660
    %v1668 = vpack.c.bf16 %v1663, %v1662
    %v1669 = vpack.c.bf16 %v1665, %v1664
    %v1670 = vld [vmem:[#allocation12] sm:$0xf]
    %v1671 = vld [vmem:[#allocation12 + $0x4] sm:$0xf]
    %v1672 = vld [vmem:[#allocation12 + $0x8] sm:$0xf]
    %v1673 = vld [vmem:[#allocation12 + $0xc] sm:$0xf]
    %v1678 = vunpack.c.l.b16 %v1670
    %v1679 = vunpack.c.l.b16 %v1671
    %v1680 = vunpack.c.l.b16 %v1672
    %v1681 = vunpack.c.l.b16 %v1673
    %v1682 = vpack.c.b16 %v1679, %v1678
    %v1683 = vpack.c.b16 %v1681, %v1680
    %v1687 = vsel %vm422, %v1666, 0
    %v1690 = vsel %vm422, %v1667, 0
    %v1693 = vsel %vm422, %v1668, 0
    %v1696 = vsel %vm422, %v1669, 0
    %1698 = vmatprep.subr.bf16.mxu0 0
    %1699 = vmatpush1.bf16.msra.mxu0 %v1682
    %1700 = vmatprep.subr.bf16.mxu0 0
    %1701 = vmatpush1.bf16.msra.mxu0 %v1683
    %1702 = vmatprep.subr.bf16.mxu0 0
    %1703 = vmatpush1.bf16.msra.mxu0 0
    %1704 = vmatprep.subr.bf16.mxu0 0
    %1705 = vmatpush1.bf16.msra.mxu0 0
    %1706 = vmatprep.subr.bf16.mxu0 0
    %1707 = vmatpush1.bf16.msra.mxu0 0
    %1708 = vmatprep.subr.bf16.mxu0 0
    %1709 = vmatpush1.bf16.msra.mxu0 0
    %1710 = vmatprep.subr.bf16.mxu0 0
    %1711 = vmatpush1.bf16.msra.mxu0 0
    %1712 = vmatprep.subr.bf16.mxu0 0
    %1713 = vmatpush1.bf16.msra.mxu0 0
    %1714 = vmatprep.subr.bf16.mxu0 0
    %1715 = vmatpush1.bf16.msra.mxu0 0
    %1716 = vmatprep.subr.bf16.mxu0 0
    %1717 = vmatpush1.bf16.msra.mxu0 0
    %1718 = vmatprep.subr.bf16.mxu0 0
    %1719 = vmatpush1.bf16.msra.mxu0 0
    %1720 = vmatprep.subr.bf16.mxu0 0
    %1721 = vmatpush1.bf16.msra.mxu0 0
    %1722 = vmatprep.subr.bf16.mxu0 0
    %1723 = vmatpush1.bf16.msra.mxu0 0
    %1724 = vmatprep.subr.bf16.mxu0 0
    %1725 = vmatpush1.bf16.msra.mxu0 0
    %1726 = vmatprep.subr.bf16.mxu0 0
    %1727 = vmatpush1.bf16.msra.mxu0 0
    %1728 = vmatprep.subr.bf16.mxu0 0
    %1729 = vmatpush1.bf16.msra.mxu0 0
    %1730 = vmatprep.mubr.bf16.mxu0 0
    %1731 = vmatmul.mubr.bf16.gmra.mrb[0].mxu0 %v1687
    %v1732 = vpop.f32.mrb[0].mxu0
    %v1733 = vadd.f32 0.0, %v1732
    %v1734 = vpop.f32.mrb[0].mxu0
    %v1735 = vpop.f32.mrb[0].mxu0
    %v1736 = vadd.f32 0.0, %v1735
    %v1737 = vpop.f32.mrb[0].mxu0
    %1738 = vmatprep.mubr.bf16.mxu0 0
    %1739 = vmatmul.mubr.bf16.gmra.mrb[0].mxu0 %v1690
    %v1740 = vpop.f32.mrb[0].mxu0
    %v1741 = vadd.f32 0.0, %v1740
    %v1742 = vpop.f32.mrb[0].mxu0
    %v1743 = vpop.f32.mrb[0].mxu0
    %v1744 = vadd.f32 0.0, %v1743
    %v1745 = vpop.f32.mrb[0].mxu0
    %1746 = vmatprep.mubr.bf16.mxu0 0
    %1747 = vmatmul.mubr.bf16.gmra.mrb[0].mxu0 %v1693
    %v1748 = vpop.f32.mrb[0].mxu0
    %v1749 = vadd.f32 0.0, %v1748
    %v1750 = vpop.f32.mrb[0].mxu0
    %v1751 = vpop.f32.mrb[0].mxu0
    %v1752 = vadd.f32 0.0, %v1751
    %v1753 = vpop.f32.mrb[0].mxu0
    %1754 = vmatprep.mubr.bf16.mxu0 0
    %1755 = vmatmul.mubr.bf16.gmra.mrb[0].mxu0 %v1696
    %v1756 = vpop.f32.mrb[0].mxu0
    %v1757 = vadd.f32 0.0, %v1756
    %v1758 = vpop.f32.mrb[0].mxu0
    %v1759 = vpop.f32.mrb[0].mxu0
    %v1760 = vadd.f32 0.0, %v1759
    %v1761 = vpop.f32.mrb[0].mxu0
    %1762 = vdwg.mxu0
    %v1767 = vunpack.c.l.b16 %v1654
    %v1768 = vunpack.c.l.b16 %v1655
    %v1769 = vunpack.c.l.b16 %v1656
    %v1770 = vunpack.c.l.b16 %v1657
    %v1771 = vpack.c.b16 %v1768, %v1767
    %v1772 = vpack.c.b16 %v1770, %v1769
    %v1776 = vsel %vm422, %v1650, 0
    %v1779 = vsel %vm422, %v1651, 0
    %v1782 = vsel %vm422, %v1652, 0
    %v1785 = vsel %vm422, %v1653, 0
    %1787 = vmatprep.subr.bf16.mxu0 0
    %1788 = vmatpush1.bf16.msra.mxu0 %v1771
    %1789 = vmatprep.subr.bf16.mxu0 0
    %1790 = vmatpush1.bf16.msra.mxu0 %v1772
    %1791 = vmatprep.subr.bf16.mxu0 0
    %1792 = vmatpush1.bf16.msra.mxu0 0
    %1793 = vmatprep.subr.bf16.mxu0 0
    %1794 = vmatpush1.bf16.msra.mxu0 0
    %1795 = vmatprep.subr.bf16.mxu0 0
    %1796 = vmatpush1.bf16.msra.mxu0 0
    %1797 = vmatprep.subr.bf16.mxu0 0
    %1798 = vmatpush1.bf16.msra.mxu0 0
    %1799 = vmatprep.subr.bf16.mxu0 0
    %1800 = vmatpush1.bf16.msra.mxu0 0
    %1801 = vmatprep.subr.bf16.mxu0 0
    %1802 = vmatpush1.bf16.msra.mxu0 0
    %1803 = vmatprep.subr.bf16.mxu0 0
    %1804 = vmatpush1.bf16.msra.mxu0 0
    %1805 = vmatprep.subr.bf16.mxu0 0
    %1806 = vmatpush1.bf16.msra.mxu0 0
    %1807 = vmatprep.subr.bf16.mxu0 0
    %1808 = vmatpush1.bf16.msra.mxu0 0
    %1809 = vmatprep.subr.bf16.mxu0 0
    %1810 = vmatpush1.bf16.msra.mxu0 0
    %1811 = vmatprep.subr.bf16.mxu0 0
    %1812 = vmatpush1.bf16.msra.mxu0 0
    %1813 = vmatprep.subr.bf16.mxu0 0
    %1814 = vmatpush1.bf16.msra.mxu0 0
    %1815 = vmatprep.subr.bf16.mxu0 0
    %1816 = vmatpush1.bf16.msra.mxu0 0
    %1817 = vmatprep.subr.bf16.mxu0 0
    %1818 = vmatpush1.bf16.msra.mxu0 0
    %1819 = vmatprep.mubr.bf16.mxu0 0
    %1820 = vmatmul.mubr.bf16.gmra.mrb[0].mxu0 %v1776
    %v1821 = vpop.f32.mrb[0].mxu0
    %v1822 = vadd.f32 %v1733, %v1821
    %v1823 = vpop.f32.mrb[0].mxu0
    %v1824 = vpop.f32.mrb[0].mxu0
    %v1825 = vadd.f32 %v1736, %v1824
    %v1826 = vpop.f32.mrb[0].mxu0
    %1827 = vmatprep.mubr.bf16.mxu0 0
    %1828 = vmatmul.mubr.bf16.gmra.mrb[0].mxu0 %v1779
    %v1829 = vpop.f32.mrb[0].mxu0
    %v1830 = vadd.f32 %v1741, %v1829
    %v1831 = vpop.f32.mrb[0].mxu0
    %v1832 = vpop.f32.mrb[0].mxu0
    %v1833 = vadd.f32 %v1744, %v1832
    %v1834 = vpop.f32.mrb[0].mxu0
    %1835 = vmatprep.mubr.bf16.mxu0 0
    %1836 = vmatmul.mubr.bf16.gmra.mrb[0].mxu0 %v1782
    %v1837 = vpop.f32.mrb[0].mxu0
    %v1838 = vadd.f32 %v1749, %v1837
    %v1839 = vpop.f32.mrb[0].mxu0
    %v1840 = vpop.f32.mrb[0].mxu0
    %v1841 = vadd.f32 %v1752, %v1840
    %v1842 = vpop.f32.mrb[0].mxu0
    %1843 = vmatprep.mubr.bf16.mxu0 0
    %1844 = vmatmul.mubr.bf16.gmra.mrb[0].mxu0 %v1785
    %v1845 = vpop.f32.mrb[0].mxu0
    %v1846 = vadd.f32 %v1757, %v1845
    %v1847 = vpop.f32.mrb[0].mxu0
    %v1848 = vpop.f32.mrb[0].mxu0
    %v1849 = vadd.f32 %v1760, %v1848
    %v1850 = vpop.f32.mrb[0].mxu0
    %1851 = vdwg.mxu0
    %v1852 = vld [vmem:[%s8] sm:$0x1]
    %v1854 = vlaneseq
    %v1855 = vshrl.u32 %v1854, 7
    %v1856 = vsub.s32 0, %v1855
    %v1857 = vrot.slane %v1852, %v1856
    %v1859 = vadd.f32 %v1822, %v1857
    %v1860 = vadd.f32 %v1825, %v1857
    %v1861 = vadd.f32 %v1830, %v1857
    %v1862 = vadd.f32 %v1833, %v1857
    %v1863 = vadd.f32 %v1838, %v1857
    %v1864 = vadd.f32 %v1841, %v1857
    %v1865 = vadd.f32 %v1846, %v1857
    %v1866 = vadd.f32 %v1849, %v1857
    %1867 = vst [vmem:[#allocation2] sm:$0xff] %v1859
    %1868 = vst [vmem:[#allocation2 + $0x10] sm:$0xff] %v1860
    %1869 = vst [vmem:[#allocation2 + $0x20] sm:$0xff] %v1861
    %1870 = vst [vmem:[#allocation2 + $0x30] sm:$0xff] %v1862
    %1871 = vst [vmem:[#allocation2 + $0x40] sm:$0xff] %v1863
    %1872 = vst [vmem:[#allocation2 + $0x50] sm:$0xff] %v1864
    %1873 = vst [vmem:[#allocation2 + $0x60] sm:$0xff] %v1865
    %1874 = vst [vmem:[#allocation2 + $0x70] sm:$0xff] %v1866
    %v1875 = vld [vmem:[#allocation13] sm:$0xf]
    %v1876 = vld [vmem:[#allocation13 + $0x4] sm:$0xf]
    %v1877 = vld [vmem:[#allocation13 + $0x8] sm:$0xf]
    %v1878 = vld [vmem:[#allocation13 + $0xc] sm:$0xf]
    %v1879 = vld [vmem:[%s408] sm:$0xff]
    %v1884 = vunpack.c.l.b16 %v1875
    %v1885 = vunpack.c.l.b16 %v1876
    %v1886 = vunpack.c.l.b16 %v1877
    %v1887 = vunpack.c.l.b16 %v1878
    %v1888 = vpack.c.b16 %v1885, %v1884
    %v1889 = vpack.c.b16 %v1887, %v1886
    %1892 = vmatprep.subr.bf16.mxu0 0
    %1893 = vmatpush1.bf16.msra.mxu0 %v1888
    %1894 = vmatprep.subr.bf16.mxu0 0
    %1895 = vmatpush1.bf16.msra.mxu0 %v1889
    %1896 = vmatprep.subr.bf16.mxu0 0
    %1897 = vmatpush1.bf16.msra.mxu0 0
    %1898 = vmatprep.subr.bf16.mxu0 0
    %1899 = vmatpush1.bf16.msra.mxu0 0
    %1900 = vmatprep.subr.bf16.mxu0 0
    %1901 = vmatpush1.bf16.msra.mxu0 0
    %1902 = vmatprep.subr.bf16.mxu0 0
    %1903 = vmatpush1.bf16.msra.mxu0 0
    %1904 = vmatprep.subr.bf16.mxu0 0
    %1905 = vmatpush1.bf16.msra.mxu0 0
    %1906 = vmatprep.subr.bf16.mxu0 0
    %1907 = vmatpush1.bf16.msra.mxu0 0
    %1908 = vmatprep.subr.bf16.mxu0 0
    %1909 = vmatpush1.bf16.msra.mxu0 0
    %1910 = vmatprep.subr.bf16.mxu0 0
    %1911 = vmatpush1.bf16.msra.mxu0 0
    %1912 = vmatprep.subr.bf16.mxu0 0
    %1913 = vmatpush1.bf16.msra.mxu0 0
    %1914 = vmatprep.subr.bf16.mxu0 0
    %1915 = vmatpush1.bf16.msra.mxu0 0
    %1916 = vmatprep.subr.bf16.mxu0 0
    %1917 = vmatpush1.bf16.msra.mxu0 0
    %1918 = vmatprep.subr.bf16.mxu0 0
    %1919 = vmatpush1.bf16.msra.mxu0 0
    %1920 = vmatprep.subr.bf16.mxu0 0
    %1921 = vmatpush1.bf16.msra.mxu0 0
    %1922 = vmatprep.subr.bf16.mxu0 0
    %1923 = vmatpush1.bf16.msra.mxu0 0
    %1924 = vmatprep.mubr.bf16.mxu0 0
    %1925 = vmatmul.mubr.bf16.gmra.mrb[0].mxu0 %v424
    %v1926 = vpop.f32.mrb[0].mxu0
    %v1927 = vadd.f32 0.0, %v1926
    %v1928 = vpop.f32.mrb[0].mxu0
    %v1929 = vpop.f32.mrb[0].mxu0
    %v1930 = vpop.f32.mrb[0].mxu0
    %1931 = vdwg.mxu0
    %v1932 = vadd.f32 %v1879, %v1927
    %v1933 = vtanh.pop %v1932
    %v1934 = vadd.f32 %v1933, 1.0
    %v1935 = vmul.f32 %v1934, 0.5
    %v1936 = vmul.f32 %v1935, 0.0
    %1938 = vrot.lane.b32.xlu0 %v1933, 64
    %v1939 = vpop.permute.xlu0 %1938
    %v1941 = vmul.f32 %v1935, %v1939
    %1943 = vrot.lane.b32.xlu0 %v1941, 32
    %v1944 = vpop.permute.xlu0 %1943
    %v1946 = vadd.f32 %v1936, %v1944
    %v1947 = vtanh.pop %v1946
    %1949 = vrot.lane.b32.xlu0 %v1947, 64
    %v1950 = vpop.permute.xlu0 %1949
    %v1952 = vmul.f32 %v1935, %v1950
    %v1953 = vld [vmem:[%s577] sm:$0xff]
    %v1954 = vpack.c.bf16 %v1952, %v1952
    %1956 = vrot.lane.b32.xlu0 %v1954, 32
    %v1957 = vpop.permute.xlu0 %1956
    %v1959 = vsel %vm422, %v1957, 0
    %1961 = vmatprep.subr.bf16.mxu0 0
    %1962 = vmatpush1.bf16.msra.mxu0 %v1888
    %1963 = vmatprep.subr.bf16.mxu0 0
    %1964 = vmatpush1.bf16.msra.mxu0 %v1889
    %1965 = vmatprep.subr.bf16.mxu0 0
    %1966 = vmatpush1.bf16.msra.mxu0 0
    %1967 = vmatprep.subr.bf16.mxu0 0
    %1968 = vmatpush1.bf16.msra.mxu0 0
    %1969 = vmatprep.subr.bf16.mxu0 0
    %1970 = vmatpush1.bf16.msra.mxu0 0
    %1971 = vmatprep.subr.bf16.mxu0 0
    %1972 = vmatpush1.bf16.msra.mxu0 0
    %1973 = vmatprep.subr.bf16.mxu0 0
    %1974 = vmatpush1.bf16.msra.mxu0 0
    %1975 = vmatprep.subr.bf16.mxu0 0
    %1976 = vmatpush1.bf16.msra.mxu0 0
    %1977 = vmatprep.subr.bf16.mxu0 0
    %1978 = vmatpush1.bf16.msra.mxu0 0
    %1979 = vmatprep.subr.bf16.mxu0 0
    %1980 = vmatpush1.bf16.msra.mxu0 0
    %1981 = vmatprep.subr.bf16.mxu0 0
    %1982 = vmatpush1.bf16.msra.mxu0 0
    %1983 = vmatprep.subr.bf16.mxu0 0
    %1984 = vmatpush1.bf16.msra.mxu0 0
    %1985 = vmatprep.subr.bf16.mxu0 0
    %1986 = vmatpush1.bf16.msra.mxu0 0
    %1987 = vmatprep.subr.bf16.mxu0 0
    %1988 = vmatpush1.bf16.msra.mxu0 0
    %1989 = vmatprep.subr.bf16.mxu0 0
    %1990 = vmatpush1.bf16.msra.mxu0 0
    %1991 = vmatprep.subr.bf16.mxu0 0
    %1992 = vmatpush1.bf16.msra.mxu0 0
    %1993 = vmatprep.mubr.bf16.mxu0 0
    %1994 = vmatmul.mubr.bf16.gmra.mrb[0].mxu0 %v1959
    %v1995 = vpop.f32.mrb[0].mxu0
    %v1996 = vadd.f32 0.0, %v1995
    %v1997 = vpop.f32.mrb[0].mxu0
    %v1998 = vpop.f32.mrb[0].mxu0
    %v1999 = vpop.f32.mrb[0].mxu0
    %2000 = vdwg.mxu0
    %v2001 = vadd.f32 %v1953, %v1996
    %v2002 = vtanh.pop %v2001
    %v2003 = vadd.f32 %v2002, 1.0
    %v2004 = vmul.f32 %v2003, 0.5
    %v2005 = vmul.f32 %v2004, %v1946
    %2007 = vrot.lane.b32.xlu0 %v2002, 64
    %v2008 = vpop.permute.xlu0 %2007
    %v2010 = vmul.f32 %v2004, %v2008
    %2012 = vrot.lane.b32.xlu0 %v2010, 32
    %v2013 = vpop.permute.xlu0 %2012
    %v2015 = vadd.f32 %v2005, %v2013
    %v2016 = vtanh.pop %v2015
    %2018 = vrot.lane.b32.xlu0 %v2016, 64
    %v2019 = vpop.permute.xlu0 %2018
    %v2021 = vmul.f32 %v2004, %v2019
    %v2022 = vld [vmem:[%s733] sm:$0xff]
    %v2023 = vpack.c.bf16 %v2021, %v2021
    %2025 = vrot.lane.b32.xlu0 %v2023, 32
    %v2026 = vpop.permute.xlu0 %2025
    %v2028 = vsel %vm422, %v2026, 0
    %2030 = vmatprep.subr.bf16.mxu0 0
    %2031 = vmatpush1.bf16.msra.mxu0 %v1888
    %2032 = vmatprep.subr.bf16.mxu0 0
    %2033 = vmatpush1.bf16.msra.mxu0 %v1889
    %2034 = vmatprep.subr.bf16.mxu0 0
    %2035 = vmatpush1.bf16.msra.mxu0 0
    %2036 = vmatprep.subr.bf16.mxu0 0
    %2037 = vmatpush1.bf16.msra.mxu0 0
    %2038 = vmatprep.subr.bf16.mxu0 0
    %2039 = vmatpush1.bf16.msra.mxu0 0
    %2040 = vmatprep.subr.bf16.mxu0 0
    %2041 = vmatpush1.bf16.msra.mxu0 0
    %2042 = vmatprep.subr.bf16.mxu0 0
    %2043 = vmatpush1.bf16.msra.mxu0 0
    %2044 = vmatprep.subr.bf16.mxu0 0
    %2045 = vmatpush1.bf16.msra.mxu0 0
    %2046 = vmatprep.subr.bf16.mxu0 0
    %2047 = vmatpush1.bf16.msra.mxu0 0
    %2048 = vmatprep.subr.bf16.mxu0 0
    %2049 = vmatpush1.bf16.msra.mxu0 0
    %2050 = vmatprep.subr.bf16.mxu0 0
    %2051 = vmatpush1.bf16.msra.mxu0 0
    %2052 = vmatprep.subr.bf16.mxu0 0
    %2053 = vmatpush1.bf16.msra.mxu0 0
    %2054 = vmatprep.subr.bf16.mxu0 0
    %2055 = vmatpush1.bf16.msra.mxu0 0
    %2056 = vmatprep.subr.bf16.mxu0 0
    %2057 = vmatpush1.bf16.msra.mxu0 0
    %2058 = vmatprep.subr.bf16.mxu0 0
    %2059 = vmatpush1.bf16.msra.mxu0 0
    %2060 = vmatprep.subr.bf16.mxu0 0
    %2061 = vmatpush1.bf16.msra.mxu0 0
    %2062 = vmatprep.mubr.bf16.mxu0 0
    %2063 = vmatmul.mubr.bf16.gmra.mrb[0].mxu0 %v2028
    %v2064 = vpop.f32.mrb[0].mxu0
    %v2065 = vadd.f32 0.0, %v2064
    %v2066 = vpop.f32.mrb[0].mxu0
    %v2067 = vpop.f32.mrb[0].mxu0
    %v2068 = vpop.f32.mrb[0].mxu0
    %2069 = vdwg.mxu0
    %v2070 = vadd.f32 %v2022, %v2065
    %v2071 = vtanh.pop %v2070
    %v2072 = vadd.f32 %v2071, 1.0
    %v2073 = vmul.f32 %v2072, 0.5
    %v2074 = vmul.f32 %v2073, %v2015
    %2076 = vrot.lane.b32.xlu0 %v2071, 64
    %v2077 = vpop.permute.xlu0 %2076
    %v2079 = vmul.f32 %v2073, %v2077
    %2081 = vrot.lane.b32.xlu0 %v2079, 32
    %v2082 = vpop.permute.xlu0 %2081
    %v2084 = vadd.f32 %v2074, %v2082
    %v2085 = vtanh.pop %v2084
    %2087 = vrot.lane.b32.xlu0 %v2085, 64
    %v2088 = vpop.permute.xlu0 %2087
    %v2090 = vmul.f32 %v2073, %v2088
    %v2091 = vld [vmem:[%s889] sm:$0xff]
    %v2092 = vpack.c.bf16 %v2090, %v2090
    %2094 = vrot.lane.b32.xlu0 %v2092, 32
    %v2095 = vpop.permute.xlu0 %2094
    %v2097 = vsel %vm422, %v2095, 0
    %2099 = vmatprep.subr.bf16.mxu0 0
    %2100 = vmatpush1.bf16.msra.mxu0 %v1888
    %2101 = vmatprep.subr.bf16.mxu0 0
    %2102 = vmatpush1.bf16.msra.mxu0 %v1889
    %2103 = vmatprep.subr.bf16.mxu0 0
    %2104 = vmatpush1.bf16.msra.mxu0 0
    %2105 = vmatprep.subr.bf16.mxu0 0
    %2106 = vmatpush1.bf16.msra.mxu0 0
    %2107 = vmatprep.subr.bf16.mxu0 0
    %2108 = vmatpush1.bf16.msra.mxu0 0
    %2109 = vmatprep.subr.bf16.mxu0 0
    %2110 = vmatpush1.bf16.msra.mxu0 0
    %2111 = vmatprep.subr.bf16.mxu0 0
    %2112 = vmatpush1.bf16.msra.mxu0 0
    %2113 = vmatprep.subr.bf16.mxu0 0
    %2114 = vmatpush1.bf16.msra.mxu0 0
    %2115 = vmatprep.subr.bf16.mxu0 0
    %2116 = vmatpush1.bf16.msra.mxu0 0
    %2117 = vmatprep.subr.bf16.mxu0 0
    %2118 = vmatpush1.bf16.msra.mxu0 0
    %2119 = vmatprep.subr.bf16.mxu0 0
    %2120 = vmatpush1.bf16.msra.mxu0 0
    %2121 = vmatprep.subr.bf16.mxu0 0
    %2122 = vmatpush1.bf16.msra.mxu0 0
    %2123 = vmatprep.subr.bf16.mxu0 0
    %2124 = vmatpush1.bf16.msra.mxu0 0
    %2125 = vmatprep.subr.bf16.mxu0 0
    %2126 = vmatpush1.bf16.msra.mxu0 0
    %2127 = vmatprep.subr.bf16.mxu0 0
    %2128 = vmatpush1.bf16.msra.mxu0 0
    %2129 = vmatprep.subr.bf16.mxu0 0
    %2130 = vmatpush1.bf16.msra.mxu0 0
    %2131 = vmatprep.mubr.bf16.mxu0 0
    %2132 = vmatmul.mubr.bf16.gmra.mrb[0].mxu0 %v2097
    %v2133 = vpop.f32.mrb[0].mxu0
    %v2134 = vadd.f32 0.0, %v2133
    %v2135 = vpop.f32.mrb[0].mxu0
    %v2136 = vpop.f32.mrb[0].mxu0
    %v2137 = vpop.f32.mrb[0].mxu0
    %2138 = vdwg.mxu0
    %v2139 = vadd.f32 %v2091, %v2134
    %v2140 = vtanh.pop %v2139
    %v2141 = vadd.f32 %v2140, 1.0
    %v2142 = vmul.f32 %v2141, 0.5
    %v2143 = vmul.f32 %v2142, %v2084
    %2145 = vrot.lane.b32.xlu0 %v2140, 64
    %v2146 = vpop.permute.xlu0 %2145
    %v2148 = vmul.f32 %v2142, %v2146
    %2150 = vrot.lane.b32.xlu0 %v2148, 32
    %v2151 = vpop.permute.xlu0 %2150
    %v2153 = vadd.f32 %v2143, %v2151
    %v2154 = vtanh.pop %v2153
    %2156 = vrot.lane.b32.xlu0 %v2154, 64
    %v2157 = vpop.permute.xlu0 %2156
    %v2159 = vmul.f32 %v2142, %v2157
    %v2160 = vld [vmem:[%s941] sm:$0xff]
    %v2161 = vpack.c.bf16 %v2159, %v2159
    %2163 = vrot.lane.b32.xlu0 %v2161, 32
    %v2164 = vpop.permute.xlu0 %2163
    %v2166 = vsel %vm422, %v2164, 0
    %2168 = vmatprep.subr.bf16.mxu0 0
    %2169 = vmatpush1.bf16.msra.mxu0 %v1888
    %2170 = vmatprep.subr.bf16.mxu0 0
    %2171 = vmatpush1.bf16.msra.mxu0 %v1889
    %2172 = vmatprep.subr.bf16.mxu0 0
    %2173 = vmatpush1.bf16.msra.mxu0 0
    %2174 = vmatprep.subr.bf16.mxu0 0
    %2175 = vmatpush1.bf16.msra.mxu0 0
    %2176 = vmatprep.subr.bf16.mxu0 0
    %2177 = vmatpush1.bf16.msra.mxu0 0
    %2178 = vmatprep.subr.bf16.mxu0 0
    %2179 = vmatpush1.bf16.msra.mxu0 0
    %2180 = vmatprep.subr.bf16.mxu0 0
    %2181 = vmatpush1.bf16.msra.mxu0 0
    %2182 = vmatprep.subr.bf16.mxu0 0
    %2183 = vmatpush1.bf16.msra.mxu0 0
    %2184 = vmatprep.subr.bf16.mxu0 0
    %2185 = vmatpush1.bf16.msra.mxu0 0
    %2186 = vmatprep.subr.bf16.mxu0 0
    %2187 = vmatpush1.bf16.msra.mxu0 0
    %2188 = vmatprep.subr.bf16.mxu0 0
    %2189 = vmatpush1.bf16.msra.mxu0 0
    %2190 = vmatprep.subr.bf16.mxu0 0
    %2191 = vmatpush1.bf16.msra.mxu0 0
    %2192 = vmatprep.subr.bf16.mxu0 0
    %2193 = vmatpush1.bf16.msra.mxu0 0
    %2194 = vmatprep.subr.bf16.mxu0 0
    %2195 = vmatpush1.bf16.msra.mxu0 0
    %2196 = vmatprep.subr.bf16.mxu0 0
    %2197 = vmatpush1.bf16.msra.mxu0 0
    %2198 = vmatprep.subr.bf16.mxu0 0
    %2199 = vmatpush1.bf16.msra.mxu0 0
    %2200 = vmatprep.mubr.bf16.mxu0 0
    %2201 = vmatmul.mubr.bf16.gmra.mrb[0].mxu0 %v2166
    %v2202 = vpop.f32.mrb[0].mxu0
    %v2203 = vadd.f32 0.0, %v2202
    %v2204 = vpop.f32.mrb[0].mxu0
    %v2205 = vpop.f32.mrb[0].mxu0
    %v2206 = vpop.f32.mrb[0].mxu0
    %2207 = vdwg.mxu0
    %v2208 = vadd.f32 %v2160, %v2203
    %v2209 = vtanh.pop %v2208
    %v2210 = vadd.f32 %v2209, 1.0
    %v2211 = vmul.f32 %v2210, 0.5
    %v2212 = vmul.f32 %v2211, %v2153
    %2214 = vrot.lane.b32.xlu0 %v2209, 64
    %v2215 = vpop.permute.xlu0 %2214
    %v2217 = vmul.f32 %v2211, %v2215
    %2219 = vrot.lane.b32.xlu0 %v2217, 32
    %v2220 = vpop.permute.xlu0 %2219
    %v2222 = vadd.f32 %v2212, %v2220
    %v2223 = vtanh.pop %v2222
    %2225 = vrot.lane.b32.xlu0 %v2223, 64
    %v2226 = vpop.permute.xlu0 %2225
    %v2228 = vmul.f32 %v2211, %v2226
    %v2229 = vld [vmem:[%s785] sm:$0xff]
    %v2230 = vpack.c.bf16 %v2228, %v2228
    %2232 = vrot.lane.b32.xlu0 %v2230, 32
    %v2233 = vpop.permute.xlu0 %2232
    %v2235 = vsel %vm422, %v2233, 0
    %2237 = vmatprep.subr.bf16.mxu0 0
    %2238 = vmatpush1.bf16.msra.mxu0 %v1888
    %2239 = vmatprep.subr.bf16.mxu0 0
    %2240 = vmatpush1.bf16.msra.mxu0 %v1889
    %2241 = vmatprep.subr.bf16.mxu0 0
    %2242 = vmatpush1.bf16.msra.mxu0 0
    %2243 = vmatprep.subr.bf16.mxu0 0
    %2244 = vmatpush1.bf16.msra.mxu0 0
    %2245 = vmatprep.subr.bf16.mxu0 0
    %2246 = vmatpush1.bf16.msra.mxu0 0
    %2247 = vmatprep.subr.bf16.mxu0 0
    %2248 = vmatpush1.bf16.msra.mxu0 0
    %2249 = vmatprep.subr.bf16.mxu0 0
    %2250 = vmatpush1.bf16.msra.mxu0 0
    %2251 = vmatprep.subr.bf16.mxu0 0
    %2252 = vmatpush1.bf16.msra.mxu0 0
    %2253 = vmatprep.subr.bf16.mxu0 0
    %2254 = vmatpush1.bf16.msra.mxu0 0
    %2255 = vmatprep.subr.bf16.mxu0 0
    %2256 = vmatpush1.bf16.msra.mxu0 0
    %2257 = vmatprep.subr.bf16.mxu0 0
    %2258 = vmatpush1.bf16.msra.mxu0 0
    %2259 = vmatprep.subr.bf16.mxu0 0
    %2260 = vmatpush1.bf16.msra.mxu0 0
    %2261 = vmatprep.subr.bf16.mxu0 0
    %2262 = vmatpush1.bf16.msra.mxu0 0
    %2263 = vmatprep.subr.bf16.mxu0 0
    %2264 = vmatpush1.bf16.msra.mxu0 0
    %2265 = vmatprep.subr.bf16.mxu0 0
    %2266 = vmatpush1.bf16.msra.mxu0 0
    %2267 = vmatprep.subr.bf16.mxu0 0
    %2268 = vmatpush1.bf16.msra.mxu0 0
    %2269 = vmatprep.mubr.bf16.mxu0 0
    %2270 = vmatmul.mubr.bf16.gmra.mrb[0].mxu0 %v2235
    %v2271 = vpop.f32.mrb[0].mxu0
    %v2272 = vadd.f32 0.0, %v2271
    %v2273 = vpop.f32.mrb[0].mxu0
    %v2274 = vpop.f32.mrb[0].mxu0
    %v2275 = vpop.f32.mrb[0].mxu0
    %2276 = vdwg.mxu0
    %v2277 = vadd.f32 %v2229, %v2272
    %v2278 = vtanh.pop %v2277
    %v2279 = vadd.f32 %v2278, 1.0
    %v2280 = vmul.f32 %v2279, 0.5
    %v2281 = vmul.f32 %v2280, %v2222
    %2283 = vrot.lane.b32.xlu0 %v2278, 64
    %v2284 = vpop.permute.xlu0 %2283
    %v2286 = vmul.f32 %v2280, %v2284
    %2288 = vrot.lane.b32.xlu0 %v2286, 32
    %v2289 = vpop.permute.xlu0 %2288
    %v2291 = vadd.f32 %v2281, %v2289
    %v2292 = vtanh.pop %v2291
    %2294 = vrot.lane.b32.xlu0 %v2292, 64
    %v2295 = vpop.permute.xlu0 %2294
    %v2297 = vmul.f32 %v2280, %v2295
    %v2298 = vld [vmem:[%s629] sm:$0xff]
    %v2299 = vpack.c.bf16 %v2297, %v2297
    %2301 = vrot.lane.b32.xlu0 %v2299, 32
    %v2302 = vpop.permute.xlu0 %2301
    %v2304 = vsel %vm422, %v2302, 0
    %2306 = vmatprep.subr.bf16.mxu0 0
    %2307 = vmatpush1.bf16.msra.mxu0 %v1888
    %2308 = vmatprep.subr.bf16.mxu0 0
    %2309 = vmatpush1.bf16.msra.mxu0 %v1889
    %2310 = vmatprep.subr.bf16.mxu0 0
    %2311 = vmatpush1.bf16.msra.mxu0 0
    %2312 = vmatprep.subr.bf16.mxu0 0
    %2313 = vmatpush1.bf16.msra.mxu0 0
    %2314 = vmatprep.subr.bf16.mxu0 0
    %2315 = vmatpush1.bf16.msra.mxu0 0
    %2316 = vmatprep.subr.bf16.mxu0 0
    %2317 = vmatpush1.bf16.msra.mxu0 0
    %2318 = vmatprep.subr.bf16.mxu0 0
    %2319 = vmatpush1.bf16.msra.mxu0 0
    %2320 = vmatprep.subr.bf16.mxu0 0
    %2321 = vmatpush1.bf16.msra.mxu0 0
    %2322 = vmatprep.subr.bf16.mxu0 0
    %2323 = vmatpush1.bf16.msra.mxu0 0
    %2324 = vmatprep.subr.bf16.mxu0 0
    %2325 = vmatpush1.bf16.msra.mxu0 0
    %2326 = vmatprep.subr.bf16.mxu0 0
    %2327 = vmatpush1.bf16.msra.mxu0 0
    %2328 = vmatprep.subr.bf16.mxu0 0
    %2329 = vmatpush1.bf16.msra.mxu0 0
    %2330 = vmatprep.subr.bf16.mxu0 0
    %2331 = vmatpush1.bf16.msra.mxu0 0
    %2332 = vmatprep.subr.bf16.mxu0 0
    %2333 = vmatpush1.bf16.msra.mxu0 0
    %2334 = vmatprep.subr.bf16.mxu0 0
    %2335 = vmatpush1.bf16.msra.mxu0 0
    %2336 = vmatprep.subr.bf16.mxu0 0
    %2337 = vmatpush1.bf16.msra.mxu0 0
    %2338 = vmatprep.mubr.bf16.mxu0 0
    %2339 = vmatmul.mubr.bf16.gmra.mrb[0].mxu0 %v2304
    %v2340 = vpop.f32.mrb[0].mxu0
    %v2341 = vadd.f32 0.0, %v2340
    %v2342 = vpop.f32.mrb[0].mxu0
    %v2343 = vpop.f32.mrb[0].mxu0
    %v2344 = vpop.f32.mrb[0].mxu0
    %2345 = vdwg.mxu0
    %v2346 = vadd.f32 %v2298, %v2341
    %v2347 = vtanh.pop %v2346
    %v2348 = vadd.f32 %v2347, 1.0
    %v2349 = vmul.f32 %v2348, 0.5
    %v2350 = vmul.f32 %v2349, %v2291
    %2352 = vrot.lane.b32.xlu0 %v2347, 64
    %v2353 = vpop.permute.xlu0 %2352
    %v2355 = vmul.f32 %v2349, %v2353
    %2357 = vrot.lane.b32.xlu0 %v2355, 32
    %v2358 = vpop.permute.xlu0 %2357
    %v2360 = vadd.f32 %v2350, %v2358
    %v2361 = vtanh.pop %v2360
    %2363 = vrot.lane.b32.xlu0 %v2361, 64
    %v2364 = vpop.permute.xlu0 %2363
    %v2366 = vmul.f32 %v2349, %v2364
    %v2367 = vld [vmem:[%s469] sm:$0xff]
    %v2368 = vpack.c.bf16 %v2366, %v2366
    %2370 = vrot.lane.b32.xlu0 %v2368, 32
    %v2371 = vpop.permute.xlu0 %2370
    %v2373 = vsel %vm422, %v2371, 0
    %2375 = vmatprep.subr.bf16.mxu0 0
    %2376 = vmatpush1.bf16.msra.mxu0 %v1888
    %2377 = vmatprep.subr.bf16.mxu0 0
    %2378 = vmatpush1.bf16.msra.mxu0 %v1889
    %2379 = vmatprep.subr.bf16.mxu0 0
    %2380 = vmatpush1.bf16.msra.mxu0 0
    %2381 = vmatprep.subr.bf16.mxu0 0
    %2382 = vmatpush1.bf16.msra.mxu0 0
    %2383 = vmatprep.subr.bf16.mxu0 0
    %2384 = vmatpush1.bf16.msra.mxu0 0
    %2385 = vmatprep.subr.bf16.mxu0 0
    %2386 = vmatpush1.bf16.msra.mxu0 0
    %2387 = vmatprep.subr.bf16.mxu0 0
    %2388 = vmatpush1.bf16.msra.mxu0 0
    %2389 = vmatprep.subr.bf16.mxu0 0
    %2390 = vmatpush1.bf16.msra.mxu0 0
    %2391 = vmatprep.subr.bf16.mxu0 0
    %2392 = vmatpush1.bf16.msra.mxu0 0
    %2393 = vmatprep.subr.bf16.mxu0 0
    %2394 = vmatpush1.bf16.msra.mxu0 0
    %2395 = vmatprep.subr.bf16.mxu0 0
    %2396 = vmatpush1.bf16.msra.mxu0 0
    %2397 = vmatprep.subr.bf16.mxu0 0
    %2398 = vmatpush1.bf16.msra.mxu0 0
    %2399 = vmatprep.subr.bf16.mxu0 0
    %2400 = vmatpush1.bf16.msra.mxu0 0
    %2401 = vmatprep.subr.bf16.mxu0 0
    %2402 = vmatpush1.bf16.msra.mxu0 0
    %2403 = vmatprep.subr.bf16.mxu0 0
    %2404 = vmatpush1.bf16.msra.mxu0 0
    %2405 = vmatprep.subr.bf16.mxu0 0
    %2406 = vmatpush1.bf16.msra.mxu0 0
    %2407 = vmatprep.mubr.bf16.mxu0 0
    %2408 = vmatmul.mubr.bf16.gmra.mrb[0].mxu0 %v2373
    %v2409 = vpop.f32.mrb[0].mxu0
    %v2410 = vadd.f32 0.0, %v2409
    %v2411 = vpop.f32.mrb[0].mxu0
    %v2412 = vpop.f32.mrb[0].mxu0
    %v2413 = vpop.f32.mrb[0].mxu0
    %2414 = vdwg.mxu0
    %v2415 = vadd.f32 %v2367, %v2410
    %v2416 = vtanh.pop %v2415
    %v2417 = vadd.f32 %v2416, 1.0
    %v2418 = vmul.f32 %v2417, 0.5
    %v2419 = vmul.f32 %v2418, %v2360
    %2421 = vrot.lane.b32.xlu0 %v2416, 64
    %v2422 = vpop.permute.xlu0 %2421
    %v2424 = vmul.f32 %v2418, %v2422
    %2426 = vrot.lane.b32.xlu0 %v2424, 32
    %v2427 = vpop.permute.xlu0 %2426
    %v2429 = vadd.f32 %v2419, %v2427
    %v2430 = vtanh.pop %v2429
    %2432 = vrot.lane.b32.xlu0 %v2430, 64
    %v2433 = vpop.permute.xlu0 %2432
    %v2435 = vmul.f32 %v2418, %v2433
    %2437 = vrot.lane.b32.xlu0 %v2435, 32
    %v2438 = vpop.permute.xlu0 %2437
    %v2440 = vsel %vm422, %v2438, 0.0
    %2441 = vadd.xlane.f32.xlu0 %v2440
    %v2442 = vpop.xlane.xlu0 %2441
    %v2443 = vrcp.pop 32.0
    %v2444 = vmul.f32 %v2442, %v2443
    %v2445 = vsub.f32 %v2435, %v2444
    %v2446 = vmul.f32 %v2445, %v2445
    %2448 = vrot.lane.b32.xlu0 %v2446, 32
    %v2449 = vpop.permute.xlu0 %2448
    %v2451 = vsel %vm422, %v2449, 0.0
    %2452 = vadd.xlane.f32.xlu0 %v2451
    %v2453 = vpop.xlane.xlu0 %2452
    %v2454 = vmul.f32 %v2453, %v2443
    %v2455 = vadd.f32 %v2454, 1e-05
    %v2456 = vrsqrt.pop %v2455
    %v2457 = vmul.f32 %v2445, %v2456
    %v2458 = vld [vmem:[%s9] sm:$0x1]
    %v2460 = vlaneseq
    %v2461 = vshrl.u32 %v2460, 7
    %v2462 = vsub.s32 0, %v2461
    %v2463 = vrot.slane %v2458, %v2462
    %2464 = vrot.lane.b32.xlu0 %v2463, 96
    %v2465 = vpop.permute.xlu0 %2464
    %v2467 = vmul.f32 %v2457, %v2465
    %v2468 = vld [vmem:[%s10] sm:$0x1]
    %v2470 = vlaneseq
    %v2471 = vshrl.u32 %v2470, 7
    %v2472 = vsub.s32 0, %v2471
    %v2473 = vrot.slane %v2468, %v2472
    %2474 = vrot.lane.b32.xlu0 %v2473, 96
    %v2475 = vpop.permute.xlu0 %2474
    %v2477 = vadd.f32 %v2467, %v2475
    %v2478 = vld [vmem:[#allocation15] sm:$0xff]
    %v2479 = vld [vmem:[#allocation15 + $0x8] sm:$0xff]
    %v2480 = vld [vmem:[#allocation15 + $0x10] sm:$0xff]
    %v2481 = vld [vmem:[#allocation15 + $0x18] sm:$0xff]
    %v2482 = vld [vmem:[#allocation16] sm:$0x1]
    %v2484 = vlaneseq
    %v2485 = vshrl.u32 %v2484, 7
    %v2486 = vsub.s32 0, %v2485
    %v2487 = vrot.slane %v2482, %v2486
    %2490 = vrot.lane.b32.xlu0 %v2477, 32
    %v2491 = vpop.permute.xlu0 %2490
    %v2492 = vsel %vm422, %v2491, 0
    %2494 = vmatprep.subr.mxu0 0.0
    %2495 = vmatpush1.msra.mxu0 %v2478
    %2496 = vmatprep.subr.mxu0 0.0
    %2497 = vmatpush1.msra.mxu0 %v2479
    %2498 = vmatprep.subr.mxu0 0.0
    %2499 = vmatpush1.msra.mxu0 %v2480
    %2500 = vmatprep.subr.mxu0 0.0
    %2501 = vmatpush1.msra.mxu0 %v2481
    %2502 = vmatprep.subr.mxu0 0.0
    %2503 = vmatpush1.msra.mxu0 0.0
    %2504 = vmatprep.subr.mxu0 0.0
    %2505 = vmatpush1.msra.mxu0 0.0
    %2506 = vmatprep.subr.mxu0 0.0
    %2507 = vmatpush1.msra.mxu0 0.0
    %2508 = vmatprep.subr.mxu0 0.0
    %2509 = vmatpush1.msra.mxu0 0.0
    %2510 = vmatprep.subr.mxu0 0.0
    %2511 = vmatpush1.msra.mxu0 0.0
    %2512 = vmatprep.subr.mxu0 0.0
    %2513 = vmatpush1.msra.mxu0 0.0
    %2514 = vmatprep.subr.mxu0 0.0
    %2515 = vmatpush1.msra.mxu0 0.0
    %2516 = vmatprep.subr.mxu0 0.0
    %2517 = vmatpush1.msra.mxu0 0.0
    %2518 = vmatprep.subr.mxu0 0.0
    %2519 = vmatpush1.msra.mxu0 0.0
    %2520 = vmatprep.subr.mxu0 0.0
    %2521 = vmatpush1.msra.mxu0 0.0
    %2522 = vmatprep.subr.mxu0 0.0
    %2523 = vmatpush1.msra.mxu0 0.0
    %2524 = vmatprep.subr.mxu0 0.0
    %2525 = vmatpush1.msra.mxu0 0.0
    %2526 = vmatprep.subr.mxu0 0.0
    %2527 = vmatpush1.msra.mxu0 0.0
    %2528 = vmatprep.subr.mxu0 0.0
    %2529 = vmatpush1.msra.mxu0 0.0
    %2530 = vmatprep.subr.mxu0 0.0
    %2531 = vmatpush1.msra.mxu0 0.0
    %2532 = vmatprep.subr.mxu0 0.0
    %2533 = vmatpush1.msra.mxu0 0.0
    %2534 = vmatprep.subr.mxu0 0.0
    %2535 = vmatpush1.msra.mxu0 0.0
    %2536 = vmatprep.subr.mxu0 0.0
    %2537 = vmatpush1.msra.mxu0 0.0
    %2538 = vmatprep.subr.mxu0 0.0
    %2539 = vmatpush1.msra.mxu0 0.0
    %2540 = vmatprep.subr.mxu0 0.0
    %2541 = vmatpush1.msra.mxu0 0.0
    %2542 = vmatprep.subr.mxu0 0.0
    %2543 = vmatpush1.msra.mxu0 0.0
    %2544 = vmatprep.subr.mxu0 0.0
    %2545 = vmatpush1.msra.mxu0 0.0
    %2546 = vmatprep.subr.mxu0 0.0
    %2547 = vmatpush1.msra.mxu0 0.0
    %2548 = vmatprep.subr.mxu0 0.0
    %2549 = vmatpush1.msra.mxu0 0.0
    %2550 = vmatprep.subr.mxu0 0.0
    %2551 = vmatpush1.msra.mxu0 0.0
    %2552 = vmatprep.subr.mxu0 0.0
    %2553 = vmatpush1.msra.mxu0 0.0
    %2554 = vmatprep.subr.mxu0 0.0
    %2555 = vmatpush1.msra.mxu0 0.0
    %2556 = vmatprep.subr.mxu0 0.0
    %2557 = vmatpush1.msra.mxu0 0.0
    %2558 = vmatprep.mubr.f32.mxu0 0.0
    %2559 = vmatmul.mubr.f32.gmra.mrb[0].mxu0 %v2492
    %v2560 = vpop.f32.mrb[0].mxu0
    %v2561 = vadd.f32 %v2487, %v2560
    %v2562 = vpop.f32.mrb[0].mxu0
    %2563 = vdwg.mxu0
    %v2564 = vmax.f32 %v2561, 0.0
    %v2565 = vld [vmem:[%s13] sm:$0xff]
    %v2566 = vld [vmem:[%s13 + $0x8] sm:$0xff]
    %v2567 = vld [vmem:[%s13 + $0x10] sm:$0xff]
    %v2568 = vld [vmem:[%s13 + $0x18] sm:$0xff]
    %v2569 = vld [vmem:[%s13 + $0x20] sm:$0xff]
    %v2570 = vld [vmem:[%s13 + $0x28] sm:$0xff]
    %v2571 = vld [vmem:[%s13 + $0x30] sm:$0xff]
    %v2572 = vld [vmem:[%s13 + $0x38] sm:$0xff]
    %v2573 = vld [vmem:[%s13 + $0x40] sm:$0xff]
    %v2574 = vld [vmem:[%s13 + $0x48] sm:$0xff]
    %v2575 = vld [vmem:[%s13 + $0x50] sm:$0xff]
    %v2576 = vld [vmem:[%s13 + $0x58] sm:$0xff]
    %v2577 = vld [vmem:[%s13 + $0x60] sm:$0xff]
    %v2578 = vld [vmem:[%s13 + $0x68] sm:$0xff]
    %v2579 = vld [vmem:[%s13 + $0x70] sm:$0xff]
    %v2580 = vld [vmem:[%s13 + $0x78] sm:$0xff]
    %v2581 = vld [vmem:[#allocation18] sm:$0x1]
    %v2583 = vlaneseq
    %v2584 = vshrl.u32 %v2583, 7
    %v2585 = vsub.s32 0, %v2584
    %v2586 = vrot.slane %v2581, %v2585
    %2588 = vmatprep.subr.mxu0 0.0
    %2589 = vmatpush1.msra.mxu0 %v2565
    %2590 = vmatprep.subr.mxu0 0.0
    %2591 = vmatpush1.msra.mxu0 %v2566
    %2592 = vmatprep.subr.mxu0 0.0
    %2593 = vmatpush1.msra.mxu0 %v2567
    %2594 = vmatprep.subr.mxu0 0.0
    %2595 = vmatpush1.msra.mxu0 %v2568
    %2596 = vmatprep.subr.mxu0 0.0
    %2597 = vmatpush1.msra.mxu0 %v2569
    %2598 = vmatprep.subr.mxu0 0.0
    %2599 = vmatpush1.msra.mxu0 %v2570
    %2600 = vmatprep.subr.mxu0 0.0
    %2601 = vmatpush1.msra.mxu0 %v2571
    %2602 = vmatprep.subr.mxu0 0.0
    %2603 = vmatpush1.msra.mxu0 %v2572
    %2604 = vmatprep.subr.mxu0 0.0
    %2605 = vmatpush1.msra.mxu0 %v2573
    %2606 = vmatprep.subr.mxu0 0.0
    %2607 = vmatpush1.msra.mxu0 %v2574
    %2608 = vmatprep.subr.mxu0 0.0
    %2609 = vmatpush1.msra.mxu0 %v2575
    %2610 = vmatprep.subr.mxu0 0.0
    %2611 = vmatpush1.msra.mxu0 %v2576
    %2612 = vmatprep.subr.mxu0 0.0
    %2613 = vmatpush1.msra.mxu0 %v2577
    %2614 = vmatprep.subr.mxu0 0.0
    %2615 = vmatpush1.msra.mxu0 %v2578
    %2616 = vmatprep.subr.mxu0 0.0
    %2617 = vmatpush1.msra.mxu0 %v2579
    %2618 = vmatprep.subr.mxu0 0.0
    %2619 = vmatpush1.msra.mxu0 %v2580
    %2620 = vmatprep.subr.mxu0 0.0
    %2621 = vmatpush1.msra.mxu0 0.0
    %2622 = vmatprep.subr.mxu0 0.0
    %2623 = vmatpush1.msra.mxu0 0.0
    %2624 = vmatprep.subr.mxu0 0.0
    %2625 = vmatpush1.msra.mxu0 0.0
    %2626 = vmatprep.subr.mxu0 0.0
    %2627 = vmatpush1.msra.mxu0 0.0
    %2628 = vmatprep.subr.mxu0 0.0
    %2629 = vmatpush1.msra.mxu0 0.0
    %2630 = vmatprep.subr.mxu0 0.0
    %2631 = vmatpush1.msra.mxu0 0.0
    %2632 = vmatprep.subr.mxu0 0.0
    %2633 = vmatpush1.msra.mxu0 0.0
    %2634 = vmatprep.subr.mxu0 0.0
    %2635 = vmatpush1.msra.mxu0 0.0
    %2636 = vmatprep.subr.mxu0 0.0
    %2637 = vmatpush1.msra.mxu0 0.0
    %2638 = vmatprep.subr.mxu0 0.0
    %2639 = vmatpush1.msra.mxu0 0.0
    %2640 = vmatprep.subr.mxu0 0.0
    %2641 = vmatpush1.msra.mxu0 0.0
    %2642 = vmatprep.subr.mxu0 0.0
    %2643 = vmatpush1.msra.mxu0 0.0
    %2644 = vmatprep.subr.mxu0 0.0
    %2645 = vmatpush1.msra.mxu0 0.0
    %2646 = vmatprep.subr.mxu0 0.0
    %2647 = vmatpush1.msra.mxu0 0.0
    %2648 = vmatprep.subr.mxu0 0.0
    %2649 = vmatpush1.msra.mxu0 0.0
    %2650 = vmatprep.subr.mxu0 0.0
    %2651 = vmatpush1.msra.mxu0 0.0
    %2652 = vmatprep.mubr.f32.mxu0 0.0
    %2653 = vmatmul.mubr.f32.gmra.mrb[0].mxu0 %v2564
    %v2654 = vpop.f32.mrb[0].mxu0
    %v2655 = vadd.f32 %v2586, %v2654
    %v2656 = vpop.f32.mrb[0].mxu0
    %2657 = vdwg.mxu0
    %2658 = vst [vmem:[%s15] sm:$0xff] %v2655
    // Predicated region
    $region98: #{lstm_model_forward.1} parent=1 // pred_check
      _
    $region99: #{lstm_model_forward.1} parent=1 // pred_check_branch
      %2660 = sbr.rel (0) target = $region101
    $region100: #{lstm_model_forward.1} parent=1 // pred_region
      _
    $region101: #{lstm_model_forward.1} parent=1 // pred_fallthru
      _
    // Predicated region
    $region102: #{lstm_model_forward.1} parent=1 // pred_check
      _
    $region103: #{lstm_model_forward.1} parent=1 // pred_check_branch
      %2662 = sbr.rel (0) target = $region105
    $region104: #{lstm_model_forward.1} parent=1 // pred_region
      _
    $region105: #{lstm_model_forward.1} parent=1 // pred_fallthru
      _
    %2663 = vsyncpa [#allocation6], 1
    %2664 = vsyncpa [#allocation8], 1
    %2665 = vsyncpa [#allocation11], 1
    %2666 = vsyncpa [#allocation14], 1
    %2667 = vsyncpa [#allocation17], 1

</llo_original>
